<compile_context>
chip_gen: v7x
topology: tpu7x:2x2x1
jax: 0.10.0
libtpu: 0.0.40
codegen_flags: <defaults>
</compile_context>

<pallas_src>
import functools
import math

import jax
import jax.numpy as jnp
from jax.experimental import pallas as pl
from jax.experimental.pallas import tpu as pltpu


_LANE = 128
_ROW_ALIGN = 16          # bf16 sublane packing -> keep tile_t a multiple of 16


def _round_up(a, m):
    return -(-a // m) * m


# --------------------------------------------------------------------------- #
# Kernel
# --------------------------------------------------------------------------- #
def _mhg_kernel(x_ref, w_ref, b_ref, g_ref, bt_ref, a_ref, o_ref):
    """Fused 1x1-conv + PReLU + cfLN, emitted in the final (b, h, t, f*od) layout.

    x_ref : (1, tile_t, F*C_in)   bf16  channels-last rows (lane = f*C_in + c)
    w_ref : (h, F*C_in, F*od)     bf16  block-diagonal expanded conv weight
    b_ref : (h, 1, F*od)          f32   conv bias in interleaved lane order
    g_ref : (1, F*od)             f32   LN gamma ([f*od + d] = gamma[d, f])
    bt_ref: (1, F*od)             f32   LN beta
    a_ref : (1, 1)                f32   PReLU alpha (SMEM scalar)
    o_ref : (1, h, tile_t, F*od)        output tile (lane-dense minor dim)
    """
    h = o_ref.shape[1]
    n = o_ref.shape[3]
    inv_n = 1.0 / float(n)
    alpha = a_ref[0, 0]

    x2 = x_ref[0]                                   # (tile_t, F*C_in) bf16
    gamma = g_ref[...]                              # (1, n)
    beta = bt_ref[...]                              # (1, n)

    for hh in range(h):                             # static unroll, h is small
        # 1x1 conv for head hh: the block-diagonal weight makes the MXU produce
        # the result already in the interleaved (f*od + d) lane order, so the
        # store below is a plain, unmasked, lane-dense write.
        y = jnp.dot(x2, w_ref[hh], preferred_element_type=jnp.float32)
        y = y + b_ref[hh]                           # (tile_t, n), f32

        # PReLU (single shared alpha, as in nn.PReLU()).
        y = jnp.where(y >= 0.0, y, alpha * y)

        # One-pass LayerNorm over (output_dim, F): a simple lane reduction.
        mean = jnp.sum(y, axis=-1, keepdims=True) * inv_n
        msq = jnp.sum(y * y, axis=-1, keepdims=True) * inv_n
        rstd = jax.lax.rsqrt(msq - mean * mean + 1e-5)

        o_ref[0, hh] = ((y - mean) * rstd * gamma + beta).astype(o_ref.dtype)


# --------------------------------------------------------------------------- #
# Tile / VMEM planner (padded-bytes accounting, double-buffered blocks)
# --------------------------------------------------------------------------- #
def _plan(T, F, c_in, h, od, out_bytes, vmem_budget, tile_t):
    n = F * od
    n_pad = _round_up(n, _LANE)
    k = F * c_in
    k_pad = _round_up(k, _LANE)

    # Resident operands (constant index_map, still double-buffered by the pipeline).
    fixed = 2 * h * _round_up(k, 16) * n_pad * 2              # expanded weight (bf16)
    fixed += 2 * (h + 2) * 8 * n_pad * 4                      # bias / gamma / beta (f32)

    # Per-T-row cost: double-buffered input & output blocks + f32 temporaries.
    per_row = 2 * k_pad * 2                                   # input block (bf16)
    per_row += 2 * h * n_pad * out_bytes                      # output block
    per_row += 4 * n_pad * 4                                  # in-kernel f32 temporaries

    if tile_t is None:
        avail = vmem_budget - fixed
        if avail < per_row * _ROW_ALIGN:
            raise ValueError(
                "MultiHeadGenerator Pallas kernel: expanded conv weight "
                f"(~{fixed / 2**20:.1f} MiB padded, double-buffered) leaves no room for a "
                f"{_ROW_ALIGN}-row tile inside the {vmem_budget / 2**20:.0f} MiB VMEM budget; "
                "reduce F or raise vmem_budget_bytes.")
        tile_t = min(512, avail // per_row)
        tile_t = max(_ROW_ALIGN, (tile_t // _ROW_ALIGN) * _ROW_ALIGN)
        tile_t = min(tile_t, _round_up(T, _ROW_ALIGN))
    if tile_t % _ROW_ALIGN:
        raise ValueError(f"tile_t must be a multiple of {_ROW_ALIGN}, got {tile_t}")

    t_pad = _round_up(T, tile_t)
    est = fixed + per_row * tile_t
    return tile_t, t_pad, est


# --------------------------------------------------------------------------- #
# Wrapper
# --------------------------------------------------------------------------- #
def multi_head_generator(x, w, b, alpha, ln_gamma, ln_beta, *, h, output_dim,
                         tile_t=None, out_dtype=None,
                         vmem_budget_bytes=48 * 2**20):
    """x: (B, C_in, T, F) -> (B, h, T, F * output_dim)  (PyTorch module semantics)."""
    B, C_in, T, F = x.shape
    od = output_dim
    C_out = h * od
    n = F * od
    assert w.shape == (C_out, C_in)
    assert b.shape == (C_out,)
    assert ln_gamma.shape == (od, F) and ln_beta.shape == (od, F)

    out_dtype = x.dtype if out_dtype is None else jnp.dtype(out_dtype)
    out_bytes = jnp.dtype(out_dtype).itemsize

    tile_t, t_pad, est = _plan(T, F, C_in, h, od, out_bytes, vmem_budget_bytes, tile_t)

    # Channels-last rows (lane = f*C_in + c), bf16 for the MXU; pad T to the tile.
    x_rows = jnp.transpose(x, (0, 2, 3, 1)).astype(jnp.bfloat16).reshape(B, T, F * C_in)
    if t_pad != T:
        x_rows = jnp.pad(x_rows, ((0, 0), (0, t_pad - T), (0, 0)))

    # Block-diagonal expanded conv weight (depends only on parameters; hoist/cache
    # outside the step function in real use):
    #   W[hh, f*C_in + c, f'*od + d] = w[hh*od + d, c] * (f == f')
    w_hdc = w.reshape(h, od, C_in).astype(jnp.float32)
    eye_f = jnp.eye(F, dtype=jnp.float32)
    w_exp = jnp.einsum('hdc,fg->hfcgd', w_hdc, eye_f).reshape(h, F * C_in, n)
    w_exp = w_exp.astype(jnp.bfloat16)

    # Conv bias and LN affine parameters in the interleaved (f*od + d) lane order.
    b_exp = jnp.broadcast_to(b.reshape(h, 1, 1, od).astype(jnp.float32),
                             (h, 1, F, od)).reshape(h, 1, n)
    g_int = jnp.transpose(ln_gamma).astype(jnp.float32).reshape(1, n)
    bt_int = jnp.transpose(ln_beta).astype(jnp.float32).reshape(1, n)
    a11 = jnp.reshape(alpha, (1, 1)).astype(jnp.float32)

    vmem_limit = int(min(max(32 << 20, int(est * 1.3) + (4 << 20)), 100 << 20))

    grid = (B, t_pad // tile_t)
    out = pl.pallas_call(
        _mhg_kernel,
        out_shape=jax.ShapeDtypeStruct((B, h, t_pad, n), out_dtype),
        grid_spec=pltpu.PrefetchScalarGridSpec(
            num_scalar_prefetch=0,
            grid=grid,
            in_specs=[
                pl.BlockSpec((1, tile_t, F * C_in), lambda bi, ti: (bi, ti, 0)),
                pl.BlockSpec((h, F * C_in, n), lambda bi, ti: (0, 0, 0)),
                pl.BlockSpec((h, 1, n), lambda bi, ti: (0, 0, 0)),
                pl.BlockSpec((1, n), lambda bi, ti: (0, 0)),
                pl.BlockSpec((1, n), lambda bi, ti: (0, 0)),
                pl.BlockSpec(memory_space=pltpu.MemorySpace.SMEM),
            ],
            out_specs=pl.BlockSpec((1, h, tile_t, n),
                                   lambda bi, ti: (bi, 0, ti, 0)),
        ),
        compiler_params=pltpu.CompilerParams(
            dimension_semantics=("parallel", "parallel"),
            vmem_limit_bytes=vmem_limit),
    )(x_rows, w_exp, b_exp, g_int, bt_int, a11)

    if t_pad != T:
        out = out[:, :, :T, :]
    return out


# --------------------------------------------------------------------------- #
# Pure-JAX reference (mirrors the PyTorch module)
# --------------------------------------------------------------------------- #
def _reference(x, w, b, alpha, gamma, beta, h, od):
    B, C_in, T, F = x.shape
    y = jnp.einsum('bctf,oc->botf', x, w) + b[None, :, None, None]
    y = jnp.where(y >= 0, y, alpha * y)
    y = y.reshape(B, h, od, T, F).transpose(0, 1, 3, 2, 4)        # (B,h,T,od,F)
    mean = jnp.mean(y, axis=(3, 4), keepdims=True)
    var = jnp.mean((y - mean) ** 2, axis=(3, 4), keepdims=True)
    y = (y - mean) * jax.lax.rsqrt(var + 1e-5)
    y = y * gamma[None, None, None] + beta[None, None, None]
    y = y.transpose(0, 1, 2, 4, 3)                                # (B,h,T,F,od)
    return y.reshape(B, h, T, F * od)


# --------------------------------------------------------------------------- #
if __name__ == "__main__":
    # Small shapes, deliberately unaligned T / F to exercise padding paths.
    B, C_in, T, F = 2, 32, 20, 33         # batch, embed_dim, time, freq
    h, od = 4, 4                          # heads, output_dim  (F*od = 132 lanes)

    key = jax.random.PRNGKey(0)
    k1, k2, k3, k4, k5 = jax.random.split(key, 5)
    x = jax.random.normal(k1, (B, C_in, T, F), jnp.float32)
    lim = 1.0 / math.sqrt(C_in)
    w = jax.random.uniform(k2, (h * od, C_in), jnp.float32, -lim, lim)
    b = jax.random.uniform(k3, (h * od,), jnp.float32, -lim, lim)
    alpha = jnp.float32(0.25)             # nn.PReLU() default init (single parameter)
    gamma = 1.0 + 0.1 * jax.random.normal(k4, (od, F), jnp.float32)
    beta = 0.1 * jax.random.normal(k5, (od, F), jnp.float32)

    ref = _reference(x, w, b, alpha, gamma, beta, h, od)

    # 1) auto-tiled run (single T tile per batch)
    fwd = jax.jit(functools.partial(multi_head_generator, h=h, output_dim=od))
    out = jax.block_until_ready(fwd(x, w, b, alpha, gamma, beta))
    assert out.shape == (B, h, T, F * od)
    assert bool(jnp.all(jnp.isfinite(out)))
    err = float(jnp.max(jnp.abs(out - ref)))
    assert err < 5e-2, f"max abs err {err}"   # bf16 MXU operands, f32 accum / LN

    # 2) multi-step grid with a padded T tail (tile_t=16, T=20 -> T_pad=32)
    fwd2 = jax.jit(functools.partial(multi_head_generator, h=h, output_dim=od,
                                     tile_t=16))
    out2 = jax.block_until_ready(fwd2(x, w, b, alpha, gamma, beta))
    assert out2.shape == (B, h, T, F * od)
    err2 = float(jnp.max(jnp.abs(out2 - ref)))
    assert err2 < 5e-2, f"max abs err {err2}"

    print("KERNEL_OK")
</pallas_src>

<mosaic_0001>
module attributes {stable_mosaic.version = 11 : i64} {
  func.func @_mhg_kernel(%arg0: i32, %arg1: i32, %arg2: memref<1x32x1056xbf16, #tpu.memory_space<vmem>>, %arg3: memref<4x1056x132xbf16, #tpu.memory_space<vmem>>, %arg4: memref<4x1x132xf32, #tpu.memory_space<vmem>>, %arg5: memref<1x132xf32, #tpu.memory_space<vmem>>, %arg6: memref<1x132xf32, #tpu.memory_space<vmem>>, %arg7: memref<1x1xf32, #tpu.memory_space<smem>>, %arg8: memref<1x4x32x132xf32, #tpu.memory_space<vmem>>) attributes {dimension_semantics = [#tpu.dimension_semantics<parallel>, #tpu.dimension_semantics<parallel>], iteration_bounds = array<i64: 2, 1>, scalar_prefetch = 0 : i64, scratch_operands = 0 : i64, tpu.core_type = #tpu.core_type<tc>, window_params = [{transform_indices = @transform_0, window_bounds = array<i64: 1, 32, 1056>}, {pipeline_mode = #tpu.pipeline_mode<synchronous>, transform_indices = @transform_1, window_bounds = array<i64: 4, 1056, 132>}, {pipeline_mode = #tpu.pipeline_mode<synchronous>, transform_indices = @transform_2, window_bounds = array<i64: 4, 1, 132>}, {pipeline_mode = #tpu.pipeline_mode<synchronous>, transform_indices = @transform_3, window_bounds = array<i64: 1, 132>}, {pipeline_mode = #tpu.pipeline_mode<synchronous>, transform_indices = @transform_4, window_bounds = array<i64: 1, 132>}, {transform_indices = @transform_5, window_bounds = array<i64: 1, 1>}, {transform_indices = @transform_6, window_bounds = array<i64: 1, 4, 32, 132>}]} {
    %c0 = arith.constant 0 : index
    %c0_0 = arith.constant 0 : index
    %0 = memref.load %arg7[%c0, %c0_0] : memref<1x1xf32, #tpu.memory_space<smem>>
    %c0_1 = arith.constant 0 : index
    %c0_2 = arith.constant 0 : index
    %c0_3 = arith.constant 0 : index
    %1 = vector.load %arg2[%c0_1, %c0_2, %c0_3] : memref<1x32x1056xbf16, #tpu.memory_space<vmem>>, vector<1x32x1056xbf16>
    %2 = vector.shape_cast %1 : vector<1x32x1056xbf16> to vector<32x1056xbf16>
    %c0_4 = arith.constant 0 : index
    %c0_5 = arith.constant 0 : index
    %3 = vector.load %arg5[%c0_4, %c0_5] : memref<1x132xf32, #tpu.memory_space<vmem>>, vector<1x132xf32>
    %c0_6 = arith.constant 0 : index
    %c0_7 = arith.constant 0 : index
    %4 = vector.load %arg6[%c0_6, %c0_7] : memref<1x132xf32, #tpu.memory_space<vmem>>, vector<1x132xf32>
    %c0_8 = arith.constant 0 : index
    %c0_9 = arith.constant 0 : index
    %c0_10 = arith.constant 0 : index
    %5 = vector.load %arg3[%c0_8, %c0_9, %c0_10] : memref<4x1056x132xbf16, #tpu.memory_space<vmem>>, vector<1x1056x132xbf16>
    %6 = vector.shape_cast %5 : vector<1x1056x132xbf16> to vector<1056x132xbf16>
    %cst = arith.constant dense<0.000000e+00> : vector<32x132xf32>
    %7 = tpu.matmul %2, %6, %cst {dimension_numbers = #tpu.dot_dimension_numbers<[1], [0], [0], [1], [0, 0, 1, 1], [], []>} : vector<32x1056xbf16>, vector<1056x132xbf16>, vector<32x132xf32> -> vector<32x132xf32>
    %c0_11 = arith.constant 0 : index
    %c0_12 = arith.constant 0 : index
    %c0_13 = arith.constant 0 : index
    %8 = vector.load %arg4[%c0_11, %c0_12, %c0_13] : memref<4x1x132xf32, #tpu.memory_space<vmem>>, vector<1x1x132xf32>
    %9 = vector.shape_cast %8 : vector<1x1x132xf32> to vector<1x132xf32>
    %10 = vector.broadcast %9 : vector<1x132xf32> to vector<32x132xf32>
    %11 = arith.addf %7, %10 : vector<32x132xf32>
    %cst_14 = arith.constant 0.000000e+00 : f32
    %12 = vector.broadcast %cst_14 : f32 to vector<32x132xf32>
    %13 = arith.cmpf oge, %11, %12 : vector<32x132xf32>
    %14 = vector.broadcast %0 : f32 to vector<32x132xf32>
    %15 = arith.mulf %14, %11 : vector<32x132xf32>
    %16 = arith.select %13, %11, %15 : vector<32x132xi1>, vector<32x132xf32>
    %cst_15 = arith.constant dense<0.000000e+00> : vector<32xf32>
    %17 = vector.multi_reduction <add>, %16, %cst_15 [1] : vector<32x132xf32> to vector<32xf32>
    %18 = vector.shape_cast %17 : vector<32xf32> to vector<32x1xf32>
    %cst_16 = arith.constant 0.0075757578 : f32
    %19 = vector.broadcast %cst_16 : f32 to vector<32x1xf32>
    %20 = arith.mulf %18, %19 : vector<32x1xf32>
    %21 = arith.mulf %16, %16 : vector<32x132xf32>
    %cst_17 = arith.constant dense<0.000000e+00> : vector<32xf32>
    %22 = vector.multi_reduction <add>, %21, %cst_17 [1] : vector<32x132xf32> to vector<32xf32>
    %23 = vector.shape_cast %22 : vector<32xf32> to vector<32x1xf32>
    %cst_18 = arith.constant 0.0075757578 : f32
    %24 = vector.broadcast %cst_18 : f32 to vector<32x1xf32>
    %25 = arith.mulf %23, %24 : vector<32x1xf32>
    %26 = arith.mulf %20, %20 : vector<32x1xf32>
    %27 = arith.subf %25, %26 : vector<32x1xf32>
    %cst_19 = arith.constant 9.99999974E-6 : f32
    %28 = vector.broadcast %cst_19 : f32 to vector<32x1xf32>
    %29 = arith.addf %27, %28 : vector<32x1xf32>
    %30 = math.rsqrt %29 : vector<32x1xf32>
    %31 = vector.broadcast %20 : vector<32x1xf32> to vector<32x132xf32>
    %32 = arith.subf %16, %31 : vector<32x132xf32>
    %33 = vector.broadcast %30 : vector<32x1xf32> to vector<32x132xf32>
    %34 = arith.mulf %32, %33 : vector<32x132xf32>
    %35 = vector.broadcast %3 : vector<1x132xf32> to vector<32x132xf32>
    %36 = arith.mulf %34, %35 : vector<32x132xf32>
    %37 = vector.broadcast %4 : vector<1x132xf32> to vector<32x132xf32>
    %38 = arith.addf %36, %37 : vector<32x132xf32>
    %c0_20 = arith.constant 0 : index
    %c0_21 = arith.constant 0 : index
    %c0_22 = arith.constant 0 : index
    %c0_23 = arith.constant 0 : index
    %39 = vector.load %arg8[%c0_20, %c0_21, %c0_22, %c0_23] : memref<1x4x32x132xf32, #tpu.memory_space<vmem>>, vector<1x1x32x132xf32>
    %40 = vector.shape_cast %39 : vector<1x1x32x132xf32> to vector<32x132xf32>
    %41 = vector.shape_cast %38 : vector<32x132xf32> to vector<1x1x32x132xf32>
    tpu.vector_store %arg8[%c0_20, %c0_21, %c0_22, %c0_23], %41 {strides = array<i32>} : memref<1x4x32x132xf32, #tpu.memory_space<vmem>>, vector<1x1x32x132xf32>,
    %c1 = arith.constant 1 : index
    %c0_24 = arith.constant 0 : index
    %c0_25 = arith.constant 0 : index
    %42 = vector.load %arg3[%c1, %c0_24, %c0_25] : memref<4x1056x132xbf16, #tpu.memory_space<vmem>>, vector<1x1056x132xbf16>
    %43 = vector.shape_cast %42 : vector<1x1056x132xbf16> to vector<1056x132xbf16>
    %cst_26 = arith.constant dense<0.000000e+00> : vector<32x132xf32>
    %44 = tpu.matmul %2, %43, %cst_26 {dimension_numbers = #tpu.dot_dimension_numbers<[1], [0], [0], [1], [0, 0, 1, 1], [], []>} : vector<32x1056xbf16>, vector<1056x132xbf16>, vector<32x132xf32> -> vector<32x132xf32>
    %c1_27 = arith.constant 1 : index
    %c0_28 = arith.constant 0 : index
    %c0_29 = arith.constant 0 : index
    %45 = vector.load %arg4[%c1_27, %c0_28, %c0_29] : memref<4x1x132xf32, #tpu.memory_space<vmem>>, vector<1x1x132xf32>
    %46 = vector.shape_cast %45 : vector<1x1x132xf32> to vector<1x132xf32>
    %47 = vector.broadcast %46 : vector<1x132xf32> to vector<32x132xf32>
    %48 = arith.addf %44, %47 : vector<32x132xf32>
    %cst_30 = arith.constant 0.000000e+00 : f32
    %49 = vector.broadcast %cst_30 : f32 to vector<32x132xf32>
    %50 = arith.cmpf oge, %48, %49 : vector<32x132xf32>
    %51 = vector.broadcast %0 : f32 to vector<32x132xf32>
    %52 = arith.mulf %51, %48 : vector<32x132xf32>
    %53 = arith.select %50, %48, %52 : vector<32x132xi1>, vector<32x132xf32>
    %cst_31 = arith.constant dense<0.000000e+00> : vector<32xf32>
    %54 = vector.multi_reduction <add>, %53, %cst_31 [1] : vector<32x132xf32> to vector<32xf32>
    %55 = vector.shape_cast %54 : vector<32xf32> to vector<32x1xf32>
    %cst_32 = arith.constant 0.0075757578 : f32
    %56 = vector.broadcast %cst_32 : f32 to vector<32x1xf32>
    %57 = arith.mulf %55, %56 : vector<32x1xf32>
    %58 = arith.mulf %53, %53 : vector<32x132xf32>
    %cst_33 = arith.constant dense<0.000000e+00> : vector<32xf32>
    %59 = vector.multi_reduction <add>, %58, %cst_33 [1] : vector<32x132xf32> to vector<32xf32>
    %60 = vector.shape_cast %59 : vector<32xf32> to vector<32x1xf32>
    %cst_34 = arith.constant 0.0075757578 : f32
    %61 = vector.broadcast %cst_34 : f32 to vector<32x1xf32>
    %62 = arith.mulf %60, %61 : vector<32x1xf32>
    %63 = arith.mulf %57, %57 : vector<32x1xf32>
    %64 = arith.subf %62, %63 : vector<32x1xf32>
    %cst_35 = arith.constant 9.99999974E-6 : f32
    %65 = vector.broadcast %cst_35 : f32 to vector<32x1xf32>
    %66 = arith.addf %64, %65 : vector<32x1xf32>
    %67 = math.rsqrt %66 : vector<32x1xf32>
    %68 = vector.broadcast %57 : vector<32x1xf32> to vector<32x132xf32>
    %69 = arith.subf %53, %68 : vector<32x132xf32>
    %70 = vector.broadcast %67 : vector<32x1xf32> to vector<32x132xf32>
    %71 = arith.mulf %69, %70 : vector<32x132xf32>
    %72 = vector.broadcast %3 : vector<1x132xf32> to vector<32x132xf32>
    %73 = arith.mulf %71, %72 : vector<32x132xf32>
    %74 = vector.broadcast %4 : vector<1x132xf32> to vector<32x132xf32>
    %75 = arith.addf %73, %74 : vector<32x132xf32>
    %c0_36 = arith.constant 0 : index
    %c1_37 = arith.constant 1 : index
    %c0_38 = arith.constant 0 : index
    %c0_39 = arith.constant 0 : index
    %76 = vector.load %arg8[%c0_36, %c1_37, %c0_38, %c0_39] : memref<1x4x32x132xf32, #tpu.memory_space<vmem>>, vector<1x1x32x132xf32>
    %77 = vector.shape_cast %76 : vector<1x1x32x132xf32> to vector<32x132xf32>
    %78 = vector.shape_cast %75 : vector<32x132xf32> to vector<1x1x32x132xf32>
    tpu.vector_store %arg8[%c0_36, %c1_37, %c0_38, %c0_39], %78 {strides = array<i32>} : memref<1x4x32x132xf32, #tpu.memory_space<vmem>>, vector<1x1x32x132xf32>,
    %c2 = arith.constant 2 : index
    %c0_40 = arith.constant 0 : index
    %c0_41 = arith.constant 0 : index
    %79 = vector.load %arg3[%c2, %c0_40, %c0_41] : memref<4x1056x132xbf16, #tpu.memory_space<vmem>>, vector<1x1056x132xbf16>
    %80 = vector.shape_cast %79 : vector<1x1056x132xbf16> to vector<1056x132xbf16>
    %cst_42 = arith.constant dense<0.000000e+00> : vector<32x132xf32>
    %81 = tpu.matmul %2, %80, %cst_42 {dimension_numbers = #tpu.dot_dimension_numbers<[1], [0], [0], [1], [0, 0, 1, 1], [], []>} : vector<32x1056xbf16>, vector<1056x132xbf16>, vector<32x132xf32> -> vector<32x132xf32>
    %c2_43 = arith.constant 2 : index
    %c0_44 = arith.constant 0 : index
    %c0_45 = arith.constant 0 : index
    %82 = vector.load %arg4[%c2_43, %c0_44, %c0_45] : memref<4x1x132xf32, #tpu.memory_space<vmem>>, vector<1x1x132xf32>
    %83 = vector.shape_cast %82 : vector<1x1x132xf32> to vector<1x132xf32>
    %84 = vector.broadcast %83 : vector<1x132xf32> to vector<32x132xf32>
    %85 = arith.addf %81, %84 : vector<32x132xf32>
    %cst_46 = arith.constant 0.000000e+00 : f32
    %86 = vector.broadcast %cst_46 : f32 to vector<32x132xf32>
    %87 = arith.cmpf oge, %85, %86 : vector<32x132xf32>
    %88 = vector.broadcast %0 : f32 to vector<32x132xf32>
    %89 = arith.mulf %88, %85 : vector<32x132xf32>
    %90 = arith.select %87, %85, %89 : vector<32x132xi1>, vector<32x132xf32>
    %cst_47 = arith.constant dense<0.000000e+00> : vector<32xf32>
    %91 = vector.multi_reduction <add>, %90, %cst_47 [1] : vector<32x132xf32> to vector<32xf32>
    %92 = vector.shape_cast %91 : vector<32xf32> to vector<32x1xf32>
    %cst_48 = arith.constant 0.0075757578 : f32
    %93 = vector.broadcast %cst_48 : f32 to vector<32x1xf32>
    %94 = arith.mulf %92, %93 : vector<32x1xf32>
    %95 = arith.mulf %90, %90 : vector<32x132xf32>
    %cst_49 = arith.constant dense<0.000000e+00> : vector<32xf32>
    %96 = vector.multi_reduction <add>, %95, %cst_49 [1] : vector<32x132xf32> to vector<32xf32>
    %97 = vector.shape_cast %96 : vector<32xf32> to vector<32x1xf32>
    %cst_50 = arith.constant 0.0075757578 : f32
    %98 = vector.broadcast %cst_50 : f32 to vector<32x1xf32>
    %99 = arith.mulf %97, %98 : vector<32x1xf32>
    %100 = arith.mulf %94, %94 : vector<32x1xf32>
    %101 = arith.subf %99, %100 : vector<32x1xf32>
    %cst_51 = arith.constant 9.99999974E-6 : f32
    %102 = vector.broadcast %cst_51 : f32 to vector<32x1xf32>
    %103 = arith.addf %101, %102 : vector<32x1xf32>
    %104 = math.rsqrt %103 : vector<32x1xf32>
    %105 = vector.broadcast %94 : vector<32x1xf32> to vector<32x132xf32>
    %106 = arith.subf %90, %105 : vector<32x132xf32>
    %107 = vector.broadcast %104 : vector<32x1xf32> to vector<32x132xf32>
    %108 = arith.mulf %106, %107 : vector<32x132xf32>
    %109 = vector.broadcast %3 : vector<1x132xf32> to vector<32x132xf32>
    %110 = arith.mulf %108, %109 : vector<32x132xf32>
    %111 = vector.broadcast %4 : vector<1x132xf32> to vector<32x132xf32>
    %112 = arith.addf %110, %111 : vector<32x132xf32>
    %c0_52 = arith.constant 0 : index
    %c2_53 = arith.constant 2 : index
    %c0_54 = arith.constant 0 : index
    %c0_55 = arith.constant 0 : index
    %113 = vector.load %arg8[%c0_52, %c2_53, %c0_54, %c0_55] : memref<1x4x32x132xf32, #tpu.memory_space<vmem>>, vector<1x1x32x132xf32>
    %114 = vector.shape_cast %113 : vector<1x1x32x132xf32> to vector<32x132xf32>
    %115 = vector.shape_cast %112 : vector<32x132xf32> to vector<1x1x32x132xf32>
    tpu.vector_store %arg8[%c0_52, %c2_53, %c0_54, %c0_55], %115 {strides = array<i32>} : memref<1x4x32x132xf32, #tpu.memory_space<vmem>>, vector<1x1x32x132xf32>,
    %c3 = arith.constant 3 : index
    %c0_56 = arith.constant 0 : index
    %c0_57 = arith.constant 0 : index
    %116 = vector.load %arg3[%c3, %c0_56, %c0_57] : memref<4x1056x132xbf16, #tpu.memory_space<vmem>>, vector<1x1056x132xbf16>
    %117 = vector.shape_cast %116 : vector<1x1056x132xbf16> to vector<1056x132xbf16>
    %cst_58 = arith.constant dense<0.000000e+00> : vector<32x132xf32>
    %118 = tpu.matmul %2, %117, %cst_58 {dimension_numbers = #tpu.dot_dimension_numbers<[1], [0], [0], [1], [0, 0, 1, 1], [], []>} : vector<32x1056xbf16>, vector<1056x132xbf16>, vector<32x132xf32> -> vector<32x132xf32>
    %c3_59 = arith.constant 3 : index
    %c0_60 = arith.constant 0 : index
    %c0_61 = arith.constant 0 : index
    %119 = vector.load %arg4[%c3_59, %c0_60, %c0_61] : memref<4x1x132xf32, #tpu.memory_space<vmem>>, vector<1x1x132xf32>
    %120 = vector.shape_cast %119 : vector<1x1x132xf32> to vector<1x132xf32>
    %121 = vector.broadcast %120 : vector<1x132xf32> to vector<32x132xf32>
    %122 = arith.addf %118, %121 : vector<32x132xf32>
    %cst_62 = arith.constant 0.000000e+00 : f32
    %123 = vector.broadcast %cst_62 : f32 to vector<32x132xf32>
    %124 = arith.cmpf oge, %122, %123 : vector<32x132xf32>
    %125 = vector.broadcast %0 : f32 to vector<32x132xf32>
    %126 = arith.mulf %125, %122 : vector<32x132xf32>
    %127 = arith.select %124, %122, %126 : vector<32x132xi1>, vector<32x132xf32>
    %cst_63 = arith.constant dense<0.000000e+00> : vector<32xf32>
    %128 = vector.multi_reduction <add>, %127, %cst_63 [1] : vector<32x132xf32> to vector<32xf32>
    %129 = vector.shape_cast %128 : vector<32xf32> to vector<32x1xf32>
    %cst_64 = arith.constant 0.0075757578 : f32
    %130 = vector.broadcast %cst_64 : f32 to vector<32x1xf32>
    %131 = arith.mulf %129, %130 : vector<32x1xf32>
    %132 = arith.mulf %127, %127 : vector<32x132xf32>
    %cst_65 = arith.constant dense<0.000000e+00> : vector<32xf32>
    %133 = vector.multi_reduction <add>, %132, %cst_65 [1] : vector<32x132xf32> to vector<32xf32>
    %134 = vector.shape_cast %133 : vector<32xf32> to vector<32x1xf32>
    %cst_66 = arith.constant 0.0075757578 : f32
    %135 = vector.broadcast %cst_66 : f32 to vector<32x1xf32>
    %136 = arith.mulf %134, %135 : vector<32x1xf32>
    %137 = arith.mulf %131, %131 : vector<32x1xf32>
    %138 = arith.subf %136, %137 : vector<32x1xf32>
    %cst_67 = arith.constant 9.99999974E-6 : f32
    %139 = vector.broadcast %cst_67 : f32 to vector<32x1xf32>
    %140 = arith.addf %138, %139 : vector<32x1xf32>
    %141 = math.rsqrt %140 : vector<32x1xf32>
    %142 = vector.broadcast %131 : vector<32x1xf32> to vector<32x132xf32>
    %143 = arith.subf %127, %142 : vector<32x132xf32>
    %144 = vector.broadcast %141 : vector<32x1xf32> to vector<32x132xf32>
    %145 = arith.mulf %143, %144 : vector<32x132xf32>
    %146 = vector.broadcast %3 : vector<1x132xf32> to vector<32x132xf32>
    %147 = arith.mulf %145, %146 : vector<32x132xf32>
    %148 = vector.broadcast %4 : vector<1x132xf32> to vector<32x132xf32>
    %149 = arith.addf %147, %148 : vector<32x132xf32>
    %c0_68 = arith.constant 0 : index
    %c3_69 = arith.constant 3 : index
    %c0_70 = arith.constant 0 : index
    %c0_71 = arith.constant 0 : index
    %150 = vector.load %arg8[%c0_68, %c3_69, %c0_70, %c0_71] : memref<1x4x32x132xf32, #tpu.memory_space<vmem>>, vector<1x1x32x132xf32>
    %151 = vector.shape_cast %150 : vector<1x1x32x132xf32> to vector<32x132xf32>
    %152 = vector.shape_cast %149 : vector<32x132xf32> to vector<1x1x32x132xf32>
    tpu.vector_store %arg8[%c0_68, %c3_69, %c0_70, %c0_71], %152 {strides = array<i32>} : memref<1x4x32x132xf32, #tpu.memory_space<vmem>>, vector<1x1x32x132xf32>,
    return
  }
  func.func @transform_0(%arg0: i32, %arg1: i32) -> (i32, i32, i32) {
    %c0_i32 = arith.constant 0 : i32
    %c0_i32_0 = arith.constant 0 : i32
    return %arg0, %arg1, %c0_i32 : i32, i32, i32
  }
  func.func @transform_1(%arg0: i32, %arg1: i32) -> (i32, i32, i32) {
    %c0_i32 = arith.constant 0 : i32
    %c0_i32_0 = arith.constant 0 : i32
    %c0_i32_1 = arith.constant 0 : i32
    %c0_i32_2 = arith.constant 0 : i32
    return %c0_i32, %c0_i32_0, %c0_i32_1 : i32, i32, i32
  }
  func.func @transform_2(%arg0: i32, %arg1: i32) -> (i32, i32, i32) {
    %c0_i32 = arith.constant 0 : i32
    %c0_i32_0 = arith.constant 0 : i32
    %c0_i32_1 = arith.constant 0 : i32
    %c0_i32_2 = arith.constant 0 : i32
    return %c0_i32, %c0_i32_0, %c0_i32_1 : i32, i32, i32
  }
  func.func @transform_3(%arg0: i32, %arg1: i32) -> (i32, i32) {
    %c0_i32 = arith.constant 0 : i32
    %c0_i32_0 = arith.constant 0 : i32
    %c0_i32_1 = arith.constant 0 : i32
    return %c0_i32, %c0_i32_0 : i32, i32
  }
  func.func @transform_4(%arg0: i32, %arg1: i32) -> (i32, i32) {
    %c0_i32 = arith.constant 0 : i32
    %c0_i32_0 = arith.constant 0 : i32
    %c0_i32_1 = arith.constant 0 : i32
    return %c0_i32, %c0_i32_0 : i32, i32
  }
  func.func @transform_5(%arg0: i32, %arg1: i32) -> (i32, i32) {
    %c0_i32 = arith.constant 0 : i32
    %c0_i32_0 = arith.constant 0 : i32
    %c0_i32_1 = arith.constant 0 : i32
    return %c0_i32, %c0_i32_0 : i32, i32
  }
  func.func @transform_6(%arg0: i32, %arg1: i32) -> (i32, i32, i32, i32) {
    %c0_i32 = arith.constant 0 : i32
    %c0_i32_0 = arith.constant 0 : i32
    %c0_i32_1 = arith.constant 0 : i32
    return %arg0, %c0_i32, %arg1, %c0_i32_0 : i32, i32, i32, i32
  }
}

</mosaic_0001>

<llo_original>
// kernel: multi_head_generator.1
$region0: #{multi_head_generator.1}
  #allocation0 [shape = 'u32[]', space=smem, size = 0x4, offset = 0x4, fixed_abs, tag = 'smem constant byte address 0x4 - core index']
  #allocation1 [shape = 'u32[144,128]{1,0:T(1,128)}', space=vmem, size = 0x12000, scoped, tag = 'internal scratch']
  #allocation2 [shape = 'f32[1,1]{1,0:T(1,128)S(6)}', space=smem, size = 0x200, scoped, tag = 'scoped memory for multi_head_generator.1']
  %s0 = inlined_call_operand.vmem [shape: bf16[2,32,1056], index: 0, kind: input, shape index: {}]
  %s1 = inlined_call_operand.vmem [shape: bf16[4,1056,132], index: 1, kind: input, shape index: {}]
  %s2 = inlined_call_operand.vmem [shape: f32[4,1,132], index: 2, kind: input, shape index: {}]
  %s3 = inlined_call_operand.vmem [shape: f32[1,132], index: 3, kind: input, shape index: {}]
  %s4 = inlined_call_operand.vmem [shape: f32[1,132], index: 4, kind: input, shape index: {}]
  %s5 = inlined_call_operand.<no memory space> [shape: f32[1,1], index: 5, kind: input, shape index: {}]
  %s6 = inlined_call_operand.vmem [shape: f32[2,4,32,132], index: 6, kind: output, shape index: {}]
  %s7 = sld [smem:[#allocation0]]
  $region57: #{multi_head_generator.1} parent=0
    _
  %s9 = ssub.s32 1, %s7
  %s10 = scalar_select 0, %s9, %s7
  %11 = sst [smem:[#allocation2]] %s5
  loop: start=0, step=1, limit=4
  $region2: #{multi_head_generator.1} parent=0 // loop_pre_header
    _
  $region3: #{multi_head_generator.1} parent=0 // loop_header
    %s13 = sphi 0, %s17
    %p14 = scmp.ge.s32.totalorder %s13, 4
    %s20 = sphi 0, %s32
    %s21 = sphi 0, %s28
    %s22 = sphi 0, %s20
    %s23 = sphi 0, %s21
    %s24 = sphi 0, %s22
    %s25 = sphi 0, %s23
    %s37 = sphi 0, %s39
    %s40 = sphi 0, %s37
    %s41 = sphi 0, %s40
    %s57 = sphi 0, %s41
    %s61 = sphi 0, %s61
    %s63 = sphi 0, %s61
    %s64 = sphi 0, %s63
    %s78 = sphi 0, %s64
    %s82 = sphi 0, %s82
    %s84 = sphi 0, %s82
    %s85 = sphi 0, %s84
    %s99 = sphi 0, %s85
    %s103 = sphi 0, %s103
    %s105 = sphi 0, %s103
    %s106 = sphi 0, %s105
    %s120 = sphi 0, %s106
    %s124 = sphi 0, %s124
    %s126 = sphi 0, %s124
    %s127 = sphi 0, %s126
    %s141 = sphi 0, %s127
    %s145 = sphi 0, %s145
    %s147 = sphi 0, %s145
    %s148 = sphi 0, %s147
    %s162 = sphi 0, %s148
    %s170 = sphi 0, %s172
    %s173 = sphi 0, %s170
    %s174 = sphi 0, %s173
    %s190 = sphi 0, %s174
  $region4: #{multi_head_generator.1} parent=0 // loop_header_branch
    %16 = sbr.rel (%p14) target = $region8
  $region5: #{multi_head_generator.1} parent=0 // loop_body
    %s18 = ssub.s32 %s13, 1
    %s19 = ssub.s32 %s13, 2
    %s26 = sadd.s32 1, %s21
    %p27 = scmp.ge.s32.totalorder %s26, 1
    %s28 = scalar_select %p27, 0, %s26
    %s29 = sadd.s32 1, %s20
    %s30 = scalar_select %p27, %s29, %s20
    %p31 = scmp.ge.s32.totalorder %s30, 2
    %s32 = scalar_select %p31, 0, %s30
    %s33 = ssub.s32 %s20, %s32
    %s34 = ssub.s32 %s21, %s28
    %s35 = sor.u32 %s33, %s34
    %p36 = scmp.eq.s32.totalorder %s35, 0
    %s38 = sadd.s32 %s37, 1
    %s39 = scalar_select %p36, %s37, %s38
    %p42 = pneg %p36
    %p43 = scmp.eq.s32.totalorder %s13, 1
    %p44 = por %p42, %p43
    %p45 = scmp.ne.s32.totalorder %s37, %s40
    %p46 = scmp.eq.s32.totalorder %s13, 0
    %p47 = por %p45, %p46
    %p48 = scmp.ne.s32.totalorder %s37, %s40
    %p49 = scmp.eq.s32.totalorder %s18, 1
    %p50 = por %p48, %p49
    %p51 = scmp.ne.s32.totalorder %s40, %s41
    %p52 = scmp.eq.s32.totalorder %s18, 0
    %p53 = por %p51, %p52
    %p54 = scmp.ne.s32.totalorder %s40, %s41
    %p55 = scmp.eq.s32.totalorder %s19, 1
    %p56 = por %p54, %p55
    %p58 = scmp.ne.s32.totalorder %s41, %s57
    %p59 = scmp.eq.s32.totalorder %s19, 0
    %p60 = por %p58, %p59
    %s62 = sadd.s32 %s61, 1
    %p65 = scmp.eq.s32.totalorder %s13, 1
    %p66 = scmp.ne.s32.totalorder %s61, %s63
    %p67 = scmp.eq.s32.totalorder %s13, 0
    %p68 = por %p66, %p67
    %p69 = scmp.ne.s32.totalorder %s61, %s63
    %p70 = scmp.eq.s32.totalorder %s18, 1
    %p71 = por %p69, %p70
    %p72 = scmp.ne.s32.totalorder %s63, %s64
    %p73 = scmp.eq.s32.totalorder %s18, 0
    %p74 = por %p72, %p73
    %p75 = scmp.ne.s32.totalorder %s63, %s64
    %p76 = scmp.eq.s32.totalorder %s19, 1
    %p77 = por %p75, %p76
    %p79 = scmp.ne.s32.totalorder %s64, %s78
    %p80 = scmp.eq.s32.totalorder %s19, 0
    %p81 = por %p79, %p80
    %s83 = sadd.s32 %s82, 1
    %p86 = scmp.eq.s32.totalorder %s13, 1
    %p87 = scmp.ne.s32.totalorder %s82, %s84
    %p88 = scmp.eq.s32.totalorder %s13, 0
    %p89 = por %p87, %p88
    %p90 = scmp.ne.s32.totalorder %s82, %s84
    %p91 = scmp.eq.s32.totalorder %s18, 1
    %p92 = por %p90, %p91
    %p93 = scmp.ne.s32.totalorder %s84, %s85
    %p94 = scmp.eq.s32.totalorder %s18, 0
    %p95 = por %p93, %p94
    %p96 = scmp.ne.s32.totalorder %s84, %s85
    %p97 = scmp.eq.s32.totalorder %s19, 1
    %p98 = por %p96, %p97
    %p100 = scmp.ne.s32.totalorder %s85, %s99
    %p101 = scmp.eq.s32.totalorder %s19, 0
    %p102 = por %p100, %p101
    %s104 = sadd.s32 %s103, 1
    %p107 = scmp.eq.s32.totalorder %s13, 1
    %p108 = scmp.ne.s32.totalorder %s103, %s105
    %p109 = scmp.eq.s32.totalorder %s13, 0
    %p110 = por %p108, %p109
    %p111 = scmp.ne.s32.totalorder %s103, %s105
    %p112 = scmp.eq.s32.totalorder %s18, 1
    %p113 = por %p111, %p112
    %p114 = scmp.ne.s32.totalorder %s105, %s106
    %p115 = scmp.eq.s32.totalorder %s18, 0
    %p116 = por %p114, %p115
    %p117 = scmp.ne.s32.totalorder %s105, %s106
    %p118 = scmp.eq.s32.totalorder %s19, 1
    %p119 = por %p117, %p118
    %p121 = scmp.ne.s32.totalorder %s106, %s120
    %p122 = scmp.eq.s32.totalorder %s19, 0
    %p123 = por %p121, %p122
    %s125 = sadd.s32 %s124, 1
    %p128 = scmp.eq.s32.totalorder %s13, 1
    %p129 = scmp.ne.s32.totalorder %s124, %s126
    %p130 = scmp.eq.s32.totalorder %s13, 0
    %p131 = por %p129, %p130
    %p132 = scmp.ne.s32.totalorder %s124, %s126
    %p133 = scmp.eq.s32.totalorder %s18, 1
    %p134 = por %p132, %p133
    %p135 = scmp.ne.s32.totalorder %s126, %s127
    %p136 = scmp.eq.s32.totalorder %s18, 0
    %p137 = por %p135, %p136
    %p138 = scmp.ne.s32.totalorder %s126, %s127
    %p139 = scmp.eq.s32.totalorder %s19, 1
    %p140 = por %p138, %p139
    %p142 = scmp.ne.s32.totalorder %s127, %s141
    %p143 = scmp.eq.s32.totalorder %s19, 0
    %p144 = por %p142, %p143
    %s146 = sadd.s32 %s145, 1
    %p149 = scmp.eq.s32.totalorder %s13, 1
    %p150 = scmp.ne.s32.totalorder %s145, %s147
    %p151 = scmp.eq.s32.totalorder %s13, 0
    %p152 = por %p150, %p151
    %p153 = scmp.ne.s32.totalorder %s145, %s147
    %p154 = scmp.eq.s32.totalorder %s18, 1
    %p155 = por %p153, %p154
    %p156 = scmp.ne.s32.totalorder %s147, %s148
    %p157 = scmp.eq.s32.totalorder %s18, 0
    %p158 = por %p156, %p157
    %p159 = scmp.ne.s32.totalorder %s147, %s148
    %p160 = scmp.eq.s32.totalorder %s19, 1
    %p161 = por %p159, %p160
    %p163 = scmp.ne.s32.totalorder %s148, %s162
    %p164 = scmp.eq.s32.totalorder %s19, 0
    %p165 = por %p163, %p164
    %s166 = ssub.s32 %s20, %s32
    %s167 = ssub.s32 %s21, %s28
    %s168 = sor.u32 %s166, %s167
    %p169 = scmp.eq.s32.totalorder %s168, 0
    %s171 = sadd.s32 %s170, 1
    %s172 = scalar_select %p169, %s170, %s171
    %p175 = pneg %p169
    %p176 = scmp.eq.s32.totalorder %s13, 1
    %p177 = por %p175, %p176
    %p178 = scmp.ne.s32.totalorder %s170, %s173
    %p179 = scmp.eq.s32.totalorder %s13, 0
    %p180 = por %p178, %p179
    %p181 = scmp.ne.s32.totalorder %s170, %s173
    %p182 = scmp.eq.s32.totalorder %s18, 1
    %p183 = por %p181, %p182
    %p184 = scmp.ne.s32.totalorder %s173, %s174
    %p185 = scmp.eq.s32.totalorder %s18, 0
    %p186 = por %p184, %p185
    %p187 = scmp.ne.s32.totalorder %s173, %s174
    %p188 = scmp.eq.s32.totalorder %s19, 1
    %p189 = por %p187, %p188
    %p191 = scmp.ne.s32.totalorder %s174, %s190
    %p192 = scmp.eq.s32.totalorder %s19, 0
    %p193 = por %p191, %p192
    %p194 = scmp.le.s32.totalorder 1, %s13
    %p195 = scmp.lt.s32.totalorder %s13, 3
    %p196 = pnand %p194, %p195
    %p197 = pneg %p196
    // Predicated region
    $region9: #{multi_head_generator.1} parent=5 // pred_check
      _
    $region10: #{multi_head_generator.1} parent=5 // pred_check_branch
      %199 = sbr.rel (%p196) target = $region12
    $region11: #{multi_head_generator.1} parent=5 // pred_region
      %s200 = ssub.s32 %s13, 1
      // Predicated region
      $region13: #{multi_head_generator.1} parent=11 // pred_check
        %p201 = pneg %p74
      $region14: #{multi_head_generator.1} parent=11 // pred_check_branch
        %203 = sbr.rel (%p201) target = $region16
      $region15: #{multi_head_generator.1} parent=11 // pred_region
        _
      $region16: #{multi_head_generator.1} parent=11 // pred_fallthru
        _
      // Predicated region
      $region17: #{multi_head_generator.1} parent=11 // pred_check
        %p204 = pneg %p95
      $region18: #{multi_head_generator.1} parent=11 // pred_check_branch
        %206 = sbr.rel (%p204) target = $region20
      $region19: #{multi_head_generator.1} parent=11 // pred_region
        _
      $region20: #{multi_head_generator.1} parent=11 // pred_fallthru
        _
      // Predicated region
      $region21: #{multi_head_generator.1} parent=11 // pred_check
        %p207 = pneg %p116
      $region22: #{multi_head_generator.1} parent=11 // pred_check_branch
        %209 = sbr.rel (%p207) target = $region24
      $region23: #{multi_head_generator.1} parent=11 // pred_region
        _
      $region24: #{multi_head_generator.1} parent=11 // pred_fallthru
        _
      // Predicated region
      $region25: #{multi_head_generator.1} parent=11 // pred_check
        %p210 = pneg %p137
      $region26: #{multi_head_generator.1} parent=11 // pred_check_branch
        %212 = sbr.rel (%p210) target = $region28
      $region27: #{multi_head_generator.1} parent=11 // pred_region
        _
      $region28: #{multi_head_generator.1} parent=11 // pred_fallthru
        _
      // Predicated region
      $region29: #{multi_head_generator.1} parent=11 // pred_check
        %p213 = pneg %p158
      $region30: #{multi_head_generator.1} parent=11 // pred_check_branch
        %215 = sbr.rel (%p213) target = $region32
      $region31: #{multi_head_generator.1} parent=11 // pred_region
        _
      $region32: #{multi_head_generator.1} parent=11 // pred_fallthru
        _
    $region12: #{multi_head_generator.1} parent=5 // pred_fallthru
      _
    %p216 = scmp.lt.s32.totalorder %s13, 2
    // Predicated region
    $region33: #{multi_head_generator.1} parent=5 // pred_check
      %p217 = pneg %p216
    $region34: #{multi_head_generator.1} parent=5 // pred_check_branch
      %219 = sbr.rel (%p217) target = $region36
    $region35: #{multi_head_generator.1} parent=5 // pred_region
      // Predicated region
      $region37: #{multi_head_generator.1} parent=35 // pred_check
        %p220 = pneg %p47
      $region38: #{multi_head_generator.1} parent=35 // pred_check_branch
        %222 = sbr.rel (%p220) target = $region40
      $region39: #{multi_head_generator.1} parent=35 // pred_region
        %s223 = smul.u32 4, %s21
        %p224 = scmp.lt.s32.totalorder %s20, 1
        %s225 = scalar_select %p224, %s20, 1
        %p226 = scmp.lt.s32.totalorder %s223, 3
        %s227 = scalar_select %p226, %s223, 3
        %s228 = smul.addr %s227, 9
        %s229 = smul.addr %s225, 36
        %s230 = sadd.s32 %s228, %s229
        %s231 = smul.addr %s230, 4
        %s232 = scalar_lea.vmem %s0, %s231
        %s233 = smul.u32 4, %s21
      $region40: #{multi_head_generator.1} parent=35 // pred_fallthru
        _
    $region36: #{multi_head_generator.1} parent=5 // pred_fallthru
      _
    %p234 = scmp.le.s32.totalorder 1, %s13
    %p235 = scmp.lt.s32.totalorder %s13, 3
    %p236 = pnand %p234, %p235
    %p237 = pneg %p236
    // Predicated region
    $region41: #{multi_head_generator.1} parent=5 // pred_check
      _
    $region42: #{multi_head_generator.1} parent=5 // pred_check_branch
      %239 = sbr.rel (%p236) target = $region44
    $region43: #{multi_head_generator.1} parent=5 // pred_region
      %s240 = ssub.s32 %s13, 1
      %s241 = smul.u32 4, %s23
      %p242 = scmp.lt.s32.totalorder %s22, 1
      %s243 = scalar_select %p242, %s22, 1
      %p244 = scmp.lt.s32.totalorder %s241, 3
      %s245 = scalar_select %p244, %s241, 3
      %s246 = smul.addr %s245, 9
      %s247 = smul.addr %s243, 36
      %s248 = sadd.s32 %s246, %s247
      %s249 = smul.addr %s248, 4
      %s250 = scalar_lea.vmem %s0, %s249
      %p251 = pneg %p53
      %p252 = pneg %p50
      %p253 = pneg %p74
      %p254 = pneg %p71
      %p255 = pneg %p95
      %p256 = pneg %p92
      %p257 = pneg %p116
      %p258 = pneg %p113
      %p259 = pneg %p137
      %p260 = pneg %p134
      %p261 = pneg %p158
      %p262 = pneg %p155
      %p263 = pneg %p186
      %p264 = pneg %p183
      %s265 = smul.u32 4, %s23
      %p266 = scmp.lt.s32.totalorder %s22, 1
      %s267 = scalar_select %p266, %s22, 1
      %p268 = scmp.lt.s32.totalorder %s265, 3
      %s269 = scalar_select %p268, %s265, 3
      %s270 = smul.addr %s269, 2
      %s271 = smul.addr %s267, 32
      %s272 = sadd.s32 %s270, %s271
      %s273 = smul.addr %s272, 8
      %s274 = scalar_lea.vmem %s6, %s273
      %s275 = smul.u32 4, %s23
      %p276 = scmp.lt.s32.totalorder %s22, 1
      %s277 = scalar_select %p276, %s22, 1
      %p278 = scmp.lt.s32.totalorder %s275, 3
      %s279 = scalar_select %p278, %s275, 3
      %s280 = smul.addr %s279, 9
      %s281 = smul.addr %s277, 36
      %s282 = sadd.s32 %s280, %s281
      %s283 = smul.addr %s282, 4
      %s284 = scalar_lea.vmem %s0, %s283
      %s285 = smul.u32 4, %s23
      %s286 = smul.u32 4, %s23
      %p287 = scmp.lt.s32.totalorder %s22, 1
      %s288 = scalar_select %p287, %s22, 1
      %p289 = scmp.lt.s32.totalorder %s286, 3
      %s290 = scalar_select %p289, %s286, 3
      %s291 = smul.addr %s290, 2
      %s292 = smul.addr %s288, 32
      %s293 = sadd.s32 %s291, %s292
      %s294 = smul.addr %s293, 8
      %s295 = scalar_lea.vmem %s6, %s294
      %s296 = smul.u32 4, %s23
      %s298 = sld [smem:[#allocation2]]
      %v299 = vld [vmem:[%s284] sm:$0xff]
      %v300 = vld [vmem:[%s284 + $0x8] sm:$0xff]
      %v301 = vld [vmem:[%s284 + $0x10] sm:$0xff]
      %v302 = vld [vmem:[%s284 + $0x18] sm:$0xff]
      %v303 = vld [vmem:[%s284 + $0x20] sm:$0xf]
      %v304 = vld [vmem:[%s284 + $0x24] sm:$0xff]
      %v305 = vld [vmem:[%s284 + $0x2c] sm:$0xff]
      %v306 = vld [vmem:[%s284 + $0x34] sm:$0xff]
      %v307 = vld [vmem:[%s284 + $0x3c] sm:$0xff]
      %v308 = vld [vmem:[%s284 + $0x44] sm:$0xf]
      %v309 = vld [vmem:[%s284 + $0x48] sm:$0xff]
      %v310 = vld [vmem:[%s284 + $0x50] sm:$0xff]
      %v311 = vld [vmem:[%s284 + $0x58] sm:$0xff]
      %v312 = vld [vmem:[%s284 + $0x60] sm:$0xff]
      %v313 = vld [vmem:[%s284 + $0x68] sm:$0xf]
      %v314 = vld [vmem:[%s284 + $0x6c] sm:$0xff]
      %v315 = vld [vmem:[%s284 + $0x74] sm:$0xff]
      %v316 = vld [vmem:[%s284 + $0x7c] sm:$0xff]
      %v317 = vld [vmem:[%s284 + $0x84] sm:$0xff]
      %v318 = vld [vmem:[%s284 + $0x8c] sm:$0xf]
      %v319 = vld [vmem:[%s3] sm:$0x3]
      %v320 = vld [vmem:[%s4] sm:$0x3]
      %v321 = vld [vmem:[%s1] sm:$0xff]
      %v322 = vld [vmem:[%s1 + $0x8] sm:$0xff]
      %v323 = vld [vmem:[%s1 + $0x10] sm:$0xff]
      %v324 = vld [vmem:[%s1 + $0x18] sm:$0xff]
      %v325 = vld [vmem:[%s1 + $0x20] sm:$0xff]
      %v326 = vld [vmem:[%s1 + $0x28] sm:$0xff]
      %v327 = vld [vmem:[%s1 + $0x30] sm:$0xff]
      %v328 = vld [vmem:[%s1 + $0x38] sm:$0xff]
      %v329 = vld [vmem:[%s1 + $0x40] sm:$0xff]
      %v330 = vld [vmem:[%s1 + $0x48] sm:$0xff]
      %v331 = vld [vmem:[%s1 + $0x50] sm:$0xff]
      %v332 = vld [vmem:[%s1 + $0x58] sm:$0xff]
      %v333 = vld [vmem:[%s1 + $0x60] sm:$0xff]
      %v334 = vld [vmem:[%s1 + $0x68] sm:$0xff]
      %v335 = vld [vmem:[%s1 + $0x70] sm:$0xff]
      %v336 = vld [vmem:[%s1 + $0x78] sm:$0xff]
      %v337 = vld [vmem:[%s1 + $0x80] sm:$0xff]
      %v338 = vld [vmem:[%s1 + $0x88] sm:$0xff]
      %v339 = vld [vmem:[%s1 + $0x90] sm:$0xff]
      %v340 = vld [vmem:[%s1 + $0x98] sm:$0xff]
      %v341 = vld [vmem:[%s1 + $0xa0] sm:$0xff]
      %v342 = vld [vmem:[%s1 + $0xa8] sm:$0xff]
      %v343 = vld [vmem:[%s1 + $0xb0] sm:$0xff]
      %v344 = vld [vmem:[%s1 + $0xb8] sm:$0xff]
      %v345 = vld [vmem:[%s1 + $0xc0] sm:$0xff]
      %v346 = vld [vmem:[%s1 + $0xc8] sm:$0xff]
      %v347 = vld [vmem:[%s1 + $0xd0] sm:$0xff]
      %v348 = vld [vmem:[%s1 + $0xd8] sm:$0xff]
      %v349 = vld [vmem:[%s1 + $0xe0] sm:$0xff]
      %v350 = vld [vmem:[%s1 + $0xe8] sm:$0xff]
      %v351 = vld [vmem:[%s1 + $0xf0] sm:$0xff]
      %v352 = vld [vmem:[%s1 + $0xf8] sm:$0xff]
      %v353 = vld [vmem:[%s1 + $0x100] sm:$0xff]
      %v354 = vld [vmem:[%s1 + $0x108] sm:$0xff]
      %v355 = vld [vmem:[%s1 + $0x110] sm:$0xff]
      %v356 = vld [vmem:[%s1 + $0x118] sm:$0xff]
      %v357 = vld [vmem:[%s1 + $0x120] sm:$0xff]
      %v358 = vld [vmem:[%s1 + $0x128] sm:$0xff]
      %v359 = vld [vmem:[%s1 + $0x130] sm:$0xff]
      %v360 = vld [vmem:[%s1 + $0x138] sm:$0xff]
      %v361 = vld [vmem:[%s1 + $0x140] sm:$0xff]
      %v362 = vld [vmem:[%s1 + $0x148] sm:$0xff]
      %v363 = vld [vmem:[%s1 + $0x150] sm:$0xff]
      %v364 = vld [vmem:[%s1 + $0x158] sm:$0xff]
      %v365 = vld [vmem:[%s1 + $0x160] sm:$0xff]
      %v366 = vld [vmem:[%s1 + $0x168] sm:$0xff]
      %v367 = vld [vmem:[%s1 + $0x170] sm:$0xff]
      %v368 = vld [vmem:[%s1 + $0x178] sm:$0xff]
      %v369 = vld [vmem:[%s1 + $0x180] sm:$0xff]
      %v370 = vld [vmem:[%s1 + $0x188] sm:$0xff]
      %v371 = vld [vmem:[%s1 + $0x190] sm:$0xff]
      %v372 = vld [vmem:[%s1 + $0x198] sm:$0xff]
      %v373 = vld [vmem:[%s1 + $0x1a0] sm:$0xff]
      %v374 = vld [vmem:[%s1 + $0x1a8] sm:$0xff]
      %v375 = vld [vmem:[%s1 + $0x1b0] sm:$0xff]
      %v376 = vld [vmem:[%s1 + $0x1b8] sm:$0xff]
      %v377 = vld [vmem:[%s1 + $0x1c0] sm:$0xff]
      %v378 = vld [vmem:[%s1 + $0x1c8] sm:$0xff]
      %v379 = vld [vmem:[%s1 + $0x1d0] sm:$0xff]
      %v380 = vld [vmem:[%s1 + $0x1d8] sm:$0xff]
      %v381 = vld [vmem:[%s1 + $0x1e0] sm:$0xff]
      %v382 = vld [vmem:[%s1 + $0x1e8] sm:$0xff]
      %v383 = vld [vmem:[%s1 + $0x1f0] sm:$0xff]
      %v384 = vld [vmem:[%s1 + $0x1f8] sm:$0xff]
      %v385 = vld [vmem:[%s1 + $0x200] sm:$0xff]
      %v386 = vld [vmem:[%s1 + $0x208] sm:$0xff]
      %v387 = vld [vmem:[%s1 + $0x210] sm:$0xff]
      %v388 = vld [vmem:[%s1 + $0x218] sm:$0xff]
      %v389 = vld [vmem:[%s1 + $0x220] sm:$0xff]
      %v390 = vld [vmem:[%s1 + $0x228] sm:$0xff]
      %v391 = vld [vmem:[%s1 + $0x230] sm:$0xff]
      %v392 = vld [vmem:[%s1 + $0x238] sm:$0xff]
      %v393 = vld [vmem:[%s1 + $0x240] sm:$0xff]
      %v394 = vld [vmem:[%s1 + $0x248] sm:$0xff]
      %v395 = vld [vmem:[%s1 + $0x250] sm:$0xff]
      %v396 = vld [vmem:[%s1 + $0x258] sm:$0xff]
      %v397 = vld [vmem:[%s1 + $0x260] sm:$0xff]
      %v398 = vld [vmem:[%s1 + $0x268] sm:$0xff]
      %v399 = vld [vmem:[%s1 + $0x270] sm:$0xff]
      %v400 = vld [vmem:[%s1 + $0x278] sm:$0xff]
      %v401 = vld [vmem:[%s1 + $0x280] sm:$0xff]
      %v402 = vld [vmem:[%s1 + $0x288] sm:$0xff]
      %v403 = vld [vmem:[%s1 + $0x290] sm:$0xff]
      %v404 = vld [vmem:[%s1 + $0x298] sm:$0xff]
      %v405 = vld [vmem:[%s1 + $0x2a0] sm:$0xff]
      %v406 = vld [vmem:[%s1 + $0x2a8] sm:$0xff]
      %v407 = vld [vmem:[%s1 + $0x2b0] sm:$0xff]
      %v408 = vld [vmem:[%s1 + $0x2b8] sm:$0xff]
      %v409 = vld [vmem:[%s1 + $0x2c0] sm:$0xff]
      %v410 = vld [vmem:[%s1 + $0x2c8] sm:$0xff]
      %v411 = vld [vmem:[%s1 + $0x2d0] sm:$0xff]
      %v412 = vld [vmem:[%s1 + $0x2d8] sm:$0xff]
      %v413 = vld [vmem:[%s1 + $0x2e0] sm:$0xff]
      %v414 = vld [vmem:[%s1 + $0x2e8] sm:$0xff]
      %v415 = vld [vmem:[%s1 + $0x2f0] sm:$0xff]
      %v416 = vld [vmem:[%s1 + $0x2f8] sm:$0xff]
      %v417 = vld [vmem:[%s1 + $0x300] sm:$0xff]
      %v418 = vld [vmem:[%s1 + $0x308] sm:$0xff]
      %v419 = vld [vmem:[%s1 + $0x310] sm:$0xff]
      %v420 = vld [vmem:[%s1 + $0x318] sm:$0xff]
      %v421 = vld [vmem:[%s1 + $0x320] sm:$0xff]
      %v422 = vld [vmem:[%s1 + $0x328] sm:$0xff]
      %v423 = vld [vmem:[%s1 + $0x330] sm:$0xff]
      %v424 = vld [vmem:[%s1 + $0x338] sm:$0xff]
      %v425 = vld [vmem:[%s1 + $0x340] sm:$0xff]
      %v426 = vld [vmem:[%s1 + $0x348] sm:$0xff]
      %v427 = vld [vmem:[%s1 + $0x350] sm:$0xff]
      %v428 = vld [vmem:[%s1 + $0x358] sm:$0xff]
      %v429 = vld [vmem:[%s1 + $0x360] sm:$0xff]
      %v430 = vld [vmem:[%s1 + $0x368] sm:$0xff]
      %v431 = vld [vmem:[%s1 + $0x370] sm:$0xff]
      %v432 = vld [vmem:[%s1 + $0x378] sm:$0xff]
      %v433 = vld [vmem:[%s1 + $0x380] sm:$0xff]
      %v434 = vld [vmem:[%s1 + $0x388] sm:$0xff]
      %v435 = vld [vmem:[%s1 + $0x390] sm:$0xff]
      %v436 = vld [vmem:[%s1 + $0x398] sm:$0xff]
      %v437 = vld [vmem:[%s1 + $0x3a0] sm:$0xff]
      %v438 = vld [vmem:[%s1 + $0x3a8] sm:$0xff]
      %v439 = vld [vmem:[%s1 + $0x3b0] sm:$0xff]
      %v440 = vld [vmem:[%s1 + $0x3b8] sm:$0xff]
      %v441 = vld [vmem:[%s1 + $0x3c0] sm:$0xff]
      %v442 = vld [vmem:[%s1 + $0x3c8] sm:$0xff]
      %v443 = vld [vmem:[%s1 + $0x3d0] sm:$0xff]
      %v444 = vld [vmem:[%s1 + $0x3d8] sm:$0xff]
      %v445 = vld [vmem:[%s1 + $0x3e0] sm:$0xff]
      %v446 = vld [vmem:[%s1 + $0x3e8] sm:$0xff]
      %v447 = vld [vmem:[%s1 + $0x3f0] sm:$0xff]
      %v448 = vld [vmem:[%s1 + $0x3f8] sm:$0xff]
      %v449 = vld [vmem:[%s1 + $0x400] sm:$0xff]
      %v450 = vld [vmem:[%s1 + $0x408] sm:$0xff]
      %v451 = vld [vmem:[%s1 + $0x410] sm:$0xff]
      %v452 = vld [vmem:[%s1 + $0x418] sm:$0xff]
      %v453 = vld [vmem:[%s2] sm:$0x3]
      %v455 = vlaneseq
      %v456 = vshrl.u32 %v455, 7
      %v457 = vsub.s32 0, %v456
      %v458 = vrot.slane %v453, %v457
      %v459 = vlaneseq
      %v460 = vshrl.u32 %v459, 7
      %v461 = vsub.s32 1, %v460
      %v462 = vrot.slane %v453, %v461
      %v485 = vunpack.c.l.b16 %v299
      %v486 = vunpack.c.h.b16 %v299
      %v487 = vunpack.c.l.b16 %v300
      %v488 = vunpack.c.h.b16 %v300
      %v489 = vunpack.c.l.b16 %v301
      %v490 = vunpack.c.h.b16 %v301
      %v491 = vunpack.c.l.b16 %v302
      %v492 = vunpack.c.h.b16 %v302
      %v493 = vunpack.c.l.b16 %v303
      %v494 = vunpack.c.l.b16 %v304
      %v495 = vunpack.c.h.b16 %v304
      %v496 = vunpack.c.l.b16 %v305
      %v497 = vunpack.c.h.b16 %v305
      %v498 = vunpack.c.l.b16 %v306
      %v499 = vunpack.c.h.b16 %v306
      %v500 = vunpack.c.l.b16 %v307
      %v501 = vunpack.c.h.b16 %v307
      %v502 = vunpack.c.l.b16 %v308
      %v503 = vunpack.c.l.b16 %v309
      %v504 = vunpack.c.h.b16 %v309
      %v505 = vunpack.c.l.b16 %v310
      %v506 = vunpack.c.h.b16 %v310
      %v507 = vunpack.c.l.b16 %v311
      %v508 = vunpack.c.h.b16 %v311
      %v509 = vunpack.c.l.b16 %v312
      %v510 = vunpack.c.h.b16 %v312
      %v511 = vunpack.c.l.b16 %v313
      %v512 = vunpack.c.l.b16 %v314
      %v513 = vunpack.c.h.b16 %v314
      %v514 = vunpack.c.l.b16 %v315
      %v515 = vunpack.c.h.b16 %v315
      %v516 = vunpack.c.l.b16 %v316
      %v517 = vunpack.c.h.b16 %v316
      %v518 = vunpack.c.l.b16 %v317
      %v519 = vunpack.c.h.b16 %v317
      %v520 = vunpack.c.l.b16 %v318
      %v521 = vpack.c.b16 %v494, %v485
      %v522 = vpack.c.b16 %v495, %v486
      %v523 = vpack.c.b16 %v496, %v487
      %v524 = vpack.c.b16 %v497, %v488
      %v525 = vpack.c.b16 %v498, %v489
      %v526 = vpack.c.b16 %v499, %v490
      %v527 = vpack.c.b16 %v500, %v491
      %v528 = vpack.c.b16 %v501, %v492
      %v529 = vpack.c.b16 %v502, %v493
      %v530 = vpack.c.b16 %v512, %v503
      %v531 = vpack.c.b16 %v513, %v504
      %v532 = vpack.c.b16 %v514, %v505
      %v533 = vpack.c.b16 %v515, %v506
      %v534 = vpack.c.b16 %v516, %v507
      %v535 = vpack.c.b16 %v517, %v508
      %v536 = vpack.c.b16 %v518, %v509
      %v537 = vpack.c.b16 %v519, %v510
      %v538 = vpack.c.b16 %v520, %v511
      %v687 = vunpack.c.l.b16 %v321
      %v688 = vunpack.c.h.b16 %v321
      %v689 = vunpack.c.l.b16 %v322
      %v690 = vunpack.c.h.b16 %v322
      %v691 = vunpack.c.l.b16 %v323
      %v692 = vunpack.c.h.b16 %v323
      %v693 = vunpack.c.l.b16 %v324
      %v694 = vunpack.c.h.b16 %v324
      %v695 = vunpack.c.l.b16 %v325
      %v696 = vunpack.c.h.b16 %v325
      %v697 = vunpack.c.l.b16 %v326
      %v698 = vunpack.c.h.b16 %v326
      %v699 = vunpack.c.l.b16 %v327
      %v700 = vunpack.c.h.b16 %v327
      %v701 = vunpack.c.l.b16 %v328
      %v702 = vunpack.c.h.b16 %v328
      %v703 = vunpack.c.l.b16 %v329
      %v704 = vunpack.c.h.b16 %v329
      %v705 = vunpack.c.l.b16 %v330
      %v706 = vunpack.c.h.b16 %v330
      %v707 = vunpack.c.l.b16 %v331
      %v708 = vunpack.c.h.b16 %v331
      %v709 = vunpack.c.l.b16 %v332
      %v710 = vunpack.c.h.b16 %v332
      %v711 = vunpack.c.l.b16 %v333
      %v712 = vunpack.c.h.b16 %v333
      %v713 = vunpack.c.l.b16 %v334
      %v714 = vunpack.c.h.b16 %v334
      %v715 = vunpack.c.l.b16 %v335
      %v716 = vunpack.c.h.b16 %v335
      %v717 = vunpack.c.l.b16 %v336
      %v718 = vunpack.c.h.b16 %v336
      %v719 = vunpack.c.l.b16 %v337
      %v720 = vunpack.c.h.b16 %v337
      %v721 = vunpack.c.l.b16 %v338
      %v722 = vunpack.c.h.b16 %v338
      %v723 = vunpack.c.l.b16 %v339
      %v724 = vunpack.c.h.b16 %v339
      %v725 = vunpack.c.l.b16 %v340
      %v726 = vunpack.c.h.b16 %v340
      %v727 = vunpack.c.l.b16 %v341
      %v728 = vunpack.c.h.b16 %v341
      %v729 = vunpack.c.l.b16 %v342
      %v730 = vunpack.c.h.b16 %v342
      %v731 = vunpack.c.l.b16 %v343
      %v732 = vunpack.c.h.b16 %v343
      %v733 = vunpack.c.l.b16 %v344
      %v734 = vunpack.c.h.b16 %v344
      %v735 = vunpack.c.l.b16 %v345
      %v736 = vunpack.c.h.b16 %v345
      %v737 = vunpack.c.l.b16 %v346
      %v738 = vunpack.c.h.b16 %v346
      %v739 = vunpack.c.l.b16 %v347
      %v740 = vunpack.c.h.b16 %v347
      %v741 = vunpack.c.l.b16 %v348
      %v742 = vunpack.c.h.b16 %v348
      %v743 = vunpack.c.l.b16 %v349
      %v744 = vunpack.c.h.b16 %v349
      %v745 = vunpack.c.l.b16 %v350
      %v746 = vunpack.c.h.b16 %v350
      %v747 = vunpack.c.l.b16 %v351
      %v748 = vunpack.c.h.b16 %v351
      %v749 = vunpack.c.l.b16 %v352
      %v750 = vunpack.c.h.b16 %v352
      %v751 = vunpack.c.l.b16 %v353
      %v752 = vunpack.c.h.b16 %v353
      %v753 = vunpack.c.l.b16 %v354
      %v754 = vunpack.c.h.b16 %v354
      %v755 = vunpack.c.l.b16 %v355
      %v756 = vunpack.c.h.b16 %v355
      %v757 = vunpack.c.l.b16 %v356
      %v758 = vunpack.c.h.b16 %v356
      %v759 = vunpack.c.l.b16 %v357
      %v760 = vunpack.c.h.b16 %v357
      %v761 = vunpack.c.l.b16 %v358
      %v762 = vunpack.c.h.b16 %v358
      %v763 = vunpack.c.l.b16 %v359
      %v764 = vunpack.c.h.b16 %v359
      %v765 = vunpack.c.l.b16 %v360
      %v766 = vunpack.c.h.b16 %v360
      %v767 = vunpack.c.l.b16 %v361
      %v768 = vunpack.c.h.b16 %v361
      %v769 = vunpack.c.l.b16 %v362
      %v770 = vunpack.c.h.b16 %v362
      %v771 = vunpack.c.l.b16 %v363
      %v772 = vunpack.c.h.b16 %v363
      %v773 = vunpack.c.l.b16 %v364
      %v774 = vunpack.c.h.b16 %v364
      %v775 = vunpack.c.l.b16 %v365
      %v776 = vunpack.c.h.b16 %v365
      %v777 = vunpack.c.l.b16 %v366
      %v778 = vunpack.c.h.b16 %v366
      %v779 = vunpack.c.l.b16 %v367
      %v780 = vunpack.c.h.b16 %v367
      %v781 = vunpack.c.l.b16 %v368
      %v782 = vunpack.c.h.b16 %v368
      %v783 = vunpack.c.l.b16 %v369
      %v784 = vunpack.c.h.b16 %v369
      %v785 = vunpack.c.l.b16 %v370
      %v786 = vunpack.c.h.b16 %v370
      %v787 = vunpack.c.l.b16 %v371
      %v788 = vunpack.c.h.b16 %v371
      %v789 = vunpack.c.l.b16 %v372
      %v790 = vunpack.c.h.b16 %v372
      %v791 = vunpack.c.l.b16 %v373
      %v792 = vunpack.c.h.b16 %v373
      %v793 = vunpack.c.l.b16 %v374
      %v794 = vunpack.c.h.b16 %v374
      %v795 = vunpack.c.l.b16 %v375
      %v796 = vunpack.c.h.b16 %v375
      %v797 = vunpack.c.l.b16 %v376
      %v798 = vunpack.c.h.b16 %v376
      %v799 = vunpack.c.l.b16 %v377
      %v800 = vunpack.c.h.b16 %v377
      %v801 = vunpack.c.l.b16 %v378
      %v802 = vunpack.c.h.b16 %v378
      %v803 = vunpack.c.l.b16 %v379
      %v804 = vunpack.c.h.b16 %v379
      %v805 = vunpack.c.l.b16 %v380
      %v806 = vunpack.c.h.b16 %v380
      %v807 = vunpack.c.l.b16 %v381
      %v808 = vunpack.c.h.b16 %v381
      %v809 = vunpack.c.l.b16 %v382
      %v810 = vunpack.c.h.b16 %v382
      %v811 = vunpack.c.l.b16 %v383
      %v812 = vunpack.c.h.b16 %v383
      %v813 = vunpack.c.l.b16 %v384
      %v814 = vunpack.c.h.b16 %v384
      %v815 = vunpack.c.l.b16 %v385
      %v816 = vunpack.c.h.b16 %v385
      %v817 = vunpack.c.l.b16 %v386
      %v818 = vunpack.c.h.b16 %v386
      %v819 = vunpack.c.l.b16 %v387
      %v820 = vunpack.c.h.b16 %v387
      %v821 = vunpack.c.l.b16 %v388
      %v822 = vunpack.c.h.b16 %v388
      %v823 = vunpack.c.l.b16 %v389
      %v824 = vunpack.c.h.b16 %v389
      %v825 = vunpack.c.l.b16 %v390
      %v826 = vunpack.c.h.b16 %v390
      %v827 = vunpack.c.l.b16 %v391
      %v828 = vunpack.c.h.b16 %v391
      %v829 = vunpack.c.l.b16 %v392
      %v830 = vunpack.c.h.b16 %v392
      %v831 = vunpack.c.l.b16 %v393
      %v832 = vunpack.c.h.b16 %v393
      %v833 = vunpack.c.l.b16 %v394
      %v834 = vunpack.c.h.b16 %v394
      %v835 = vunpack.c.l.b16 %v395
      %v836 = vunpack.c.h.b16 %v395
      %v837 = vunpack.c.l.b16 %v396
      %v838 = vunpack.c.h.b16 %v396
      %v839 = vunpack.c.l.b16 %v397
      %v840 = vunpack.c.h.b16 %v397
      %v841 = vunpack.c.l.b16 %v398
      %v842 = vunpack.c.h.b16 %v398
      %v843 = vunpack.c.l.b16 %v399
      %v844 = vunpack.c.h.b16 %v399
      %v845 = vunpack.c.l.b16 %v400
      %v846 = vunpack.c.h.b16 %v400
      %v847 = vunpack.c.l.b16 %v401
      %v848 = vunpack.c.h.b16 %v401
      %v849 = vunpack.c.l.b16 %v402
      %v850 = vunpack.c.h.b16 %v402
      %v851 = vunpack.c.l.b16 %v403
      %v852 = vunpack.c.h.b16 %v403
      %v853 = vunpack.c.l.b16 %v404
      %v854 = vunpack.c.h.b16 %v404
      %v855 = vunpack.c.l.b16 %v405
      %v856 = vunpack.c.h.b16 %v405
      %v857 = vunpack.c.l.b16 %v406
      %v858 = vunpack.c.h.b16 %v406
      %v859 = vunpack.c.l.b16 %v407
      %v860 = vunpack.c.h.b16 %v407
      %v861 = vunpack.c.l.b16 %v408
      %v862 = vunpack.c.h.b16 %v408
      %v863 = vunpack.c.l.b16 %v409
      %v864 = vunpack.c.h.b16 %v409
      %v865 = vunpack.c.l.b16 %v410
      %v866 = vunpack.c.h.b16 %v410
      %v867 = vunpack.c.l.b16 %v411
      %v868 = vunpack.c.h.b16 %v411
      %v869 = vunpack.c.l.b16 %v412
      %v870 = vunpack.c.h.b16 %v412
      %v871 = vunpack.c.l.b16 %v413
      %v872 = vunpack.c.h.b16 %v413
      %v873 = vunpack.c.l.b16 %v414
      %v874 = vunpack.c.h.b16 %v414
      %v875 = vunpack.c.l.b16 %v415
      %v876 = vunpack.c.h.b16 %v415
      %v877 = vunpack.c.l.b16 %v416
      %v878 = vunpack.c.h.b16 %v416
      %v879 = vunpack.c.l.b16 %v417
      %v880 = vunpack.c.h.b16 %v417
      %v881 = vunpack.c.l.b16 %v418
      %v882 = vunpack.c.h.b16 %v418
      %v883 = vunpack.c.l.b16 %v419
      %v884 = vunpack.c.h.b16 %v419
      %v885 = vunpack.c.l.b16 %v420
      %v886 = vunpack.c.h.b16 %v420
      %v887 = vunpack.c.l.b16 %v421
      %v888 = vunpack.c.h.b16 %v421
      %v889 = vunpack.c.l.b16 %v422
      %v890 = vunpack.c.h.b16 %v422
      %v891 = vunpack.c.l.b16 %v423
      %v892 = vunpack.c.h.b16 %v423
      %v893 = vunpack.c.l.b16 %v424
      %v894 = vunpack.c.h.b16 %v424
      %v895 = vunpack.c.l.b16 %v425
      %v896 = vunpack.c.h.b16 %v425
      %v897 = vunpack.c.l.b16 %v426
      %v898 = vunpack.c.h.b16 %v426
      %v899 = vunpack.c.l.b16 %v427
      %v900 = vunpack.c.h.b16 %v427
      %v901 = vunpack.c.l.b16 %v428
      %v902 = vunpack.c.h.b16 %v428
      %v903 = vunpack.c.l.b16 %v429
      %v904 = vunpack.c.h.b16 %v429
      %v905 = vunpack.c.l.b16 %v430
      %v906 = vunpack.c.h.b16 %v430
      %v907 = vunpack.c.l.b16 %v431
      %v908 = vunpack.c.h.b16 %v431
      %v909 = vunpack.c.l.b16 %v432
      %v910 = vunpack.c.h.b16 %v432
      %v911 = vunpack.c.l.b16 %v433
      %v912 = vunpack.c.h.b16 %v433
      %v913 = vunpack.c.l.b16 %v434
      %v914 = vunpack.c.h.b16 %v434
      %v915 = vunpack.c.l.b16 %v435
      %v916 = vunpack.c.h.b16 %v435
      %v917 = vunpack.c.l.b16 %v436
      %v918 = vunpack.c.h.b16 %v436
      %v919 = vunpack.c.l.b16 %v437
      %v920 = vunpack.c.h.b16 %v437
      %v921 = vunpack.c.l.b16 %v438
      %v922 = vunpack.c.h.b16 %v438
      %v923 = vunpack.c.l.b16 %v439
      %v924 = vunpack.c.h.b16 %v439
      %v925 = vunpack.c.l.b16 %v440
      %v926 = vunpack.c.h.b16 %v440
      %v927 = vunpack.c.l.b16 %v441
      %v928 = vunpack.c.h.b16 %v441
      %v929 = vunpack.c.l.b16 %v442
      %v930 = vunpack.c.h.b16 %v442
      %v931 = vunpack.c.l.b16 %v443
      %v932 = vunpack.c.h.b16 %v443
      %v933 = vunpack.c.l.b16 %v444
      %v934 = vunpack.c.h.b16 %v444
      %v935 = vunpack.c.l.b16 %v445
      %v936 = vunpack.c.h.b16 %v445
      %v937 = vunpack.c.l.b16 %v446
      %v938 = vunpack.c.h.b16 %v446
      %v939 = vunpack.c.l.b16 %v447
      %v940 = vunpack.c.h.b16 %v447
      %v941 = vunpack.c.l.b16 %v448
      %v942 = vunpack.c.h.b16 %v448
      %v943 = vunpack.c.l.b16 %v449
      %v944 = vunpack.c.h.b16 %v449
      %v945 = vunpack.c.l.b16 %v450
      %v946 = vunpack.c.h.b16 %v450
      %v947 = vunpack.c.l.b16 %v451
      %v948 = vunpack.c.h.b16 %v451
      %v949 = vunpack.c.l.b16 %v452
      %v950 = vunpack.c.h.b16 %v452
      %v951 = vpack.c.b16 %v689, %v687
      %v952 = vpack.c.b16 %v690, %v688
      %v953 = vpack.c.b16 %v693, %v691
      %v954 = vpack.c.b16 %v694, %v692
      %v955 = vpack.c.b16 %v697, %v695
      %v956 = vpack.c.b16 %v698, %v696
      %v957 = vpack.c.b16 %v701, %v699
      %v958 = vpack.c.b16 %v702, %v700
      %v959 = vpack.c.b16 %v705, %v703
      %v960 = vpack.c.b16 %v706, %v704
      %v961 = vpack.c.b16 %v709, %v707
      %v962 = vpack.c.b16 %v710, %v708
      %v963 = vpack.c.b16 %v713, %v711
      %v964 = vpack.c.b16 %v714, %v712
      %v965 = vpack.c.b16 %v717, %v715
      %v966 = vpack.c.b16 %v718, %v716
      %v967 = vpack.c.b16 %v721, %v719
      %v968 = vpack.c.b16 %v722, %v720
      %v969 = vpack.c.b16 %v725, %v723
      %v970 = vpack.c.b16 %v726, %v724
      %v971 = vpack.c.b16 %v729, %v727
      %v972 = vpack.c.b16 %v730, %v728
      %v973 = vpack.c.b16 %v733, %v731
      %v974 = vpack.c.b16 %v734, %v732
      %v975 = vpack.c.b16 %v737, %v735
      %v976 = vpack.c.b16 %v738, %v736
      %v977 = vpack.c.b16 %v741, %v739
      %v978 = vpack.c.b16 %v742, %v740
      %v979 = vpack.c.b16 %v745, %v743
      %v980 = vpack.c.b16 %v746, %v744
      %v981 = vpack.c.b16 %v749, %v747
      %v982 = vpack.c.b16 %v750, %v748
      %v983 = vpack.c.b16 %v753, %v751
      %v984 = vpack.c.b16 %v754, %v752
      %v985 = vpack.c.b16 %v757, %v755
      %v986 = vpack.c.b16 %v758, %v756
      %v987 = vpack.c.b16 %v761, %v759
      %v988 = vpack.c.b16 %v762, %v760
      %v989 = vpack.c.b16 %v765, %v763
      %v990 = vpack.c.b16 %v766, %v764
      %v991 = vpack.c.b16 %v769, %v767
      %v992 = vpack.c.b16 %v770, %v768
      %v993 = vpack.c.b16 %v773, %v771
      %v994 = vpack.c.b16 %v774, %v772
      %v995 = vpack.c.b16 %v777, %v775
      %v996 = vpack.c.b16 %v778, %v776
      %v997 = vpack.c.b16 %v781, %v779
      %v998 = vpack.c.b16 %v782, %v780
      %v999 = vpack.c.b16 %v785, %v783
      %v1000 = vpack.c.b16 %v786, %v784
      %v1001 = vpack.c.b16 %v789, %v787
      %v1002 = vpack.c.b16 %v790, %v788
      %v1003 = vpack.c.b16 %v793, %v791
      %v1004 = vpack.c.b16 %v794, %v792
      %v1005 = vpack.c.b16 %v797, %v795
      %v1006 = vpack.c.b16 %v798, %v796
      %v1007 = vpack.c.b16 %v801, %v799
      %v1008 = vpack.c.b16 %v802, %v800
      %v1009 = vpack.c.b16 %v805, %v803
      %v1010 = vpack.c.b16 %v806, %v804
      %v1011 = vpack.c.b16 %v809, %v807
      %v1012 = vpack.c.b16 %v810, %v808
      %v1013 = vpack.c.b16 %v813, %v811
      %v1014 = vpack.c.b16 %v814, %v812
      %v1015 = vpack.c.b16 %v817, %v815
      %v1016 = vpack.c.b16 %v818, %v816
      %v1017 = vpack.c.b16 %v821, %v819
      %v1018 = vpack.c.b16 %v822, %v820
      %v1019 = vpack.c.b16 %v825, %v823
      %v1020 = vpack.c.b16 %v826, %v824
      %v1021 = vpack.c.b16 %v829, %v827
      %v1022 = vpack.c.b16 %v830, %v828
      %v1023 = vpack.c.b16 %v833, %v831
      %v1024 = vpack.c.b16 %v834, %v832
      %v1025 = vpack.c.b16 %v837, %v835
      %v1026 = vpack.c.b16 %v838, %v836
      %v1027 = vpack.c.b16 %v841, %v839
      %v1028 = vpack.c.b16 %v842, %v840
      %v1029 = vpack.c.b16 %v845, %v843
      %v1030 = vpack.c.b16 %v846, %v844
      %v1031 = vpack.c.b16 %v849, %v847
      %v1032 = vpack.c.b16 %v850, %v848
      %v1033 = vpack.c.b16 %v853, %v851
      %v1034 = vpack.c.b16 %v854, %v852
      %v1035 = vpack.c.b16 %v857, %v855
      %v1036 = vpack.c.b16 %v858, %v856
      %v1037 = vpack.c.b16 %v861, %v859
      %v1038 = vpack.c.b16 %v862, %v860
      %v1039 = vpack.c.b16 %v865, %v863
      %v1040 = vpack.c.b16 %v866, %v864
      %v1041 = vpack.c.b16 %v869, %v867
      %v1042 = vpack.c.b16 %v870, %v868
      %v1043 = vpack.c.b16 %v873, %v871
      %v1044 = vpack.c.b16 %v874, %v872
      %v1045 = vpack.c.b16 %v877, %v875
      %v1046 = vpack.c.b16 %v878, %v876
      %v1047 = vpack.c.b16 %v881, %v879
      %v1048 = vpack.c.b16 %v882, %v880
      %v1049 = vpack.c.b16 %v885, %v883
      %v1050 = vpack.c.b16 %v886, %v884
      %v1051 = vpack.c.b16 %v889, %v887
      %v1052 = vpack.c.b16 %v890, %v888
      %v1053 = vpack.c.b16 %v893, %v891
      %v1054 = vpack.c.b16 %v894, %v892
      %v1055 = vpack.c.b16 %v897, %v895
      %v1056 = vpack.c.b16 %v898, %v896
      %v1057 = vpack.c.b16 %v901, %v899
      %v1058 = vpack.c.b16 %v902, %v900
      %v1059 = vpack.c.b16 %v905, %v903
      %v1060 = vpack.c.b16 %v906, %v904
      %v1061 = vpack.c.b16 %v909, %v907
      %v1062 = vpack.c.b16 %v910, %v908
      %v1063 = vpack.c.b16 %v913, %v911
      %v1064 = vpack.c.b16 %v914, %v912
      %v1065 = vpack.c.b16 %v917, %v915
      %v1066 = vpack.c.b16 %v918, %v916
      %v1067 = vpack.c.b16 %v921, %v919
      %v1068 = vpack.c.b16 %v922, %v920
      %v1069 = vpack.c.b16 %v925, %v923
      %v1070 = vpack.c.b16 %v926, %v924
      %v1071 = vpack.c.b16 %v929, %v927
      %v1072 = vpack.c.b16 %v930, %v928
      %v1073 = vpack.c.b16 %v933, %v931
      %v1074 = vpack.c.b16 %v934, %v932
      %v1075 = vpack.c.b16 %v937, %v935
      %v1076 = vpack.c.b16 %v938, %v936
      %v1077 = vpack.c.b16 %v941, %v939
      %v1078 = vpack.c.b16 %v942, %v940
      %v1079 = vpack.c.b16 %v945, %v943
      %v1080 = vpack.c.b16 %v946, %v944
      %v1081 = vpack.c.b16 %v949, %v947
      %v1082 = vpack.c.b16 %v950, %v948
      %vm1215 = vcmask 261120
      %v1217 = vsel %vm1215, %v529, 0
      %v1220 = vsel %vm1215, %v538, 0
      %1222 = vmatprep.subr.bf16.mxu0 %v952
      %1223 = vmatpush1.bf16.msra.mxu0 %v951
      %1224 = vmatprep.subr.bf16.mxu0 %v954
      %1225 = vmatpush1.bf16.msra.mxu0 %v953
      %1226 = vmatprep.subr.bf16.mxu0 %v956
      %1227 = vmatpush1.bf16.msra.mxu0 %v955
      %1228 = vmatprep.subr.bf16.mxu0 %v958
      %1229 = vmatpush1.bf16.msra.mxu0 %v957
      %1230 = vmatprep.subr.bf16.mxu0 %v960
      %1231 = vmatpush1.bf16.msra.mxu0 %v959
      %1232 = vmatprep.subr.bf16.mxu0 %v962
      %1233 = vmatpush1.bf16.msra.mxu0 %v961
      %1234 = vmatprep.subr.bf16.mxu0 %v964
      %1235 = vmatpush1.bf16.msra.mxu0 %v963
      %1236 = vmatprep.subr.bf16.mxu0 %v966
      %1237 = vmatpush1.bf16.msra.mxu0 %v965
      %1238 = vmatprep.subr.bf16.mxu0 %v968
      %1239 = vmatpush1.bf16.msra.mxu0 %v967
      %1240 = vmatprep.subr.bf16.mxu0 %v970
      %1241 = vmatpush1.bf16.msra.mxu0 %v969
      %1242 = vmatprep.subr.bf16.mxu0 %v972
      %1243 = vmatpush1.bf16.msra.mxu0 %v971
      %1244 = vmatprep.subr.bf16.mxu0 %v974
      %1245 = vmatpush1.bf16.msra.mxu0 %v973
      %1246 = vmatprep.subr.bf16.mxu0 %v976
      %1247 = vmatpush1.bf16.msra.mxu0 %v975
      %1248 = vmatprep.subr.bf16.mxu0 %v978
      %1249 = vmatpush1.bf16.msra.mxu0 %v977
      %1250 = vmatprep.subr.bf16.mxu0 %v980
      %1251 = vmatpush1.bf16.msra.mxu0 %v979
      %1252 = vmatprep.subr.bf16.mxu0 %v982
      %1253 = vmatpush1.bf16.msra.mxu0 %v981
      %1254 = vmatprep.mubr.bf16.mxu0 %v522
      %1255 = vmatmul.mubr.bf16.gmra.mrb[0].mxu0 %v521
      %v1256 = vpop.f32.mrb[0].mxu0
      %v1257 = vadd.f32 %v458, %v1256
      %v1258 = vpop.f32.mrb[0].mxu0
      %v1259 = vadd.f32 %v462, %v1258
      %v1260 = vpop.f32.mrb[0].mxu0
      %v1261 = vadd.f32 %v458, %v1260
      %v1262 = vpop.f32.mrb[0].mxu0
      %v1263 = vadd.f32 %v462, %v1262
      %1264 = vmatprep.mubr.bf16.mxu0 %v531
      %1265 = vmatmul.mubr.bf16.gmra.mrb[0].mxu0 %v530
      %v1266 = vpop.f32.mrb[0].mxu0
      %v1267 = vadd.f32 %v458, %v1266
      %v1268 = vpop.f32.mrb[0].mxu0
      %v1269 = vadd.f32 %v462, %v1268
      %v1270 = vpop.f32.mrb[0].mxu0
      %v1271 = vadd.f32 %v458, %v1270
      %v1272 = vpop.f32.mrb[0].mxu0
      %v1273 = vadd.f32 %v462, %v1272
      %1274 = vdwg.mxu0
      %1275 = vmatprep.subr.bf16.mxu0 %v984
      %1276 = vmatpush1.bf16.msra.mxu0 %v983
      %1277 = vmatprep.subr.bf16.mxu0 %v986
      %1278 = vmatpush1.bf16.msra.mxu0 %v985
      %1279 = vmatprep.subr.bf16.mxu0 %v988
      %1280 = vmatpush1.bf16.msra.mxu0 %v987
      %1281 = vmatprep.subr.bf16.mxu0 %v990
      %1282 = vmatpush1.bf16.msra.mxu0 %v989
      %1283 = vmatprep.subr.bf16.mxu0 %v992
      %1284 = vmatpush1.bf16.msra.mxu0 %v991
      %1285 = vmatprep.subr.bf16.mxu0 %v994
      %1286 = vmatpush1.bf16.msra.mxu0 %v993
      %1287 = vmatprep.subr.bf16.mxu0 %v996
      %1288 = vmatpush1.bf16.msra.mxu0 %v995
      %1289 = vmatprep.subr.bf16.mxu0 %v998
      %1290 = vmatpush1.bf16.msra.mxu0 %v997
      %1291 = vmatprep.subr.bf16.mxu0 %v1000
      %1292 = vmatpush1.bf16.msra.mxu0 %v999
      %1293 = vmatprep.subr.bf16.mxu0 %v1002
      %1294 = vmatpush1.bf16.msra.mxu0 %v1001
      %1295 = vmatprep.subr.bf16.mxu0 %v1004
      %1296 = vmatpush1.bf16.msra.mxu0 %v1003
      %1297 = vmatprep.subr.bf16.mxu0 %v1006
      %1298 = vmatpush1.bf16.msra.mxu0 %v1005
      %1299 = vmatprep.subr.bf16.mxu0 %v1008
      %1300 = vmatpush1.bf16.msra.mxu0 %v1007
      %1301 = vmatprep.subr.bf16.mxu0 %v1010
      %1302 = vmatpush1.bf16.msra.mxu0 %v1009
      %1303 = vmatprep.subr.bf16.mxu0 %v1012
      %1304 = vmatpush1.bf16.msra.mxu0 %v1011
      %1305 = vmatprep.subr.bf16.mxu0 %v1014
      %1306 = vmatpush1.bf16.msra.mxu0 %v1013
      %1307 = vmatprep.mubr.bf16.mxu0 %v524
      %1308 = vmatmul.mubr.bf16.gmra.mrb[0].mxu0 %v523
      %v1309 = vpop.f32.mrb[0].mxu0
      %v1310 = vadd.f32 %v1257, %v1309
      %v1311 = vpop.f32.mrb[0].mxu0
      %v1312 = vadd.f32 %v1259, %v1311
      %v1313 = vpop.f32.mrb[0].mxu0
      %v1314 = vadd.f32 %v1261, %v1313
      %v1315 = vpop.f32.mrb[0].mxu0
      %v1316 = vadd.f32 %v1263, %v1315
      %1317 = vmatprep.mubr.bf16.mxu0 %v533
      %1318 = vmatmul.mubr.bf16.gmra.mrb[0].mxu0 %v532
      %v1319 = vpop.f32.mrb[0].mxu0
      %v1320 = vadd.f32 %v1267, %v1319
      %v1321 = vpop.f32.mrb[0].mxu0
      %v1322 = vadd.f32 %v1269, %v1321
      %v1323 = vpop.f32.mrb[0].mxu0
      %v1324 = vadd.f32 %v1271, %v1323
      %v1325 = vpop.f32.mrb[0].mxu0
      %v1326 = vadd.f32 %v1273, %v1325
      %1327 = vdwg.mxu0
      %1328 = vmatprep.subr.bf16.mxu0 %v1016
      %1329 = vmatpush1.bf16.msra.mxu0 %v1015
      %1330 = vmatprep.subr.bf16.mxu0 %v1018
      %1331 = vmatpush1.bf16.msra.mxu0 %v1017
      %1332 = vmatprep.subr.bf16.mxu0 %v1020
      %1333 = vmatpush1.bf16.msra.mxu0 %v1019
      %1334 = vmatprep.subr.bf16.mxu0 %v1022
      %1335 = vmatpush1.bf16.msra.mxu0 %v1021
      %1336 = vmatprep.subr.bf16.mxu0 %v1024
      %1337 = vmatpush1.bf16.msra.mxu0 %v1023
      %1338 = vmatprep.subr.bf16.mxu0 %v1026
      %1339 = vmatpush1.bf16.msra.mxu0 %v1025
      %1340 = vmatprep.subr.bf16.mxu0 %v1028
      %1341 = vmatpush1.bf16.msra.mxu0 %v1027
      %1342 = vmatprep.subr.bf16.mxu0 %v1030
      %1343 = vmatpush1.bf16.msra.mxu0 %v1029
      %1344 = vmatprep.subr.bf16.mxu0 %v1032
      %1345 = vmatpush1.bf16.msra.mxu0 %v1031
      %1346 = vmatprep.subr.bf16.mxu0 %v1034
      %1347 = vmatpush1.bf16.msra.mxu0 %v1033
      %1348 = vmatprep.subr.bf16.mxu0 %v1036
      %1349 = vmatpush1.bf16.msra.mxu0 %v1035
      %1350 = vmatprep.subr.bf16.mxu0 %v1038
      %1351 = vmatpush1.bf16.msra.mxu0 %v1037
      %1352 = vmatprep.subr.bf16.mxu0 %v1040
      %1353 = vmatpush1.bf16.msra.mxu0 %v1039
      %1354 = vmatprep.subr.bf16.mxu0 %v1042
      %1355 = vmatpush1.bf16.msra.mxu0 %v1041
      %1356 = vmatprep.subr.bf16.mxu0 %v1044
      %1357 = vmatpush1.bf16.msra.mxu0 %v1043
      %1358 = vmatprep.subr.bf16.mxu0 %v1046
      %1359 = vmatpush1.bf16.msra.mxu0 %v1045
      %1360 = vmatprep.mubr.bf16.mxu0 %v526
      %1361 = vmatmul.mubr.bf16.gmra.mrb[0].mxu0 %v525
      %v1362 = vpop.f32.mrb[0].mxu0
      %v1363 = vadd.f32 %v1310, %v1362
      %v1364 = vpop.f32.mrb[0].mxu0
      %v1365 = vadd.f32 %v1312, %v1364
      %v1366 = vpop.f32.mrb[0].mxu0
      %v1367 = vadd.f32 %v1314, %v1366
      %v1368 = vpop.f32.mrb[0].mxu0
      %v1369 = vadd.f32 %v1316, %v1368
      %1370 = vmatprep.mubr.bf16.mxu0 %v535
      %1371 = vmatmul.mubr.bf16.gmra.mrb[0].mxu0 %v534
      %v1372 = vpop.f32.mrb[0].mxu0
      %v1373 = vadd.f32 %v1320, %v1372
      %v1374 = vpop.f32.mrb[0].mxu0
      %v1375 = vadd.f32 %v1322, %v1374
      %v1376 = vpop.f32.mrb[0].mxu0
      %v1377 = vadd.f32 %v1324, %v1376
      %v1378 = vpop.f32.mrb[0].mxu0
      %v1379 = vadd.f32 %v1326, %v1378
      %1380 = vdwg.mxu0
      %1381 = vmatprep.subr.bf16.mxu0 %v1048
      %1382 = vmatpush1.bf16.msra.mxu0 %v1047
      %1383 = vmatprep.subr.bf16.mxu0 %v1050
      %1384 = vmatpush1.bf16.msra.mxu0 %v1049
      %1385 = vmatprep.subr.bf16.mxu0 %v1052
      %1386 = vmatpush1.bf16.msra.mxu0 %v1051
      %1387 = vmatprep.subr.bf16.mxu0 %v1054
      %1388 = vmatpush1.bf16.msra.mxu0 %v1053
      %1389 = vmatprep.subr.bf16.mxu0 %v1056
      %1390 = vmatpush1.bf16.msra.mxu0 %v1055
      %1391 = vmatprep.subr.bf16.mxu0 %v1058
      %1392 = vmatpush1.bf16.msra.mxu0 %v1057
      %1393 = vmatprep.subr.bf16.mxu0 %v1060
      %1394 = vmatpush1.bf16.msra.mxu0 %v1059
      %1395 = vmatprep.subr.bf16.mxu0 %v1062
      %1396 = vmatpush1.bf16.msra.mxu0 %v1061
      %1397 = vmatprep.subr.bf16.mxu0 %v1064
      %1398 = vmatpush1.bf16.msra.mxu0 %v1063
      %1399 = vmatprep.subr.bf16.mxu0 %v1066
      %1400 = vmatpush1.bf16.msra.mxu0 %v1065
      %1401 = vmatprep.subr.bf16.mxu0 %v1068
      %1402 = vmatpush1.bf16.msra.mxu0 %v1067
      %1403 = vmatprep.subr.bf16.mxu0 %v1070
      %1404 = vmatpush1.bf16.msra.mxu0 %v1069
      %1405 = vmatprep.subr.bf16.mxu0 %v1072
      %1406 = vmatpush1.bf16.msra.mxu0 %v1071
      %1407 = vmatprep.subr.bf16.mxu0 %v1074
      %1408 = vmatpush1.bf16.msra.mxu0 %v1073
      %1409 = vmatprep.subr.bf16.mxu0 %v1076
      %1410 = vmatpush1.bf16.msra.mxu0 %v1075
      %1411 = vmatprep.subr.bf16.mxu0 %v1078
      %1412 = vmatpush1.bf16.msra.mxu0 %v1077
      %1413 = vmatprep.mubr.bf16.mxu0 %v528
      %1414 = vmatmul.mubr.bf16.gmra.mrb[0].mxu0 %v527
      %v1415 = vpop.f32.mrb[0].mxu0
      %v1416 = vadd.f32 %v1363, %v1415
      %v1417 = vpop.f32.mrb[0].mxu0
      %v1418 = vadd.f32 %v1365, %v1417
      %v1419 = vpop.f32.mrb[0].mxu0
      %v1420 = vadd.f32 %v1367, %v1419
      %v1421 = vpop.f32.mrb[0].mxu0
      %v1422 = vadd.f32 %v1369, %v1421
      %1423 = vmatprep.mubr.bf16.mxu0 %v537
      %1424 = vmatmul.mubr.bf16.gmra.mrb[0].mxu0 %v536
      %v1425 = vpop.f32.mrb[0].mxu0
      %v1426 = vadd.f32 %v1373, %v1425
      %v1427 = vpop.f32.mrb[0].mxu0
      %v1428 = vadd.f32 %v1375, %v1427
      %v1429 = vpop.f32.mrb[0].mxu0
      %v1430 = vadd.f32 %v1377, %v1429
      %v1431 = vpop.f32.mrb[0].mxu0
      %v1432 = vadd.f32 %v1379, %v1431
      %1433 = vdwg.mxu0
      %1434 = vmatprep.subr.bf16.mxu0 %v1080
      %1435 = vmatpush1.bf16.msra.mxu0 %v1079
      %1436 = vmatprep.subr.bf16.mxu0 %v1082
      %1437 = vmatpush1.bf16.msra.mxu0 %v1081
      %1438 = vmatprep.subr.bf16.mxu0 0
      %1439 = vmatpush1.bf16.msra.mxu0 0
      %1440 = vmatprep.subr.bf16.mxu0 0
      %1441 = vmatpush1.bf16.msra.mxu0 0
      %1442 = vmatprep.subr.bf16.mxu0 0
      %1443 = vmatpush1.bf16.msra.mxu0 0
      %1444 = vmatprep.subr.bf16.mxu0 0
      %1445 = vmatpush1.bf16.msra.mxu0 0
      %1446 = vmatprep.subr.bf16.mxu0 0
      %1447 = vmatpush1.bf16.msra.mxu0 0
      %1448 = vmatprep.subr.bf16.mxu0 0
      %1449 = vmatpush1.bf16.msra.mxu0 0
      %1450 = vmatprep.subr.bf16.mxu0 0
      %1451 = vmatpush1.bf16.msra.mxu0 0
      %1452 = vmatprep.subr.bf16.mxu0 0
      %1453 = vmatpush1.bf16.msra.mxu0 0
      %1454 = vmatprep.subr.bf16.mxu0 0
      %1455 = vmatpush1.bf16.msra.mxu0 0
      %1456 = vmatprep.subr.bf16.mxu0 0
      %1457 = vmatpush1.bf16.msra.mxu0 0
      %1458 = vmatprep.subr.bf16.mxu0 0
      %1459 = vmatpush1.bf16.msra.mxu0 0
      %1460 = vmatprep.subr.bf16.mxu0 0
      %1461 = vmatpush1.bf16.msra.mxu0 0
      %1462 = vmatprep.subr.bf16.mxu0 0
      %1463 = vmatpush1.bf16.msra.mxu0 0
      %1464 = vmatprep.subr.bf16.mxu0 0
      %1465 = vmatpush1.bf16.msra.mxu0 0
      %1466 = vmatprep.mubr.bf16.mxu0 0
      %1467 = vmatmul.mubr.bf16.gmra.mrb[0].mxu0 %v1217
      %v1468 = vpop.f32.mrb[0].mxu0
      %v1469 = vadd.f32 %v1416, %v1468
      %v1470 = vpop.f32.mrb[0].mxu0
      %v1471 = vadd.f32 %v1418, %v1470
      %v1472 = vpop.f32.mrb[0].mxu0
      %v1473 = vadd.f32 %v1420, %v1472
      %v1474 = vpop.f32.mrb[0].mxu0
      %v1475 = vadd.f32 %v1422, %v1474
      %1476 = vmatprep.mubr.bf16.mxu0 0
      %1477 = vmatmul.mubr.bf16.gmra.mrb[0].mxu0 %v1220
      %v1478 = vpop.f32.mrb[0].mxu0
      %v1479 = vadd.f32 %v1426, %v1478
      %v1480 = vpop.f32.mrb[0].mxu0
      %v1481 = vadd.f32 %v1428, %v1480
      %v1482 = vpop.f32.mrb[0].mxu0
      %v1483 = vadd.f32 %v1430, %v1482
      %v1484 = vpop.f32.mrb[0].mxu0
      %v1485 = vadd.f32 %v1432, %v1484
      %1486 = vdwg.mxu0
      %vm1487 = vcmp.ge.f32.partialorder %v1469, 0.0
      %vm1488 = vcmp.ge.f32.partialorder %v1471, 0.0
      %vm1489 = vcmp.ge.f32.partialorder %v1473, 0.0
      %vm1490 = vcmp.ge.f32.partialorder %v1475, 0.0
      %vm1491 = vcmp.ge.f32.partialorder %v1479, 0.0
      %vm1492 = vcmp.ge.f32.partialorder %v1481, 0.0
      %vm1493 = vcmp.ge.f32.partialorder %v1483, 0.0
      %vm1494 = vcmp.ge.f32.partialorder %v1485, 0.0
      %v1495 = vstv %s298
      %v1496 = vmul.f32 %v1495, %v1469
      %v1497 = vmul.f32 %v1495, %v1471
      %v1498 = vmul.f32 %v1495, %v1473
      %v1499 = vmul.f32 %v1495, %v1475
      %v1500 = vmul.f32 %v1495, %v1479
      %v1501 = vmul.f32 %v1495, %v1481
      %v1502 = vmul.f32 %v1495, %v1483
      %v1503 = vmul.f32 %v1495, %v1485
      %v1504 = vsel %vm1487, %v1469, %v1496
      %v1505 = vsel %vm1488, %v1471, %v1497
      %v1506 = vsel %vm1489, %v1473, %v1498
      %v1507 = vsel %vm1490, %v1475, %v1499
      %v1508 = vsel %vm1491, %v1479, %v1500
      %v1509 = vsel %vm1492, %v1481, %v1501
      %v1510 = vsel %vm1493, %v1483, %v1502
      %v1511 = vsel %vm1494, %v1485, %v1503
      %vm1512 = vcmask 31744
      %v1513 = vsel %vm1512, %v1505, 0.0
      %v1514 = vadd.f32 %v1504, %v1513
      %1515 = vadd.xlane.f32.xlu0 %v1514
      %v1516 = vpop.xlane.xlu0 %1515
      %v1517 = vsel %vm1512, %v1507, 0.0
      %v1518 = vadd.f32 %v1506, %v1517
      %1519 = vadd.xlane.f32.xlu0 %v1518
      %v1520 = vpop.xlane.xlu0 %1519
      %v1521 = vsel %vm1512, %v1509, 0.0
      %v1522 = vadd.f32 %v1508, %v1521
      %1523 = vadd.xlane.f32.xlu0 %v1522
      %v1524 = vpop.xlane.xlu0 %1523
      %v1525 = vsel %vm1512, %v1511, 0.0
      %v1526 = vadd.f32 %v1510, %v1525
      %1527 = vadd.xlane.f32.xlu0 %v1526
      %v1528 = vpop.xlane.xlu0 %1527
      %v1529 = vmul.f32 %v1516, 0.007575758
      %v1530 = vmul.f32 %v1520, 0.007575758
      %v1531 = vmul.f32 %v1524, 0.007575758
      %v1532 = vmul.f32 %v1528, 0.007575758
      %v1533 = vmul.f32 %v1504, %v1504
      %v1534 = vmul.f32 %v1505, %v1505
      %v1535 = vmul.f32 %v1506, %v1506
      %v1536 = vmul.f32 %v1507, %v1507
      %v1537 = vmul.f32 %v1508, %v1508
      %v1538 = vmul.f32 %v1509, %v1509
      %v1539 = vmul.f32 %v1510, %v1510
      %v1540 = vmul.f32 %v1511, %v1511
      %v1541 = vsel %vm1512, %v1534, 0.0
      %v1542 = vadd.f32 %v1533, %v1541
      %1543 = vadd.xlane.f32.xlu0 %v1542
      %v1544 = vpop.xlane.xlu0 %1543
      %v1545 = vsel %vm1512, %v1536, 0.0
      %v1546 = vadd.f32 %v1535, %v1545
      %1547 = vadd.xlane.f32.xlu0 %v1546
      %v1548 = vpop.xlane.xlu0 %1547
      %v1549 = vsel %vm1512, %v1538, 0.0
      %v1550 = vadd.f32 %v1537, %v1549
      %1551 = vadd.xlane.f32.xlu0 %v1550
      %v1552 = vpop.xlane.xlu0 %1551
      %v1553 = vsel %vm1512, %v1540, 0.0
      %v1554 = vadd.f32 %v1539, %v1553
      %1555 = vadd.xlane.f32.xlu0 %v1554
      %v1556 = vpop.xlane.xlu0 %1555
      %v1557 = vmul.f32 %v1544, 0.007575758
      %v1558 = vmul.f32 %v1548, 0.007575758
      %v1559 = vmul.f32 %v1552, 0.007575758
      %v1560 = vmul.f32 %v1556, 0.007575758
      %v1561 = vmul.f32 %v1529, %v1529
      %v1562 = vmul.f32 %v1530, %v1530
      %v1563 = vmul.f32 %v1531, %v1531
      %v1564 = vmul.f32 %v1532, %v1532
      %v1565 = vsub.f32 %v1557, %v1561
      %v1566 = vsub.f32 %v1558, %v1562
      %v1567 = vsub.f32 %v1559, %v1563
      %v1568 = vsub.f32 %v1560, %v1564
      %v1569 = vadd.f32 %v1565, 1e-05
      %v1570 = vadd.f32 %v1566, 1e-05
      %v1571 = vadd.f32 %v1567, 1e-05
      %v1572 = vadd.f32 %v1568, 1e-05
      %v1573 = vrsqrt.pop %v1569
      %v1574 = vrsqrt.pop %v1570
      %v1575 = vrsqrt.pop %v1571
      %v1576 = vrsqrt.pop %v1572
      %v1577 = vsub.f32 %v1504, %v1529
      %v1578 = vsub.f32 %v1505, %v1529
      %v1579 = vsub.f32 %v1506, %v1530
      %v1580 = vsub.f32 %v1507, %v1530
      %v1581 = vsub.f32 %v1508, %v1531
      %v1582 = vsub.f32 %v1509, %v1531
      %v1583 = vsub.f32 %v1510, %v1532
      %v1584 = vsub.f32 %v1511, %v1532
      %v1585 = vmul.f32 %v1577, %v1573
      %v1586 = vmul.f32 %v1578, %v1573
      %v1587 = vmul.f32 %v1579, %v1574
      %v1588 = vmul.f32 %v1580, %v1574
      %v1589 = vmul.f32 %v1581, %v1575
      %v1590 = vmul.f32 %v1582, %v1575
      %v1591 = vmul.f32 %v1583, %v1576
      %v1592 = vmul.f32 %v1584, %v1576
      %v1594 = vlaneseq
      %v1595 = vshrl.u32 %v1594, 7
      %v1596 = vsub.s32 0, %v1595
      %v1597 = vrot.slane %v319, %v1596
      %v1598 = vlaneseq
      %v1599 = vshrl.u32 %v1598, 7
      %v1600 = vsub.s32 1, %v1599
      %v1601 = vrot.slane %v319, %v1600
      %v1604 = vmul.f32 %v1585, %v1597
      %v1605 = vmul.f32 %v1586, %v1601
      %v1606 = vmul.f32 %v1587, %v1597
      %v1607 = vmul.f32 %v1588, %v1601
      %v1608 = vmul.f32 %v1589, %v1597
      %v1609 = vmul.f32 %v1590, %v1601
      %v1610 = vmul.f32 %v1591, %v1597
      %v1611 = vmul.f32 %v1592, %v1601
      %v1613 = vlaneseq
      %v1614 = vshrl.u32 %v1613, 7
      %v1615 = vsub.s32 0, %v1614
      %v1616 = vrot.slane %v320, %v1615
      %v1617 = vlaneseq
      %v1618 = vshrl.u32 %v1617, 7
      %v1619 = vsub.s32 1, %v1618
      %v1620 = vrot.slane %v320, %v1619
      %v1623 = vadd.f32 %v1604, %v1616
      %v1624 = vadd.f32 %v1605, %v1620
      %v1625 = vadd.f32 %v1606, %v1616
      %v1626 = vadd.f32 %v1607, %v1620
      %v1627 = vadd.f32 %v1608, %v1616
      %v1628 = vadd.f32 %v1609, %v1620
      %v1629 = vadd.f32 %v1610, %v1616
      %v1630 = vadd.f32 %v1611, %v1620
      %1631 = vst [vmem:[%s295] sm:$0xff] %v1623
      %1632 = vst.msk [vmem:[%s295 + $0x8] sm:$0xff] %vm1512, %v1624
      %1633 = vst [vmem:[%s295 + $0x10] sm:$0xff] %v1625
      %1634 = vst.msk [vmem:[%s295 + $0x18] sm:$0xff] %vm1512, %v1626
      %1635 = vst [vmem:[%s295 + $0x20] sm:$0xff] %v1627
      %1636 = vst.msk [vmem:[%s295 + $0x28] sm:$0xff] %vm1512, %v1628
      %1637 = vst [vmem:[%s295 + $0x30] sm:$0xff] %v1629
      %1638 = vst.msk [vmem:[%s295 + $0x38] sm:$0xff] %vm1512, %v1630
      %s1639 = scalar_lea.vmem %s1, 1056
      %v1640 = vld [vmem:[%s1639] sm:$0xff]
      %v1641 = vld [vmem:[%s1639 + $0x8] sm:$0xff]
      %v1642 = vld [vmem:[%s1639 + $0x10] sm:$0xff]
      %v1643 = vld [vmem:[%s1639 + $0x18] sm:$0xff]
      %v1644 = vld [vmem:[%s1639 + $0x20] sm:$0xff]
      %v1645 = vld [vmem:[%s1639 + $0x28] sm:$0xff]
      %v1646 = vld [vmem:[%s1639 + $0x30] sm:$0xff]
      %v1647 = vld [vmem:[%s1639 + $0x38] sm:$0xff]
      %v1648 = vld [vmem:[%s1639 + $0x40] sm:$0xff]
      %v1649 = vld [vmem:[%s1639 + $0x48] sm:$0xff]
      %v1650 = vld [vmem:[%s1639 + $0x50] sm:$0xff]
      %v1651 = vld [vmem:[%s1639 + $0x58] sm:$0xff]
      %v1652 = vld [vmem:[%s1639 + $0x60] sm:$0xff]
      %v1653 = vld [vmem:[%s1639 + $0x68] sm:$0xff]
      %v1654 = vld [vmem:[%s1639 + $0x70] sm:$0xff]
      %v1655 = vld [vmem:[%s1639 + $0x78] sm:$0xff]
      %v1656 = vld [vmem:[%s1639 + $0x80] sm:$0xff]
      %v1657 = vld [vmem:[%s1639 + $0x88] sm:$0xff]
      %v1658 = vld [vmem:[%s1639 + $0x90] sm:$0xff]
      %v1659 = vld [vmem:[%s1639 + $0x98] sm:$0xff]
      %v1660 = vld [vmem:[%s1639 + $0xa0] sm:$0xff]
      %v1661 = vld [vmem:[%s1639 + $0xa8] sm:$0xff]
      %v1662 = vld [vmem:[%s1639 + $0xb0] sm:$0xff]
      %v1663 = vld [vmem:[%s1639 + $0xb8] sm:$0xff]
      %v1664 = vld [vmem:[%s1639 + $0xc0] sm:$0xff]
      %v1665 = vld [vmem:[%s1639 + $0xc8] sm:$0xff]
      %v1666 = vld [vmem:[%s1639 + $0xd0] sm:$0xff]
      %v1667 = vld [vmem:[%s1639 + $0xd8] sm:$0xff]
      %v1668 = vld [vmem:[%s1639 + $0xe0] sm:$0xff]
      %v1669 = vld [vmem:[%s1639 + $0xe8] sm:$0xff]
      %v1670 = vld [vmem:[%s1639 + $0xf0] sm:$0xff]
      %v1671 = vld [vmem:[%s1639 + $0xf8] sm:$0xff]
      %v1672 = vld [vmem:[%s1639 + $0x100] sm:$0xff]
      %v1673 = vld [vmem:[%s1639 + $0x108] sm:$0xff]
      %v1674 = vld [vmem:[%s1639 + $0x110] sm:$0xff]
      %v1675 = vld [vmem:[%s1639 + $0x118] sm:$0xff]
      %v1676 = vld [vmem:[%s1639 + $0x120] sm:$0xff]
      %v1677 = vld [vmem:[%s1639 + $0x128] sm:$0xff]
      %v1678 = vld [vmem:[%s1639 + $0x130] sm:$0xff]
      %v1679 = vld [vmem:[%s1639 + $0x138] sm:$0xff]
      %v1680 = vld [vmem:[%s1639 + $0x140] sm:$0xff]
      %v1681 = vld [vmem:[%s1639 + $0x148] sm:$0xff]
      %v1682 = vld [vmem:[%s1639 + $0x150] sm:$0xff]
      %v1683 = vld [vmem:[%s1639 + $0x158] sm:$0xff]
      %v1684 = vld [vmem:[%s1639 + $0x160] sm:$0xff]
      %v1685 = vld [vmem:[%s1639 + $0x168] sm:$0xff]
      %v1686 = vld [vmem:[%s1639 + $0x170] sm:$0xff]
      %v1687 = vld [vmem:[%s1639 + $0x178] sm:$0xff]
      %v1688 = vld [vmem:[%s1639 + $0x180] sm:$0xff]
      %v1689 = vld [vmem:[%s1639 + $0x188] sm:$0xff]
      %v1690 = vld [vmem:[%s1639 + $0x190] sm:$0xff]
      %v1691 = vld [vmem:[%s1639 + $0x198] sm:$0xff]
      %v1692 = vld [vmem:[%s1639 + $0x1a0] sm:$0xff]
      %v1693 = vld [vmem:[%s1639 + $0x1a8] sm:$0xff]
      %v1694 = vld [vmem:[%s1639 + $0x1b0] sm:$0xff]
      %v1695 = vld [vmem:[%s1639 + $0x1b8] sm:$0xff]
      %v1696 = vld [vmem:[%s1639 + $0x1c0] sm:$0xff]
      %v1697 = vld [vmem:[%s1639 + $0x1c8] sm:$0xff]
      %v1698 = vld [vmem:[%s1639 + $0x1d0] sm:$0xff]
      %v1699 = vld [vmem:[%s1639 + $0x1d8] sm:$0xff]
      %v1700 = vld [vmem:[%s1639 + $0x1e0] sm:$0xff]
      %v1701 = vld [vmem:[%s1639 + $0x1e8] sm:$0xff]
      %v1702 = vld [vmem:[%s1639 + $0x1f0] sm:$0xff]
      %v1703 = vld [vmem:[%s1639 + $0x1f8] sm:$0xff]
      %v1704 = vld [vmem:[%s1639 + $0x200] sm:$0xff]
      %v1705 = vld [vmem:[%s1639 + $0x208] sm:$0xff]
      %v1706 = vld [vmem:[%s1639 + $0x210] sm:$0xff]
      %v1707 = vld [vmem:[%s1639 + $0x218] sm:$0xff]
      %v1708 = vld [vmem:[%s1639 + $0x220] sm:$0xff]
      %v1709 = vld [vmem:[%s1639 + $0x228] sm:$0xff]
      %v1710 = vld [vmem:[%s1639 + $0x230] sm:$0xff]
      %v1711 = vld [vmem:[%s1639 + $0x238] sm:$0xff]
      %v1712 = vld [vmem:[%s1639 + $0x240] sm:$0xff]
      %v1713 = vld [vmem:[%s1639 + $0x248] sm:$0xff]
      %v1714 = vld [vmem:[%s1639 + $0x250] sm:$0xff]
      %v1715 = vld [vmem:[%s1639 + $0x258] sm:$0xff]
      %v1716 = vld [vmem:[%s1639 + $0x260] sm:$0xff]
      %v1717 = vld [vmem:[%s1639 + $0x268] sm:$0xff]
      %v1718 = vld [vmem:[%s1639 + $0x270] sm:$0xff]
      %v1719 = vld [vmem:[%s1639 + $0x278] sm:$0xff]
      %v1720 = vld [vmem:[%s1639 + $0x280] sm:$0xff]
      %v1721 = vld [vmem:[%s1639 + $0x288] sm:$0xff]
      %v1722 = vld [vmem:[%s1639 + $0x290] sm:$0xff]
      %v1723 = vld [vmem:[%s1639 + $0x298] sm:$0xff]
      %v1724 = vld [vmem:[%s1639 + $0x2a0] sm:$0xff]
      %v1725 = vld [vmem:[%s1639 + $0x2a8] sm:$0xff]
      %v1726 = vld [vmem:[%s1639 + $0x2b0] sm:$0xff]
      %v1727 = vld [vmem:[%s1639 + $0x2b8] sm:$0xff]
      %v1728 = vld [vmem:[%s1639 + $0x2c0] sm:$0xff]
      %v1729 = vld [vmem:[%s1639 + $0x2c8] sm:$0xff]
      %v1730 = vld [vmem:[%s1639 + $0x2d0] sm:$0xff]
      %v1731 = vld [vmem:[%s1639 + $0x2d8] sm:$0xff]
      %v1732 = vld [vmem:[%s1639 + $0x2e0] sm:$0xff]
      %v1733 = vld [vmem:[%s1639 + $0x2e8] sm:$0xff]
      %v1734 = vld [vmem:[%s1639 + $0x2f0] sm:$0xff]
      %v1735 = vld [vmem:[%s1639 + $0x2f8] sm:$0xff]
      %v1736 = vld [vmem:[%s1639 + $0x300] sm:$0xff]
      %v1737 = vld [vmem:[%s1639 + $0x308] sm:$0xff]
      %v1738 = vld [vmem:[%s1639 + $0x310] sm:$0xff]
      %v1739 = vld [vmem:[%s1639 + $0x318] sm:$0xff]
      %v1740 = vld [vmem:[%s1639 + $0x320] sm:$0xff]
      %v1741 = vld [vmem:[%s1639 + $0x328] sm:$0xff]
      %v1742 = vld [vmem:[%s1639 + $0x330] sm:$0xff]
      %v1743 = vld [vmem:[%s1639 + $0x338] sm:$0xff]
      %v1744 = vld [vmem:[%s1639 + $0x340] sm:$0xff]
      %v1745 = vld [vmem:[%s1639 + $0x348] sm:$0xff]
      %v1746 = vld [vmem:[%s1639 + $0x350] sm:$0xff]
      %v1747 = vld [vmem:[%s1639 + $0x358] sm:$0xff]
      %v1748 = vld [vmem:[%s1639 + $0x360] sm:$0xff]
      %v1749 = vld [vmem:[%s1639 + $0x368] sm:$0xff]
      %v1750 = vld [vmem:[%s1639 + $0x370] sm:$0xff]
      %v1751 = vld [vmem:[%s1639 + $0x378] sm:$0xff]
      %v1752 = vld [vmem:[%s1639 + $0x380] sm:$0xff]
      %v1753 = vld [vmem:[%s1639 + $0x388] sm:$0xff]
      %v1754 = vld [vmem:[%s1639 + $0x390] sm:$0xff]
      %v1755 = vld [vmem:[%s1639 + $0x398] sm:$0xff]
      %v1756 = vld [vmem:[%s1639 + $0x3a0] sm:$0xff]
      %v1757 = vld [vmem:[%s1639 + $0x3a8] sm:$0xff]
      %v1758 = vld [vmem:[%s1639 + $0x3b0] sm:$0xff]
      %v1759 = vld [vmem:[%s1639 + $0x3b8] sm:$0xff]
      %v1760 = vld [vmem:[%s1639 + $0x3c0] sm:$0xff]
      %v1761 = vld [vmem:[%s1639 + $0x3c8] sm:$0xff]
      %v1762 = vld [vmem:[%s1639 + $0x3d0] sm:$0xff]
      %v1763 = vld [vmem:[%s1639 + $0x3d8] sm:$0xff]
      %v1764 = vld [vmem:[%s1639 + $0x3e0] sm:$0xff]
      %v1765 = vld [vmem:[%s1639 + $0x3e8] sm:$0xff]
      %v1766 = vld [vmem:[%s1639 + $0x3f0] sm:$0xff]
      %v1767 = vld [vmem:[%s1639 + $0x3f8] sm:$0xff]
      %v1768 = vld [vmem:[%s1639 + $0x400] sm:$0xff]
      %v1769 = vld [vmem:[%s1639 + $0x408] sm:$0xff]
      %v1770 = vld [vmem:[%s1639 + $0x410] sm:$0xff]
      %v1771 = vld [vmem:[%s1639 + $0x418] sm:$0xff]
      %s1772 = scalar_lea.vmem %s2, 2
      %v1773 = vld [vmem:[%s1772] sm:$0x3]
      %v1775 = vlaneseq
      %v1776 = vshrl.u32 %v1775, 7
      %v1777 = vsub.s32 0, %v1776
      %v1778 = vrot.slane %v1773, %v1777
      %v1779 = vlaneseq
      %v1780 = vshrl.u32 %v1779, 7
      %v1781 = vsub.s32 1, %v1780
      %v1782 = vrot.slane %v1773, %v1781
      %v1917 = vunpack.c.l.b16 %v1640
      %v1918 = vunpack.c.h.b16 %v1640
      %v1919 = vunpack.c.l.b16 %v1641
      %v1920 = vunpack.c.h.b16 %v1641
      %v1921 = vunpack.c.l.b16 %v1642
      %v1922 = vunpack.c.h.b16 %v1642
      %v1923 = vunpack.c.l.b16 %v1643
      %v1924 = vunpack.c.h.b16 %v1643
      %v1925 = vunpack.c.l.b16 %v1644
      %v1926 = vunpack.c.h.b16 %v1644
      %v1927 = vunpack.c.l.b16 %v1645
      %v1928 = vunpack.c.h.b16 %v1645
      %v1929 = vunpack.c.l.b16 %v1646
      %v1930 = vunpack.c.h.b16 %v1646
      %v1931 = vunpack.c.l.b16 %v1647
      %v1932 = vunpack.c.h.b16 %v1647
      %v1933 = vunpack.c.l.b16 %v1648
      %v1934 = vunpack.c.h.b16 %v1648
      %v1935 = vunpack.c.l.b16 %v1649
      %v1936 = vunpack.c.h.b16 %v1649
      %v1937 = vunpack.c.l.b16 %v1650
      %v1938 = vunpack.c.h.b16 %v1650
      %v1939 = vunpack.c.l.b16 %v1651
      %v1940 = vunpack.c.h.b16 %v1651
      %v1941 = vunpack.c.l.b16 %v1652
      %v1942 = vunpack.c.h.b16 %v1652
      %v1943 = vunpack.c.l.b16 %v1653
      %v1944 = vunpack.c.h.b16 %v1653
      %v1945 = vunpack.c.l.b16 %v1654
      %v1946 = vunpack.c.h.b16 %v1654
      %v1947 = vunpack.c.l.b16 %v1655
      %v1948 = vunpack.c.h.b16 %v1655
      %v1949 = vunpack.c.l.b16 %v1656
      %v1950 = vunpack.c.h.b16 %v1656
      %v1951 = vunpack.c.l.b16 %v1657
      %v1952 = vunpack.c.h.b16 %v1657
      %v1953 = vunpack.c.l.b16 %v1658
      %v1954 = vunpack.c.h.b16 %v1658
      %v1955 = vunpack.c.l.b16 %v1659
      %v1956 = vunpack.c.h.b16 %v1659
      %v1957 = vunpack.c.l.b16 %v1660
      %v1958 = vunpack.c.h.b16 %v1660
      %v1959 = vunpack.c.l.b16 %v1661
      %v1960 = vunpack.c.h.b16 %v1661
      %v1961 = vunpack.c.l.b16 %v1662
      %v1962 = vunpack.c.h.b16 %v1662
      %v1963 = vunpack.c.l.b16 %v1663
      %v1964 = vunpack.c.h.b16 %v1663
      %v1965 = vunpack.c.l.b16 %v1664
      %v1966 = vunpack.c.h.b16 %v1664
      %v1967 = vunpack.c.l.b16 %v1665
      %v1968 = vunpack.c.h.b16 %v1665
      %v1969 = vunpack.c.l.b16 %v1666
      %v1970 = vunpack.c.h.b16 %v1666
      %v1971 = vunpack.c.l.b16 %v1667
      %v1972 = vunpack.c.h.b16 %v1667
      %v1973 = vunpack.c.l.b16 %v1668
      %v1974 = vunpack.c.h.b16 %v1668
      %v1975 = vunpack.c.l.b16 %v1669
      %v1976 = vunpack.c.h.b16 %v1669
      %v1977 = vunpack.c.l.b16 %v1670
      %v1978 = vunpack.c.h.b16 %v1670
      %v1979 = vunpack.c.l.b16 %v1671
      %v1980 = vunpack.c.h.b16 %v1671
      %v1981 = vunpack.c.l.b16 %v1672
      %v1982 = vunpack.c.h.b16 %v1672
      %v1983 = vunpack.c.l.b16 %v1673
      %v1984 = vunpack.c.h.b16 %v1673
      %v1985 = vunpack.c.l.b16 %v1674
      %v1986 = vunpack.c.h.b16 %v1674
      %v1987 = vunpack.c.l.b16 %v1675
      %v1988 = vunpack.c.h.b16 %v1675
      %v1989 = vunpack.c.l.b16 %v1676
      %v1990 = vunpack.c.h.b16 %v1676
      %v1991 = vunpack.c.l.b16 %v1677
      %v1992 = vunpack.c.h.b16 %v1677
      %v1993 = vunpack.c.l.b16 %v1678
      %v1994 = vunpack.c.h.b16 %v1678
      %v1995 = vunpack.c.l.b16 %v1679
      %v1996 = vunpack.c.h.b16 %v1679
      %v1997 = vunpack.c.l.b16 %v1680
      %v1998 = vunpack.c.h.b16 %v1680
      %v1999 = vunpack.c.l.b16 %v1681
      %v2000 = vunpack.c.h.b16 %v1681
      %v2001 = vunpack.c.l.b16 %v1682
      %v2002 = vunpack.c.h.b16 %v1682
      %v2003 = vunpack.c.l.b16 %v1683
      %v2004 = vunpack.c.h.b16 %v1683
      %v2005 = vunpack.c.l.b16 %v1684
      %v2006 = vunpack.c.h.b16 %v1684
      %v2007 = vunpack.c.l.b16 %v1685
      %v2008 = vunpack.c.h.b16 %v1685
      %v2009 = vunpack.c.l.b16 %v1686
      %v2010 = vunpack.c.h.b16 %v1686
      %v2011 = vunpack.c.l.b16 %v1687
      %v2012 = vunpack.c.h.b16 %v1687
      %v2013 = vunpack.c.l.b16 %v1688
      %v2014 = vunpack.c.h.b16 %v1688
      %v2015 = vunpack.c.l.b16 %v1689
      %v2016 = vunpack.c.h.b16 %v1689
      %v2017 = vunpack.c.l.b16 %v1690
      %v2018 = vunpack.c.h.b16 %v1690
      %v2019 = vunpack.c.l.b16 %v1691
      %v2020 = vunpack.c.h.b16 %v1691
      %v2021 = vunpack.c.l.b16 %v1692
      %v2022 = vunpack.c.h.b16 %v1692
      %v2023 = vunpack.c.l.b16 %v1693
      %v2024 = vunpack.c.h.b16 %v1693
      %v2025 = vunpack.c.l.b16 %v1694
      %v2026 = vunpack.c.h.b16 %v1694
      %v2027 = vunpack.c.l.b16 %v1695
      %v2028 = vunpack.c.h.b16 %v1695
      %v2029 = vunpack.c.l.b16 %v1696
      %v2030 = vunpack.c.h.b16 %v1696
      %v2031 = vunpack.c.l.b16 %v1697
      %v2032 = vunpack.c.h.b16 %v1697
      %v2033 = vunpack.c.l.b16 %v1698
      %v2034 = vunpack.c.h.b16 %v1698
      %v2035 = vunpack.c.l.b16 %v1699
      %v2036 = vunpack.c.h.b16 %v1699
      %v2037 = vunpack.c.l.b16 %v1700
      %v2038 = vunpack.c.h.b16 %v1700
      %v2039 = vunpack.c.l.b16 %v1701
      %v2040 = vunpack.c.h.b16 %v1701
      %v2041 = vunpack.c.l.b16 %v1702
      %v2042 = vunpack.c.h.b16 %v1702
      %v2043 = vunpack.c.l.b16 %v1703
      %v2044 = vunpack.c.h.b16 %v1703
      %v2045 = vunpack.c.l.b16 %v1704
      %v2046 = vunpack.c.h.b16 %v1704
      %v2047 = vunpack.c.l.b16 %v1705
      %v2048 = vunpack.c.h.b16 %v1705
      %v2049 = vunpack.c.l.b16 %v1706
      %v2050 = vunpack.c.h.b16 %v1706
      %v2051 = vunpack.c.l.b16 %v1707
      %v2052 = vunpack.c.h.b16 %v1707
      %v2053 = vunpack.c.l.b16 %v1708
      %v2054 = vunpack.c.h.b16 %v1708
      %v2055 = vunpack.c.l.b16 %v1709
      %v2056 = vunpack.c.h.b16 %v1709
      %v2057 = vunpack.c.l.b16 %v1710
      %v2058 = vunpack.c.h.b16 %v1710
      %v2059 = vunpack.c.l.b16 %v1711
      %v2060 = vunpack.c.h.b16 %v1711
      %v2061 = vunpack.c.l.b16 %v1712
      %v2062 = vunpack.c.h.b16 %v1712
      %v2063 = vunpack.c.l.b16 %v1713
      %v2064 = vunpack.c.h.b16 %v1713
      %v2065 = vunpack.c.l.b16 %v1714
      %v2066 = vunpack.c.h.b16 %v1714
      %v2067 = vunpack.c.l.b16 %v1715
      %v2068 = vunpack.c.h.b16 %v1715
      %v2069 = vunpack.c.l.b16 %v1716
      %v2070 = vunpack.c.h.b16 %v1716
      %v2071 = vunpack.c.l.b16 %v1717
      %v2072 = vunpack.c.h.b16 %v1717
      %v2073 = vunpack.c.l.b16 %v1718
      %v2074 = vunpack.c.h.b16 %v1718
      %v2075 = vunpack.c.l.b16 %v1719
      %v2076 = vunpack.c.h.b16 %v1719
      %v2077 = vunpack.c.l.b16 %v1720
      %v2078 = vunpack.c.h.b16 %v1720
      %v2079 = vunpack.c.l.b16 %v1721
      %v2080 = vunpack.c.h.b16 %v1721
      %v2081 = vunpack.c.l.b16 %v1722
      %v2082 = vunpack.c.h.b16 %v1722
      %v2083 = vunpack.c.l.b16 %v1723
      %v2084 = vunpack.c.h.b16 %v1723
      %v2085 = vunpack.c.l.b16 %v1724
      %v2086 = vunpack.c.h.b16 %v1724
      %v2087 = vunpack.c.l.b16 %v1725
      %v2088 = vunpack.c.h.b16 %v1725
      %v2089 = vunpack.c.l.b16 %v1726
      %v2090 = vunpack.c.h.b16 %v1726
      %v2091 = vunpack.c.l.b16 %v1727
      %v2092 = vunpack.c.h.b16 %v1727
      %v2093 = vunpack.c.l.b16 %v1728
      %v2094 = vunpack.c.h.b16 %v1728
      %v2095 = vunpack.c.l.b16 %v1729
      %v2096 = vunpack.c.h.b16 %v1729
      %v2097 = vunpack.c.l.b16 %v1730
      %v2098 = vunpack.c.h.b16 %v1730
      %v2099 = vunpack.c.l.b16 %v1731
      %v2100 = vunpack.c.h.b16 %v1731
      %v2101 = vunpack.c.l.b16 %v1732
      %v2102 = vunpack.c.h.b16 %v1732
      %v2103 = vunpack.c.l.b16 %v1733
      %v2104 = vunpack.c.h.b16 %v1733
      %v2105 = vunpack.c.l.b16 %v1734
      %v2106 = vunpack.c.h.b16 %v1734
      %v2107 = vunpack.c.l.b16 %v1735
      %v2108 = vunpack.c.h.b16 %v1735
      %v2109 = vunpack.c.l.b16 %v1736
      %v2110 = vunpack.c.h.b16 %v1736
      %v2111 = vunpack.c.l.b16 %v1737
      %v2112 = vunpack.c.h.b16 %v1737
      %v2113 = vunpack.c.l.b16 %v1738
      %v2114 = vunpack.c.h.b16 %v1738
      %v2115 = vunpack.c.l.b16 %v1739
      %v2116 = vunpack.c.h.b16 %v1739
      %v2117 = vunpack.c.l.b16 %v1740
      %v2118 = vunpack.c.h.b16 %v1740
      %v2119 = vunpack.c.l.b16 %v1741
      %v2120 = vunpack.c.h.b16 %v1741
      %v2121 = vunpack.c.l.b16 %v1742
      %v2122 = vunpack.c.h.b16 %v1742
      %v2123 = vunpack.c.l.b16 %v1743
      %v2124 = vunpack.c.h.b16 %v1743
      %v2125 = vunpack.c.l.b16 %v1744
      %v2126 = vunpack.c.h.b16 %v1744
      %v2127 = vunpack.c.l.b16 %v1745
      %v2128 = vunpack.c.h.b16 %v1745
      %v2129 = vunpack.c.l.b16 %v1746
      %v2130 = vunpack.c.h.b16 %v1746
      %v2131 = vunpack.c.l.b16 %v1747
      %v2132 = vunpack.c.h.b16 %v1747
      %v2133 = vunpack.c.l.b16 %v1748
      %v2134 = vunpack.c.h.b16 %v1748
      %v2135 = vunpack.c.l.b16 %v1749
      %v2136 = vunpack.c.h.b16 %v1749
      %v2137 = vunpack.c.l.b16 %v1750
      %v2138 = vunpack.c.h.b16 %v1750
      %v2139 = vunpack.c.l.b16 %v1751
      %v2140 = vunpack.c.h.b16 %v1751
      %v2141 = vunpack.c.l.b16 %v1752
      %v2142 = vunpack.c.h.b16 %v1752
      %v2143 = vunpack.c.l.b16 %v1753
      %v2144 = vunpack.c.h.b16 %v1753
      %v2145 = vunpack.c.l.b16 %v1754
      %v2146 = vunpack.c.h.b16 %v1754
      %v2147 = vunpack.c.l.b16 %v1755
      %v2148 = vunpack.c.h.b16 %v1755
      %v2149 = vunpack.c.l.b16 %v1756
      %v2150 = vunpack.c.h.b16 %v1756
      %v2151 = vunpack.c.l.b16 %v1757
      %v2152 = vunpack.c.h.b16 %v1757
      %v2153 = vunpack.c.l.b16 %v1758
      %v2154 = vunpack.c.h.b16 %v1758
      %v2155 = vunpack.c.l.b16 %v1759
      %v2156 = vunpack.c.h.b16 %v1759
      %v2157 = vunpack.c.l.b16 %v1760
      %v2158 = vunpack.c.h.b16 %v1760
      %v2159 = vunpack.c.l.b16 %v1761
      %v2160 = vunpack.c.h.b16 %v1761
      %v2161 = vunpack.c.l.b16 %v1762
      %v2162 = vunpack.c.h.b16 %v1762
      %v2163 = vunpack.c.l.b16 %v1763
      %v2164 = vunpack.c.h.b16 %v1763
      %v2165 = vunpack.c.l.b16 %v1764
      %v2166 = vunpack.c.h.b16 %v1764
      %v2167 = vunpack.c.l.b16 %v1765
      %v2168 = vunpack.c.h.b16 %v1765
      %v2169 = vunpack.c.l.b16 %v1766
      %v2170 = vunpack.c.h.b16 %v1766
      %v2171 = vunpack.c.l.b16 %v1767
      %v2172 = vunpack.c.h.b16 %v1767
      %v2173 = vunpack.c.l.b16 %v1768
      %v2174 = vunpack.c.h.b16 %v1768
      %v2175 = vunpack.c.l.b16 %v1769
      %v2176 = vunpack.c.h.b16 %v1769
      %v2177 = vunpack.c.l.b16 %v1770
      %v2178 = vunpack.c.h.b16 %v1770
      %v2179 = vunpack.c.l.b16 %v1771
      %v2180 = vunpack.c.h.b16 %v1771
      %v2181 = vpack.c.b16 %v1919, %v1917
      %v2182 = vpack.c.b16 %v1920, %v1918
      %v2183 = vpack.c.b16 %v1923, %v1921
      %v2184 = vpack.c.b16 %v1924, %v1922
      %v2185 = vpack.c.b16 %v1927, %v1925
      %v2186 = vpack.c.b16 %v1928, %v1926
      %v2187 = vpack.c.b16 %v1931, %v1929
      %v2188 = vpack.c.b16 %v1932, %v1930
      %v2189 = vpack.c.b16 %v1935, %v1933
      %v2190 = vpack.c.b16 %v1936, %v1934
      %v2191 = vpack.c.b16 %v1939, %v1937
      %v2192 = vpack.c.b16 %v1940, %v1938
      %v2193 = vpack.c.b16 %v1943, %v1941
      %v2194 = vpack.c.b16 %v1944, %v1942
      %v2195 = vpack.c.b16 %v1947, %v1945
      %v2196 = vpack.c.b16 %v1948, %v1946
      %v2197 = vpack.c.b16 %v1951, %v1949
      %v2198 = vpack.c.b16 %v1952, %v1950
      %v2199 = vpack.c.b16 %v1955, %v1953
      %v2200 = vpack.c.b16 %v1956, %v1954
      %v2201 = vpack.c.b16 %v1959, %v1957
      %v2202 = vpack.c.b16 %v1960, %v1958
      %v2203 = vpack.c.b16 %v1963, %v1961
      %v2204 = vpack.c.b16 %v1964, %v1962
      %v2205 = vpack.c.b16 %v1967, %v1965
      %v2206 = vpack.c.b16 %v1968, %v1966
      %v2207 = vpack.c.b16 %v1971, %v1969
      %v2208 = vpack.c.b16 %v1972, %v1970
      %v2209 = vpack.c.b16 %v1975, %v1973
      %v2210 = vpack.c.b16 %v1976, %v1974
      %v2211 = vpack.c.b16 %v1979, %v1977
      %v2212 = vpack.c.b16 %v1980, %v1978
      %v2213 = vpack.c.b16 %v1983, %v1981
      %v2214 = vpack.c.b16 %v1984, %v1982
      %v2215 = vpack.c.b16 %v1987, %v1985
      %v2216 = vpack.c.b16 %v1988, %v1986
      %v2217 = vpack.c.b16 %v1991, %v1989
      %v2218 = vpack.c.b16 %v1992, %v1990
      %v2219 = vpack.c.b16 %v1995, %v1993
      %v2220 = vpack.c.b16 %v1996, %v1994
      %v2221 = vpack.c.b16 %v1999, %v1997
      %v2222 = vpack.c.b16 %v2000, %v1998
      %v2223 = vpack.c.b16 %v2003, %v2001
      %v2224 = vpack.c.b16 %v2004, %v2002
      %v2225 = vpack.c.b16 %v2007, %v2005
      %v2226 = vpack.c.b16 %v2008, %v2006
      %v2227 = vpack.c.b16 %v2011, %v2009
      %v2228 = vpack.c.b16 %v2012, %v2010
      %v2229 = vpack.c.b16 %v2015, %v2013
      %v2230 = vpack.c.b16 %v2016, %v2014
      %v2231 = vpack.c.b16 %v2019, %v2017
      %v2232 = vpack.c.b16 %v2020, %v2018
      %v2233 = vpack.c.b16 %v2023, %v2021
      %v2234 = vpack.c.b16 %v2024, %v2022
      %v2235 = vpack.c.b16 %v2027, %v2025
      %v2236 = vpack.c.b16 %v2028, %v2026
      %v2237 = vpack.c.b16 %v2031, %v2029
      %v2238 = vpack.c.b16 %v2032, %v2030
      %v2239 = vpack.c.b16 %v2035, %v2033
      %v2240 = vpack.c.b16 %v2036, %v2034
      %v2241 = vpack.c.b16 %v2039, %v2037
      %v2242 = vpack.c.b16 %v2040, %v2038
      %v2243 = vpack.c.b16 %v2043, %v2041
      %v2244 = vpack.c.b16 %v2044, %v2042
      %v2245 = vpack.c.b16 %v2047, %v2045
      %v2246 = vpack.c.b16 %v2048, %v2046
      %v2247 = vpack.c.b16 %v2051, %v2049
      %v2248 = vpack.c.b16 %v2052, %v2050
      %v2249 = vpack.c.b16 %v2055, %v2053
      %v2250 = vpack.c.b16 %v2056, %v2054
      %v2251 = vpack.c.b16 %v2059, %v2057
      %v2252 = vpack.c.b16 %v2060, %v2058
      %v2253 = vpack.c.b16 %v2063, %v2061
      %v2254 = vpack.c.b16 %v2064, %v2062
      %v2255 = vpack.c.b16 %v2067, %v2065
      %v2256 = vpack.c.b16 %v2068, %v2066
      %v2257 = vpack.c.b16 %v2071, %v2069
      %v2258 = vpack.c.b16 %v2072, %v2070
      %v2259 = vpack.c.b16 %v2075, %v2073
      %v2260 = vpack.c.b16 %v2076, %v2074
      %v2261 = vpack.c.b16 %v2079, %v2077
      %v2262 = vpack.c.b16 %v2080, %v2078
      %v2263 = vpack.c.b16 %v2083, %v2081
      %v2264 = vpack.c.b16 %v2084, %v2082
      %v2265 = vpack.c.b16 %v2087, %v2085
      %v2266 = vpack.c.b16 %v2088, %v2086
      %v2267 = vpack.c.b16 %v2091, %v2089
      %v2268 = vpack.c.b16 %v2092, %v2090
      %v2269 = vpack.c.b16 %v2095, %v2093
      %v2270 = vpack.c.b16 %v2096, %v2094
      %v2271 = vpack.c.b16 %v2099, %v2097
      %v2272 = vpack.c.b16 %v2100, %v2098
      %v2273 = vpack.c.b16 %v2103, %v2101
      %v2274 = vpack.c.b16 %v2104, %v2102
      %v2275 = vpack.c.b16 %v2107, %v2105
      %v2276 = vpack.c.b16 %v2108, %v2106
      %v2277 = vpack.c.b16 %v2111, %v2109
      %v2278 = vpack.c.b16 %v2112, %v2110
      %v2279 = vpack.c.b16 %v2115, %v2113
      %v2280 = vpack.c.b16 %v2116, %v2114
      %v2281 = vpack.c.b16 %v2119, %v2117
      %v2282 = vpack.c.b16 %v2120, %v2118
      %v2283 = vpack.c.b16 %v2123, %v2121
      %v2284 = vpack.c.b16 %v2124, %v2122
      %v2285 = vpack.c.b16 %v2127, %v2125
      %v2286 = vpack.c.b16 %v2128, %v2126
      %v2287 = vpack.c.b16 %v2131, %v2129
      %v2288 = vpack.c.b16 %v2132, %v2130
      %v2289 = vpack.c.b16 %v2135, %v2133
      %v2290 = vpack.c.b16 %v2136, %v2134
      %v2291 = vpack.c.b16 %v2139, %v2137
      %v2292 = vpack.c.b16 %v2140, %v2138
      %v2293 = vpack.c.b16 %v2143, %v2141
      %v2294 = vpack.c.b16 %v2144, %v2142
      %v2295 = vpack.c.b16 %v2147, %v2145
      %v2296 = vpack.c.b16 %v2148, %v2146
      %v2297 = vpack.c.b16 %v2151, %v2149
      %v2298 = vpack.c.b16 %v2152, %v2150
      %v2299 = vpack.c.b16 %v2155, %v2153
      %v2300 = vpack.c.b16 %v2156, %v2154
      %v2301 = vpack.c.b16 %v2159, %v2157
      %v2302 = vpack.c.b16 %v2160, %v2158
      %v2303 = vpack.c.b16 %v2163, %v2161
      %v2304 = vpack.c.b16 %v2164, %v2162
      %v2305 = vpack.c.b16 %v2167, %v2165
      %v2306 = vpack.c.b16 %v2168, %v2166
      %v2307 = vpack.c.b16 %v2171, %v2169
      %v2308 = vpack.c.b16 %v2172, %v2170
      %v2309 = vpack.c.b16 %v2175, %v2173
      %v2310 = vpack.c.b16 %v2176, %v2174
      %v2311 = vpack.c.b16 %v2179, %v2177
      %v2312 = vpack.c.b16 %v2180, %v2178
      %2445 = vmatprep.subr.bf16.mxu0 %v2182
      %2446 = vmatpush1.bf16.msra.mxu0 %v2181
      %2447 = vmatprep.subr.bf16.mxu0 %v2184
      %2448 = vmatpush1.bf16.msra.mxu0 %v2183
      %2449 = vmatprep.subr.bf16.mxu0 %v2186
      %2450 = vmatpush1.bf16.msra.mxu0 %v2185
      %2451 = vmatprep.subr.bf16.mxu0 %v2188
      %2452 = vmatpush1.bf16.msra.mxu0 %v2187
      %2453 = vmatprep.subr.bf16.mxu0 %v2190
      %2454 = vmatpush1.bf16.msra.mxu0 %v2189
      %2455 = vmatprep.subr.bf16.mxu0 %v2192
      %2456 = vmatpush1.bf16.msra.mxu0 %v2191
      %2457 = vmatprep.subr.bf16.mxu0 %v2194
      %2458 = vmatpush1.bf16.msra.mxu0 %v2193
      %2459 = vmatprep.subr.bf16.mxu0 %v2196
      %2460 = vmatpush1.bf16.msra.mxu0 %v2195
      %2461 = vmatprep.subr.bf16.mxu0 %v2198
      %2462 = vmatpush1.bf16.msra.mxu0 %v2197
      %2463 = vmatprep.subr.bf16.mxu0 %v2200
      %2464 = vmatpush1.bf16.msra.mxu0 %v2199
      %2465 = vmatprep.subr.bf16.mxu0 %v2202
      %2466 = vmatpush1.bf16.msra.mxu0 %v2201
      %2467 = vmatprep.subr.bf16.mxu0 %v2204
      %2468 = vmatpush1.bf16.msra.mxu0 %v2203
      %2469 = vmatprep.subr.bf16.mxu0 %v2206
      %2470 = vmatpush1.bf16.msra.mxu0 %v2205
      %2471 = vmatprep.subr.bf16.mxu0 %v2208
      %2472 = vmatpush1.bf16.msra.mxu0 %v2207
      %2473 = vmatprep.subr.bf16.mxu0 %v2210
      %2474 = vmatpush1.bf16.msra.mxu0 %v2209
      %2475 = vmatprep.subr.bf16.mxu0 %v2212
      %2476 = vmatpush1.bf16.msra.mxu0 %v2211
      %2477 = vmatprep.mubr.bf16.mxu0 %v522
      %2478 = vmatmul.mubr.bf16.gmra.mrb[0].mxu0 %v521
      %v2479 = vpop.f32.mrb[0].mxu0
      %v2480 = vadd.f32 %v1778, %v2479
      %v2481 = vpop.f32.mrb[0].mxu0
      %v2482 = vadd.f32 %v1782, %v2481
      %v2483 = vpop.f32.mrb[0].mxu0
      %v2484 = vadd.f32 %v1778, %v2483
      %v2485 = vpop.f32.mrb[0].mxu0
      %v2486 = vadd.f32 %v1782, %v2485
      %2487 = vmatprep.mubr.bf16.mxu0 %v531
      %2488 = vmatmul.mubr.bf16.gmra.mrb[0].mxu0 %v530
      %v2489 = vpop.f32.mrb[0].mxu0
      %v2490 = vadd.f32 %v1778, %v2489
      %v2491 = vpop.f32.mrb[0].mxu0
      %v2492 = vadd.f32 %v1782, %v2491
      %v2493 = vpop.f32.mrb[0].mxu0
      %v2494 = vadd.f32 %v1778, %v2493
      %v2495 = vpop.f32.mrb[0].mxu0
      %v2496 = vadd.f32 %v1782, %v2495
      %2497 = vdwg.mxu0
      %2498 = vmatprep.subr.bf16.mxu0 %v2214
      %2499 = vmatpush1.bf16.msra.mxu0 %v2213
      %2500 = vmatprep.subr.bf16.mxu0 %v2216
      %2501 = vmatpush1.bf16.msra.mxu0 %v2215
      %2502 = vmatprep.subr.bf16.mxu0 %v2218
      %2503 = vmatpush1.bf16.msra.mxu0 %v2217
      %2504 = vmatprep.subr.bf16.mxu0 %v2220
      %2505 = vmatpush1.bf16.msra.mxu0 %v2219
      %2506 = vmatprep.subr.bf16.mxu0 %v2222
      %2507 = vmatpush1.bf16.msra.mxu0 %v2221
      %2508 = vmatprep.subr.bf16.mxu0 %v2224
      %2509 = vmatpush1.bf16.msra.mxu0 %v2223
      %2510 = vmatprep.subr.bf16.mxu0 %v2226
      %2511 = vmatpush1.bf16.msra.mxu0 %v2225
      %2512 = vmatprep.subr.bf16.mxu0 %v2228
      %2513 = vmatpush1.bf16.msra.mxu0 %v2227
      %2514 = vmatprep.subr.bf16.mxu0 %v2230
      %2515 = vmatpush1.bf16.msra.mxu0 %v2229
      %2516 = vmatprep.subr.bf16.mxu0 %v2232
      %2517 = vmatpush1.bf16.msra.mxu0 %v2231
      %2518 = vmatprep.subr.bf16.mxu0 %v2234
      %2519 = vmatpush1.bf16.msra.mxu0 %v2233
      %2520 = vmatprep.subr.bf16.mxu0 %v2236
      %2521 = vmatpush1.bf16.msra.mxu0 %v2235
      %2522 = vmatprep.subr.bf16.mxu0 %v2238
      %2523 = vmatpush1.bf16.msra.mxu0 %v2237
      %2524 = vmatprep.subr.bf16.mxu0 %v2240
      %2525 = vmatpush1.bf16.msra.mxu0 %v2239
      %2526 = vmatprep.subr.bf16.mxu0 %v2242
      %2527 = vmatpush1.bf16.msra.mxu0 %v2241
      %2528 = vmatprep.subr.bf16.mxu0 %v2244
      %2529 = vmatpush1.bf16.msra.mxu0 %v2243
      %2530 = vmatprep.mubr.bf16.mxu0 %v524
      %2531 = vmatmul.mubr.bf16.gmra.mrb[0].mxu0 %v523
      %v2532 = vpop.f32.mrb[0].mxu0
      %v2533 = vadd.f32 %v2480, %v2532
      %v2534 = vpop.f32.mrb[0].mxu0
      %v2535 = vadd.f32 %v2482, %v2534
      %v2536 = vpop.f32.mrb[0].mxu0
      %v2537 = vadd.f32 %v2484, %v2536
      %v2538 = vpop.f32.mrb[0].mxu0
      %v2539 = vadd.f32 %v2486, %v2538
      %2540 = vmatprep.mubr.bf16.mxu0 %v533
      %2541 = vmatmul.mubr.bf16.gmra.mrb[0].mxu0 %v532
      %v2542 = vpop.f32.mrb[0].mxu0
      %v2543 = vadd.f32 %v2490, %v2542
      %v2544 = vpop.f32.mrb[0].mxu0
      %v2545 = vadd.f32 %v2492, %v2544
      %v2546 = vpop.f32.mrb[0].mxu0
      %v2547 = vadd.f32 %v2494, %v2546
      %v2548 = vpop.f32.mrb[0].mxu0
      %v2549 = vadd.f32 %v2496, %v2548
      %2550 = vdwg.mxu0
      %2551 = vmatprep.subr.bf16.mxu0 %v2246
      %2552 = vmatpush1.bf16.msra.mxu0 %v2245
      %2553 = vmatprep.subr.bf16.mxu0 %v2248
      %2554 = vmatpush1.bf16.msra.mxu0 %v2247
      %2555 = vmatprep.subr.bf16.mxu0 %v2250
      %2556 = vmatpush1.bf16.msra.mxu0 %v2249
      %2557 = vmatprep.subr.bf16.mxu0 %v2252
      %2558 = vmatpush1.bf16.msra.mxu0 %v2251
      %2559 = vmatprep.subr.bf16.mxu0 %v2254
      %2560 = vmatpush1.bf16.msra.mxu0 %v2253
      %2561 = vmatprep.subr.bf16.mxu0 %v2256
      %2562 = vmatpush1.bf16.msra.mxu0 %v2255
      %2563 = vmatprep.subr.bf16.mxu0 %v2258
      %2564 = vmatpush1.bf16.msra.mxu0 %v2257
      %2565 = vmatprep.subr.bf16.mxu0 %v2260
      %2566 = vmatpush1.bf16.msra.mxu0 %v2259
      %2567 = vmatprep.subr.bf16.mxu0 %v2262
      %2568 = vmatpush1.bf16.msra.mxu0 %v2261
      %2569 = vmatprep.subr.bf16.mxu0 %v2264
      %2570 = vmatpush1.bf16.msra.mxu0 %v2263
      %2571 = vmatprep.subr.bf16.mxu0 %v2266
      %2572 = vmatpush1.bf16.msra.mxu0 %v2265
      %2573 = vmatprep.subr.bf16.mxu0 %v2268
      %2574 = vmatpush1.bf16.msra.mxu0 %v2267
      %2575 = vmatprep.subr.bf16.mxu0 %v2270
      %2576 = vmatpush1.bf16.msra.mxu0 %v2269
      %2577 = vmatprep.subr.bf16.mxu0 %v2272
      %2578 = vmatpush1.bf16.msra.mxu0 %v2271
      %2579 = vmatprep.subr.bf16.mxu0 %v2274
      %2580 = vmatpush1.bf16.msra.mxu0 %v2273
      %2581 = vmatprep.subr.bf16.mxu0 %v2276
      %2582 = vmatpush1.bf16.msra.mxu0 %v2275
      %2583 = vmatprep.mubr.bf16.mxu0 %v526
      %2584 = vmatmul.mubr.bf16.gmra.mrb[0].mxu0 %v525
      %v2585 = vpop.f32.mrb[0].mxu0
      %v2586 = vadd.f32 %v2533, %v2585
      %v2587 = vpop.f32.mrb[0].mxu0
      %v2588 = vadd.f32 %v2535, %v2587
      %v2589 = vpop.f32.mrb[0].mxu0
      %v2590 = vadd.f32 %v2537, %v2589
      %v2591 = vpop.f32.mrb[0].mxu0
      %v2592 = vadd.f32 %v2539, %v2591
      %2593 = vmatprep.mubr.bf16.mxu0 %v535
      %2594 = vmatmul.mubr.bf16.gmra.mrb[0].mxu0 %v534
      %v2595 = vpop.f32.mrb[0].mxu0
      %v2596 = vadd.f32 %v2543, %v2595
      %v2597 = vpop.f32.mrb[0].mxu0
      %v2598 = vadd.f32 %v2545, %v2597
      %v2599 = vpop.f32.mrb[0].mxu0
      %v2600 = vadd.f32 %v2547, %v2599
      %v2601 = vpop.f32.mrb[0].mxu0
      %v2602 = vadd.f32 %v2549, %v2601
      %2603 = vdwg.mxu0
      %2604 = vmatprep.subr.bf16.mxu0 %v2278
      %2605 = vmatpush1.bf16.msra.mxu0 %v2277
      %2606 = vmatprep.subr.bf16.mxu0 %v2280
      %2607 = vmatpush1.bf16.msra.mxu0 %v2279
      %2608 = vmatprep.subr.bf16.mxu0 %v2282
      %2609 = vmatpush1.bf16.msra.mxu0 %v2281
      %2610 = vmatprep.subr.bf16.mxu0 %v2284
      %2611 = vmatpush1.bf16.msra.mxu0 %v2283
      %2612 = vmatprep.subr.bf16.mxu0 %v2286
      %2613 = vmatpush1.bf16.msra.mxu0 %v2285
      %2614 = vmatprep.subr.bf16.mxu0 %v2288
      %2615 = vmatpush1.bf16.msra.mxu0 %v2287
      %2616 = vmatprep.subr.bf16.mxu0 %v2290
      %2617 = vmatpush1.bf16.msra.mxu0 %v2289
      %2618 = vmatprep.subr.bf16.mxu0 %v2292
      %2619 = vmatpush1.bf16.msra.mxu0 %v2291
      %2620 = vmatprep.subr.bf16.mxu0 %v2294
      %2621 = vmatpush1.bf16.msra.mxu0 %v2293
      %2622 = vmatprep.subr.bf16.mxu0 %v2296
      %2623 = vmatpush1.bf16.msra.mxu0 %v2295
      %2624 = vmatprep.subr.bf16.mxu0 %v2298
      %2625 = vmatpush1.bf16.msra.mxu0 %v2297
      %2626 = vmatprep.subr.bf16.mxu0 %v2300
      %2627 = vmatpush1.bf16.msra.mxu0 %v2299
      %2628 = vmatprep.subr.bf16.mxu0 %v2302
      %2629 = vmatpush1.bf16.msra.mxu0 %v2301
      %2630 = vmatprep.subr.bf16.mxu0 %v2304
      %2631 = vmatpush1.bf16.msra.mxu0 %v2303
      %2632 = vmatprep.subr.bf16.mxu0 %v2306
      %2633 = vmatpush1.bf16.msra.mxu0 %v2305
      %2634 = vmatprep.subr.bf16.mxu0 %v2308
      %2635 = vmatpush1.bf16.msra.mxu0 %v2307
      %2636 = vmatprep.mubr.bf16.mxu0 %v528
      %2637 = vmatmul.mubr.bf16.gmra.mrb[0].mxu0 %v527
      %v2638 = vpop.f32.mrb[0].mxu0
      %v2639 = vadd.f32 %v2586, %v2638
      %v2640 = vpop.f32.mrb[0].mxu0
      %v2641 = vadd.f32 %v2588, %v2640
      %v2642 = vpop.f32.mrb[0].mxu0
      %v2643 = vadd.f32 %v2590, %v2642
      %v2644 = vpop.f32.mrb[0].mxu0
      %v2645 = vadd.f32 %v2592, %v2644
      %2646 = vmatprep.mubr.bf16.mxu0 %v537
      %2647 = vmatmul.mubr.bf16.gmra.mrb[0].mxu0 %v536
      %v2648 = vpop.f32.mrb[0].mxu0
      %v2649 = vadd.f32 %v2596, %v2648
      %v2650 = vpop.f32.mrb[0].mxu0
      %v2651 = vadd.f32 %v2598, %v2650
      %v2652 = vpop.f32.mrb[0].mxu0
      %v2653 = vadd.f32 %v2600, %v2652
      %v2654 = vpop.f32.mrb[0].mxu0
      %v2655 = vadd.f32 %v2602, %v2654
      %2656 = vdwg.mxu0
      %2657 = vmatprep.subr.bf16.mxu0 %v2310
      %2658 = vmatpush1.bf16.msra.mxu0 %v2309
      %2659 = vmatprep.subr.bf16.mxu0 %v2312
      %2660 = vmatpush1.bf16.msra.mxu0 %v2311
      %2661 = vmatprep.subr.bf16.mxu0 0
      %2662 = vmatpush1.bf16.msra.mxu0 0
      %2663 = vmatprep.subr.bf16.mxu0 0
      %2664 = vmatpush1.bf16.msra.mxu0 0
      %2665 = vmatprep.subr.bf16.mxu0 0
      %2666 = vmatpush1.bf16.msra.mxu0 0
      %2667 = vmatprep.subr.bf16.mxu0 0
      %2668 = vmatpush1.bf16.msra.mxu0 0
      %2669 = vmatprep.subr.bf16.mxu0 0
      %2670 = vmatpush1.bf16.msra.mxu0 0
      %2671 = vmatprep.subr.bf16.mxu0 0
      %2672 = vmatpush1.bf16.msra.mxu0 0
      %2673 = vmatprep.subr.bf16.mxu0 0
      %2674 = vmatpush1.bf16.msra.mxu0 0
      %2675 = vmatprep.subr.bf16.mxu0 0
      %2676 = vmatpush1.bf16.msra.mxu0 0
      %2677 = vmatprep.subr.bf16.mxu0 0
      %2678 = vmatpush1.bf16.msra.mxu0 0
      %2679 = vmatprep.subr.bf16.mxu0 0
      %2680 = vmatpush1.bf16.msra.mxu0 0
      %2681 = vmatprep.subr.bf16.mxu0 0
      %2682 = vmatpush1.bf16.msra.mxu0 0
      %2683 = vmatprep.subr.bf16.mxu0 0
      %2684 = vmatpush1.bf16.msra.mxu0 0
      %2685 = vmatprep.subr.bf16.mxu0 0
      %2686 = vmatpush1.bf16.msra.mxu0 0
      %2687 = vmatprep.subr.bf16.mxu0 0
      %2688 = vmatpush1.bf16.msra.mxu0 0
      %2689 = vmatprep.mubr.bf16.mxu0 0
      %2690 = vmatmul.mubr.bf16.gmra.mrb[0].mxu0 %v1217
      %v2691 = vpop.f32.mrb[0].mxu0
      %v2692 = vadd.f32 %v2639, %v2691
      %v2693 = vpop.f32.mrb[0].mxu0
      %v2694 = vadd.f32 %v2641, %v2693
      %v2695 = vpop.f32.mrb[0].mxu0
      %v2696 = vadd.f32 %v2643, %v2695
      %v2697 = vpop.f32.mrb[0].mxu0
      %v2698 = vadd.f32 %v2645, %v2697
      %2699 = vmatprep.mubr.bf16.mxu0 0
      %2700 = vmatmul.mubr.bf16.gmra.mrb[0].mxu0 %v1220
      %v2701 = vpop.f32.mrb[0].mxu0
      %v2702 = vadd.f32 %v2649, %v2701
      %v2703 = vpop.f32.mrb[0].mxu0
      %v2704 = vadd.f32 %v2651, %v2703
      %v2705 = vpop.f32.mrb[0].mxu0
      %v2706 = vadd.f32 %v2653, %v2705
      %v2707 = vpop.f32.mrb[0].mxu0
      %v2708 = vadd.f32 %v2655, %v2707
      %2709 = vdwg.mxu0
      %vm2710 = vcmp.ge.f32.partialorder %v2692, 0.0
      %vm2711 = vcmp.ge.f32.partialorder %v2694, 0.0
      %vm2712 = vcmp.ge.f32.partialorder %v2696, 0.0
      %vm2713 = vcmp.ge.f32.partialorder %v2698, 0.0
      %vm2714 = vcmp.ge.f32.partialorder %v2702, 0.0
      %vm2715 = vcmp.ge.f32.partialorder %v2704, 0.0
      %vm2716 = vcmp.ge.f32.partialorder %v2706, 0.0
      %vm2717 = vcmp.ge.f32.partialorder %v2708, 0.0
      %v2718 = vmul.f32 %v1495, %v2692
      %v2719 = vmul.f32 %v1495, %v2694
      %v2720 = vmul.f32 %v1495, %v2696
      %v2721 = vmul.f32 %v1495, %v2698
      %v2722 = vmul.f32 %v1495, %v2702
      %v2723 = vmul.f32 %v1495, %v2704
      %v2724 = vmul.f32 %v1495, %v2706
      %v2725 = vmul.f32 %v1495, %v2708
      %v2726 = vsel %vm2710, %v2692, %v2718
      %v2727 = vsel %vm2711, %v2694, %v2719
      %v2728 = vsel %vm2712, %v2696, %v2720
      %v2729 = vsel %vm2713, %v2698, %v2721
      %v2730 = vsel %vm2714, %v2702, %v2722
      %v2731 = vsel %vm2715, %v2704, %v2723
      %v2732 = vsel %vm2716, %v2706, %v2724
      %v2733 = vsel %vm2717, %v2708, %v2725
      %v2734 = vsel %vm1512, %v2727, 0.0
      %v2735 = vadd.f32 %v2726, %v2734
      %2736 = vadd.xlane.f32.xlu0 %v2735
      %v2737 = vpop.xlane.xlu0 %2736
      %v2738 = vsel %vm1512, %v2729, 0.0
      %v2739 = vadd.f32 %v2728, %v2738
      %2740 = vadd.xlane.f32.xlu0 %v2739
      %v2741 = vpop.xlane.xlu0 %2740
      %v2742 = vsel %vm1512, %v2731, 0.0
      %v2743 = vadd.f32 %v2730, %v2742
      %2744 = vadd.xlane.f32.xlu0 %v2743
      %v2745 = vpop.xlane.xlu0 %2744
      %v2746 = vsel %vm1512, %v2733, 0.0
      %v2747 = vadd.f32 %v2732, %v2746
      %2748 = vadd.xlane.f32.xlu0 %v2747
      %v2749 = vpop.xlane.xlu0 %2748
      %v2750 = vmul.f32 %v2737, 0.007575758
      %v2751 = vmul.f32 %v2741, 0.007575758
      %v2752 = vmul.f32 %v2745, 0.007575758
      %v2753 = vmul.f32 %v2749, 0.007575758
      %v2754 = vmul.f32 %v2726, %v2726
      %v2755 = vmul.f32 %v2727, %v2727
      %v2756 = vmul.f32 %v2728, %v2728
      %v2757 = vmul.f32 %v2729, %v2729
      %v2758 = vmul.f32 %v2730, %v2730
      %v2759 = vmul.f32 %v2731, %v2731
      %v2760 = vmul.f32 %v2732, %v2732
      %v2761 = vmul.f32 %v2733, %v2733
      %v2762 = vsel %vm1512, %v2755, 0.0
      %v2763 = vadd.f32 %v2754, %v2762
      %2764 = vadd.xlane.f32.xlu0 %v2763
      %v2765 = vpop.xlane.xlu0 %2764
      %v2766 = vsel %vm1512, %v2757, 0.0
      %v2767 = vadd.f32 %v2756, %v2766
      %2768 = vadd.xlane.f32.xlu0 %v2767
      %v2769 = vpop.xlane.xlu0 %2768
      %v2770 = vsel %vm1512, %v2759, 0.0
      %v2771 = vadd.f32 %v2758, %v2770
      %2772 = vadd.xlane.f32.xlu0 %v2771
      %v2773 = vpop.xlane.xlu0 %2772
      %v2774 = vsel %vm1512, %v2761, 0.0
      %v2775 = vadd.f32 %v2760, %v2774
      %2776 = vadd.xlane.f32.xlu0 %v2775
      %v2777 = vpop.xlane.xlu0 %2776
      %v2778 = vmul.f32 %v2765, 0.007575758
      %v2779 = vmul.f32 %v2769, 0.007575758
      %v2780 = vmul.f32 %v2773, 0.007575758
      %v2781 = vmul.f32 %v2777, 0.007575758
      %v2782 = vmul.f32 %v2750, %v2750
      %v2783 = vmul.f32 %v2751, %v2751
      %v2784 = vmul.f32 %v2752, %v2752
      %v2785 = vmul.f32 %v2753, %v2753
      %v2786 = vsub.f32 %v2778, %v2782
      %v2787 = vsub.f32 %v2779, %v2783
      %v2788 = vsub.f32 %v2780, %v2784
      %v2789 = vsub.f32 %v2781, %v2785
      %v2790 = vadd.f32 %v2786, 1e-05
      %v2791 = vadd.f32 %v2787, 1e-05
      %v2792 = vadd.f32 %v2788, 1e-05
      %v2793 = vadd.f32 %v2789, 1e-05
      %v2794 = vrsqrt.pop %v2790
      %v2795 = vrsqrt.pop %v2791
      %v2796 = vrsqrt.pop %v2792
      %v2797 = vrsqrt.pop %v2793
      %v2798 = vsub.f32 %v2726, %v2750
      %v2799 = vsub.f32 %v2727, %v2750
      %v2800 = vsub.f32 %v2728, %v2751
      %v2801 = vsub.f32 %v2729, %v2751
      %v2802 = vsub.f32 %v2730, %v2752
      %v2803 = vsub.f32 %v2731, %v2752
      %v2804 = vsub.f32 %v2732, %v2753
      %v2805 = vsub.f32 %v2733, %v2753
      %v2806 = vmul.f32 %v2798, %v2794
      %v2807 = vmul.f32 %v2799, %v2794
      %v2808 = vmul.f32 %v2800, %v2795
      %v2809 = vmul.f32 %v2801, %v2795
      %v2810 = vmul.f32 %v2802, %v2796
      %v2811 = vmul.f32 %v2803, %v2796
      %v2812 = vmul.f32 %v2804, %v2797
      %v2813 = vmul.f32 %v2805, %v2797
      %v2814 = vmul.f32 %v2806, %v1597
      %v2815 = vmul.f32 %v2807, %v1601
      %v2816 = vmul.f32 %v2808, %v1597
      %v2817 = vmul.f32 %v2809, %v1601
      %v2818 = vmul.f32 %v2810, %v1597
      %v2819 = vmul.f32 %v2811, %v1601
      %v2820 = vmul.f32 %v2812, %v1597
      %v2821 = vmul.f32 %v2813, %v1601
      %v2822 = vadd.f32 %v2814, %v1616
      %v2823 = vadd.f32 %v2815, %v1620
      %v2824 = vadd.f32 %v2816, %v1616
      %v2825 = vadd.f32 %v2817, %v1620
      %v2826 = vadd.f32 %v2818, %v1616
      %v2827 = vadd.f32 %v2819, %v1620
      %v2828 = vadd.f32 %v2820, %v1616
      %v2829 = vadd.f32 %v2821, %v1620
      %s2830 = scalar_lea.vmem %s295, 64
      %2831 = vst [vmem:[%s2830] sm:$0xff] %v2822
      %2832 = vst.msk [vmem:[%s2830 + $0x8] sm:$0xff] %vm1512, %v2823
      %2833 = vst [vmem:[%s2830 + $0x10] sm:$0xff] %v2824
      %2834 = vst.msk [vmem:[%s2830 + $0x18] sm:$0xff] %vm1512, %v2825
      %2835 = vst [vmem:[%s2830 + $0x20] sm:$0xff] %v2826
      %2836 = vst.msk [vmem:[%s2830 + $0x28] sm:$0xff] %vm1512, %v2827
      %2837 = vst [vmem:[%s2830 + $0x30] sm:$0xff] %v2828
      %2838 = vst.msk [vmem:[%s2830 + $0x38] sm:$0xff] %vm1512, %v2829
      %s2839 = scalar_lea.vmem %s1, 2112
      %v2840 = vld [vmem:[%s2839] sm:$0xff]
      %v2841 = vld [vmem:[%s2839 + $0x8] sm:$0xff]
      %v2842 = vld [vmem:[%s2839 + $0x10] sm:$0xff]
      %v2843 = vld [vmem:[%s2839 + $0x18] sm:$0xff]
      %v2844 = vld [vmem:[%s2839 + $0x20] sm:$0xff]
      %v2845 = vld [vmem:[%s2839 + $0x28] sm:$0xff]
      %v2846 = vld [vmem:[%s2839 + $0x30] sm:$0xff]
      %v2847 = vld [vmem:[%s2839 + $0x38] sm:$0xff]
      %v2848 = vld [vmem:[%s2839 + $0x40] sm:$0xff]
      %v2849 = vld [vmem:[%s2839 + $0x48] sm:$0xff]
      %v2850 = vld [vmem:[%s2839 + $0x50] sm:$0xff]
      %v2851 = vld [vmem:[%s2839 + $0x58] sm:$0xff]
      %v2852 = vld [vmem:[%s2839 + $0x60] sm:$0xff]
      %v2853 = vld [vmem:[%s2839 + $0x68] sm:$0xff]
      %v2854 = vld [vmem:[%s2839 + $0x70] sm:$0xff]
      %v2855 = vld [vmem:[%s2839 + $0x78] sm:$0xff]
      %v2856 = vld [vmem:[%s2839 + $0x80] sm:$0xff]
      %v2857 = vld [vmem:[%s2839 + $0x88] sm:$0xff]
      %v2858 = vld [vmem:[%s2839 + $0x90] sm:$0xff]
      %v2859 = vld [vmem:[%s2839 + $0x98] sm:$0xff]
      %v2860 = vld [vmem:[%s2839 + $0xa0] sm:$0xff]
      %v2861 = vld [vmem:[%s2839 + $0xa8] sm:$0xff]
      %v2862 = vld [vmem:[%s2839 + $0xb0] sm:$0xff]
      %v2863 = vld [vmem:[%s2839 + $0xb8] sm:$0xff]
      %v2864 = vld [vmem:[%s2839 + $0xc0] sm:$0xff]
      %v2865 = vld [vmem:[%s2839 + $0xc8] sm:$0xff]
      %v2866 = vld [vmem:[%s2839 + $0xd0] sm:$0xff]
      %v2867 = vld [vmem:[%s2839 + $0xd8] sm:$0xff]
      %v2868 = vld [vmem:[%s2839 + $0xe0] sm:$0xff]
      %v2869 = vld [vmem:[%s2839 + $0xe8] sm:$0xff]
      %v2870 = vld [vmem:[%s2839 + $0xf0] sm:$0xff]
      %v2871 = vld [vmem:[%s2839 + $0xf8] sm:$0xff]
      %v2872 = vld [vmem:[%s2839 + $0x100] sm:$0xff]
      %v2873 = vld [vmem:[%s2839 + $0x108] sm:$0xff]
      %v2874 = vld [vmem:[%s2839 + $0x110] sm:$0xff]
      %v2875 = vld [vmem:[%s2839 + $0x118] sm:$0xff]
      %v2876 = vld [vmem:[%s2839 + $0x120] sm:$0xff]
      %v2877 = vld [vmem:[%s2839 + $0x128] sm:$0xff]
      %v2878 = vld [vmem:[%s2839 + $0x130] sm:$0xff]
      %v2879 = vld [vmem:[%s2839 + $0x138] sm:$0xff]
      %v2880 = vld [vmem:[%s2839 + $0x140] sm:$0xff]
      %v2881 = vld [vmem:[%s2839 + $0x148] sm:$0xff]
      %v2882 = vld [vmem:[%s2839 + $0x150] sm:$0xff]
      %v2883 = vld [vmem:[%s2839 + $0x158] sm:$0xff]
      %v2884 = vld [vmem:[%s2839 + $0x160] sm:$0xff]
      %v2885 = vld [vmem:[%s2839 + $0x168] sm:$0xff]
      %v2886 = vld [vmem:[%s2839 + $0x170] sm:$0xff]
      %v2887 = vld [vmem:[%s2839 + $0x178] sm:$0xff]
      %v2888 = vld [vmem:[%s2839 + $0x180] sm:$0xff]
      %v2889 = vld [vmem:[%s2839 + $0x188] sm:$0xff]
      %v2890 = vld [vmem:[%s2839 + $0x190] sm:$0xff]
      %v2891 = vld [vmem:[%s2839 + $0x198] sm:$0xff]
      %v2892 = vld [vmem:[%s2839 + $0x1a0] sm:$0xff]
      %v2893 = vld [vmem:[%s2839 + $0x1a8] sm:$0xff]
      %v2894 = vld [vmem:[%s2839 + $0x1b0] sm:$0xff]
      %v2895 = vld [vmem:[%s2839 + $0x1b8] sm:$0xff]
      %v2896 = vld [vmem:[%s2839 + $0x1c0] sm:$0xff]
      %v2897 = vld [vmem:[%s2839 + $0x1c8] sm:$0xff]
      %v2898 = vld [vmem:[%s2839 + $0x1d0] sm:$0xff]
      %v2899 = vld [vmem:[%s2839 + $0x1d8] sm:$0xff]
      %v2900 = vld [vmem:[%s2839 + $0x1e0] sm:$0xff]
      %v2901 = vld [vmem:[%s2839 + $0x1e8] sm:$0xff]
      %v2902 = vld [vmem:[%s2839 + $0x1f0] sm:$0xff]
      %v2903 = vld [vmem:[%s2839 + $0x1f8] sm:$0xff]
      %v2904 = vld [vmem:[%s2839 + $0x200] sm:$0xff]
      %v2905 = vld [vmem:[%s2839 + $0x208] sm:$0xff]
      %v2906 = vld [vmem:[%s2839 + $0x210] sm:$0xff]
      %v2907 = vld [vmem:[%s2839 + $0x218] sm:$0xff]
      %v2908 = vld [vmem:[%s2839 + $0x220] sm:$0xff]
      %v2909 = vld [vmem:[%s2839 + $0x228] sm:$0xff]
      %v2910 = vld [vmem:[%s2839 + $0x230] sm:$0xff]
      %v2911 = vld [vmem:[%s2839 + $0x238] sm:$0xff]
      %v2912 = vld [vmem:[%s2839 + $0x240] sm:$0xff]
      %v2913 = vld [vmem:[%s2839 + $0x248] sm:$0xff]
      %v2914 = vld [vmem:[%s2839 + $0x250] sm:$0xff]
      %v2915 = vld [vmem:[%s2839 + $0x258] sm:$0xff]
      %v2916 = vld [vmem:[%s2839 + $0x260] sm:$0xff]
      %v2917 = vld [vmem:[%s2839 + $0x268] sm:$0xff]
      %v2918 = vld [vmem:[%s2839 + $0x270] sm:$0xff]
      %v2919 = vld [vmem:[%s2839 + $0x278] sm:$0xff]
      %v2920 = vld [vmem:[%s2839 + $0x280] sm:$0xff]
      %v2921 = vld [vmem:[%s2839 + $0x288] sm:$0xff]
      %v2922 = vld [vmem:[%s2839 + $0x290] sm:$0xff]
      %v2923 = vld [vmem:[%s2839 + $0x298] sm:$0xff]
      %v2924 = vld [vmem:[%s2839 + $0x2a0] sm:$0xff]
      %v2925 = vld [vmem:[%s2839 + $0x2a8] sm:$0xff]
      %v2926 = vld [vmem:[%s2839 + $0x2b0] sm:$0xff]
      %v2927 = vld [vmem:[%s2839 + $0x2b8] sm:$0xff]
      %v2928 = vld [vmem:[%s2839 + $0x2c0] sm:$0xff]
      %v2929 = vld [vmem:[%s2839 + $0x2c8] sm:$0xff]
      %v2930 = vld [vmem:[%s2839 + $0x2d0] sm:$0xff]
      %v2931 = vld [vmem:[%s2839 + $0x2d8] sm:$0xff]
      %v2932 = vld [vmem:[%s2839 + $0x2e0] sm:$0xff]
      %v2933 = vld [vmem:[%s2839 + $0x2e8] sm:$0xff]
      %v2934 = vld [vmem:[%s2839 + $0x2f0] sm:$0xff]
      %v2935 = vld [vmem:[%s2839 + $0x2f8] sm:$0xff]
      %v2936 = vld [vmem:[%s2839 + $0x300] sm:$0xff]
      %v2937 = vld [vmem:[%s2839 + $0x308] sm:$0xff]
      %v2938 = vld [vmem:[%s2839 + $0x310] sm:$0xff]
      %v2939 = vld [vmem:[%s2839 + $0x318] sm:$0xff]
      %v2940 = vld [vmem:[%s2839 + $0x320] sm:$0xff]
      %v2941 = vld [vmem:[%s2839 + $0x328] sm:$0xff]
      %v2942 = vld [vmem:[%s2839 + $0x330] sm:$0xff]
      %v2943 = vld [vmem:[%s2839 + $0x338] sm:$0xff]
      %v2944 = vld [vmem:[%s2839 + $0x340] sm:$0xff]
      %v2945 = vld [vmem:[%s2839 + $0x348] sm:$0xff]
      %v2946 = vld [vmem:[%s2839 + $0x350] sm:$0xff]
      %v2947 = vld [vmem:[%s2839 + $0x358] sm:$0xff]
      %v2948 = vld [vmem:[%s2839 + $0x360] sm:$0xff]
      %v2949 = vld [vmem:[%s2839 + $0x368] sm:$0xff]
      %v2950 = vld [vmem:[%s2839 + $0x370] sm:$0xff]
      %v2951 = vld [vmem:[%s2839 + $0x378] sm:$0xff]
      %v2952 = vld [vmem:[%s2839 + $0x380] sm:$0xff]
      %v2953 = vld [vmem:[%s2839 + $0x388] sm:$0xff]
      %v2954 = vld [vmem:[%s2839 + $0x390] sm:$0xff]
      %v2955 = vld [vmem:[%s2839 + $0x398] sm:$0xff]
      %v2956 = vld [vmem:[%s2839 + $0x3a0] sm:$0xff]
      %v2957 = vld [vmem:[%s2839 + $0x3a8] sm:$0xff]
      %v2958 = vld [vmem:[%s2839 + $0x3b0] sm:$0xff]
      %v2959 = vld [vmem:[%s2839 + $0x3b8] sm:$0xff]
      %v2960 = vld [vmem:[%s2839 + $0x3c0] sm:$0xff]
      %v2961 = vld [vmem:[%s2839 + $0x3c8] sm:$0xff]
      %v2962 = vld [vmem:[%s2839 + $0x3d0] sm:$0xff]
      %v2963 = vld [vmem:[%s2839 + $0x3d8] sm:$0xff]
      %v2964 = vld [vmem:[%s2839 + $0x3e0] sm:$0xff]
      %v2965 = vld [vmem:[%s2839 + $0x3e8] sm:$0xff]
      %v2966 = vld [vmem:[%s2839 + $0x3f0] sm:$0xff]
      %v2967 = vld [vmem:[%s2839 + $0x3f8] sm:$0xff]
      %v2968 = vld [vmem:[%s2839 + $0x400] sm:$0xff]
      %v2969 = vld [vmem:[%s2839 + $0x408] sm:$0xff]
      %v2970 = vld [vmem:[%s2839 + $0x410] sm:$0xff]
      %v2971 = vld [vmem:[%s2839 + $0x418] sm:$0xff]
      %s2972 = scalar_lea.vmem %s2, 4
      %v2973 = vld [vmem:[%s2972] sm:$0x3]
      %v2975 = vlaneseq
      %v2976 = vshrl.u32 %v2975, 7
      %v2977 = vsub.s32 0, %v2976
      %v2978 = vrot.slane %v2973, %v2977
      %v2979 = vlaneseq
      %v2980 = vshrl.u32 %v2979, 7
      %v2981 = vsub.s32 1, %v2980
      %v2982 = vrot.slane %v2973, %v2981
      %v3117 = vunpack.c.l.b16 %v2840
      %v3118 = vunpack.c.h.b16 %v2840
      %v3119 = vunpack.c.l.b16 %v2841
      %v3120 = vunpack.c.h.b16 %v2841
      %v3121 = vunpack.c.l.b16 %v2842
      %v3122 = vunpack.c.h.b16 %v2842
      %v3123 = vunpack.c.l.b16 %v2843
      %v3124 = vunpack.c.h.b16 %v2843
      %v3125 = vunpack.c.l.b16 %v2844
      %v3126 = vunpack.c.h.b16 %v2844
      %v3127 = vunpack.c.l.b16 %v2845
      %v3128 = vunpack.c.h.b16 %v2845
      %v3129 = vunpack.c.l.b16 %v2846
      %v3130 = vunpack.c.h.b16 %v2846
      %v3131 = vunpack.c.l.b16 %v2847
      %v3132 = vunpack.c.h.b16 %v2847
      %v3133 = vunpack.c.l.b16 %v2848
      %v3134 = vunpack.c.h.b16 %v2848
      %v3135 = vunpack.c.l.b16 %v2849
      %v3136 = vunpack.c.h.b16 %v2849
      %v3137 = vunpack.c.l.b16 %v2850
      %v3138 = vunpack.c.h.b16 %v2850
      %v3139 = vunpack.c.l.b16 %v2851
      %v3140 = vunpack.c.h.b16 %v2851
      %v3141 = vunpack.c.l.b16 %v2852
      %v3142 = vunpack.c.h.b16 %v2852
      %v3143 = vunpack.c.l.b16 %v2853
      %v3144 = vunpack.c.h.b16 %v2853
      %v3145 = vunpack.c.l.b16 %v2854
      %v3146 = vunpack.c.h.b16 %v2854
      %v3147 = vunpack.c.l.b16 %v2855
      %v3148 = vunpack.c.h.b16 %v2855
      %v3149 = vunpack.c.l.b16 %v2856
      %v3150 = vunpack.c.h.b16 %v2856
      %v3151 = vunpack.c.l.b16 %v2857
      %v3152 = vunpack.c.h.b16 %v2857
      %v3153 = vunpack.c.l.b16 %v2858
      %v3154 = vunpack.c.h.b16 %v2858
      %v3155 = vunpack.c.l.b16 %v2859
      %v3156 = vunpack.c.h.b16 %v2859
      %v3157 = vunpack.c.l.b16 %v2860
      %v3158 = vunpack.c.h.b16 %v2860
      %v3159 = vunpack.c.l.b16 %v2861
      %v3160 = vunpack.c.h.b16 %v2861
      %v3161 = vunpack.c.l.b16 %v2862
      %v3162 = vunpack.c.h.b16 %v2862
      %v3163 = vunpack.c.l.b16 %v2863
      %v3164 = vunpack.c.h.b16 %v2863
      %v3165 = vunpack.c.l.b16 %v2864
      %v3166 = vunpack.c.h.b16 %v2864
      %v3167 = vunpack.c.l.b16 %v2865
      %v3168 = vunpack.c.h.b16 %v2865
      %v3169 = vunpack.c.l.b16 %v2866
      %v3170 = vunpack.c.h.b16 %v2866
      %v3171 = vunpack.c.l.b16 %v2867
      %v3172 = vunpack.c.h.b16 %v2867
      %v3173 = vunpack.c.l.b16 %v2868
      %v3174 = vunpack.c.h.b16 %v2868
      %v3175 = vunpack.c.l.b16 %v2869
      %v3176 = vunpack.c.h.b16 %v2869
      %v3177 = vunpack.c.l.b16 %v2870
      %v3178 = vunpack.c.h.b16 %v2870
      %v3179 = vunpack.c.l.b16 %v2871
      %v3180 = vunpack.c.h.b16 %v2871
      %v3181 = vunpack.c.l.b16 %v2872
      %v3182 = vunpack.c.h.b16 %v2872
      %v3183 = vunpack.c.l.b16 %v2873
      %v3184 = vunpack.c.h.b16 %v2873
      %v3185 = vunpack.c.l.b16 %v2874
      %v3186 = vunpack.c.h.b16 %v2874
      %v3187 = vunpack.c.l.b16 %v2875
      %v3188 = vunpack.c.h.b16 %v2875
      %v3189 = vunpack.c.l.b16 %v2876
      %v3190 = vunpack.c.h.b16 %v2876
      %v3191 = vunpack.c.l.b16 %v2877
      %v3192 = vunpack.c.h.b16 %v2877
      %v3193 = vunpack.c.l.b16 %v2878
      %v3194 = vunpack.c.h.b16 %v2878
      %v3195 = vunpack.c.l.b16 %v2879
      %v3196 = vunpack.c.h.b16 %v2879
      %v3197 = vunpack.c.l.b16 %v2880
      %v3198 = vunpack.c.h.b16 %v2880
      %v3199 = vunpack.c.l.b16 %v2881
      %v3200 = vunpack.c.h.b16 %v2881
      %v3201 = vunpack.c.l.b16 %v2882
      %v3202 = vunpack.c.h.b16 %v2882
      %v3203 = vunpack.c.l.b16 %v2883
      %v3204 = vunpack.c.h.b16 %v2883
      %v3205 = vunpack.c.l.b16 %v2884
      %v3206 = vunpack.c.h.b16 %v2884
      %v3207 = vunpack.c.l.b16 %v2885
      %v3208 = vunpack.c.h.b16 %v2885
      %v3209 = vunpack.c.l.b16 %v2886
      %v3210 = vunpack.c.h.b16 %v2886
      %v3211 = vunpack.c.l.b16 %v2887
      %v3212 = vunpack.c.h.b16 %v2887
      %v3213 = vunpack.c.l.b16 %v2888
      %v3214 = vunpack.c.h.b16 %v2888
      %v3215 = vunpack.c.l.b16 %v2889
      %v3216 = vunpack.c.h.b16 %v2889
      %v3217 = vunpack.c.l.b16 %v2890
      %v3218 = vunpack.c.h.b16 %v2890
      %v3219 = vunpack.c.l.b16 %v2891
      %v3220 = vunpack.c.h.b16 %v2891
      %v3221 = vunpack.c.l.b16 %v2892
      %v3222 = vunpack.c.h.b16 %v2892
      %v3223 = vunpack.c.l.b16 %v2893
      %v3224 = vunpack.c.h.b16 %v2893
      %v3225 = vunpack.c.l.b16 %v2894
      %v3226 = vunpack.c.h.b16 %v2894
      %v3227 = vunpack.c.l.b16 %v2895
      %v3228 = vunpack.c.h.b16 %v2895
      %v3229 = vunpack.c.l.b16 %v2896
      %v3230 = vunpack.c.h.b16 %v2896
      %v3231 = vunpack.c.l.b16 %v2897
      %v3232 = vunpack.c.h.b16 %v2897
      %v3233 = vunpack.c.l.b16 %v2898
      %v3234 = vunpack.c.h.b16 %v2898
      %v3235 = vunpack.c.l.b16 %v2899
      %v3236 = vunpack.c.h.b16 %v2899
      %v3237 = vunpack.c.l.b16 %v2900
      %v3238 = vunpack.c.h.b16 %v2900
      %v3239 = vunpack.c.l.b16 %v2901
      %v3240 = vunpack.c.h.b16 %v2901
      %v3241 = vunpack.c.l.b16 %v2902
      %v3242 = vunpack.c.h.b16 %v2902
      %v3243 = vunpack.c.l.b16 %v2903
      %v3244 = vunpack.c.h.b16 %v2903
      %v3245 = vunpack.c.l.b16 %v2904
      %v3246 = vunpack.c.h.b16 %v2904
      %v3247 = vunpack.c.l.b16 %v2905
      %v3248 = vunpack.c.h.b16 %v2905
      %v3249 = vunpack.c.l.b16 %v2906
      %v3250 = vunpack.c.h.b16 %v2906
      %v3251 = vunpack.c.l.b16 %v2907
      %v3252 = vunpack.c.h.b16 %v2907
      %v3253 = vunpack.c.l.b16 %v2908
      %v3254 = vunpack.c.h.b16 %v2908
      %v3255 = vunpack.c.l.b16 %v2909
      %v3256 = vunpack.c.h.b16 %v2909
      %v3257 = vunpack.c.l.b16 %v2910
      %v3258 = vunpack.c.h.b16 %v2910
      %v3259 = vunpack.c.l.b16 %v2911
      %v3260 = vunpack.c.h.b16 %v2911
      %v3261 = vunpack.c.l.b16 %v2912
      %v3262 = vunpack.c.h.b16 %v2912
      %v3263 = vunpack.c.l.b16 %v2913
      %v3264 = vunpack.c.h.b16 %v2913
      %v3265 = vunpack.c.l.b16 %v2914
      %v3266 = vunpack.c.h.b16 %v2914
      %v3267 = vunpack.c.l.b16 %v2915
      %v3268 = vunpack.c.h.b16 %v2915
      %v3269 = vunpack.c.l.b16 %v2916
      %v3270 = vunpack.c.h.b16 %v2916
      %v3271 = vunpack.c.l.b16 %v2917
      %v3272 = vunpack.c.h.b16 %v2917
      %v3273 = vunpack.c.l.b16 %v2918
      %v3274 = vunpack.c.h.b16 %v2918
      %v3275 = vunpack.c.l.b16 %v2919
      %v3276 = vunpack.c.h.b16 %v2919
      %v3277 = vunpack.c.l.b16 %v2920
      %v3278 = vunpack.c.h.b16 %v2920
      %v3279 = vunpack.c.l.b16 %v2921
      %v3280 = vunpack.c.h.b16 %v2921
      %v3281 = vunpack.c.l.b16 %v2922
      %v3282 = vunpack.c.h.b16 %v2922
      %v3283 = vunpack.c.l.b16 %v2923
      %v3284 = vunpack.c.h.b16 %v2923
      %v3285 = vunpack.c.l.b16 %v2924
      %v3286 = vunpack.c.h.b16 %v2924
      %v3287 = vunpack.c.l.b16 %v2925
      %v3288 = vunpack.c.h.b16 %v2925
      %v3289 = vunpack.c.l.b16 %v2926
      %v3290 = vunpack.c.h.b16 %v2926
      %v3291 = vunpack.c.l.b16 %v2927
      %v3292 = vunpack.c.h.b16 %v2927
      %v3293 = vunpack.c.l.b16 %v2928
      %v3294 = vunpack.c.h.b16 %v2928
      %v3295 = vunpack.c.l.b16 %v2929
      %v3296 = vunpack.c.h.b16 %v2929
      %v3297 = vunpack.c.l.b16 %v2930
      %v3298 = vunpack.c.h.b16 %v2930
      %v3299 = vunpack.c.l.b16 %v2931
      %v3300 = vunpack.c.h.b16 %v2931
      %v3301 = vunpack.c.l.b16 %v2932
      %v3302 = vunpack.c.h.b16 %v2932
      %v3303 = vunpack.c.l.b16 %v2933
      %v3304 = vunpack.c.h.b16 %v2933
      %v3305 = vunpack.c.l.b16 %v2934
      %v3306 = vunpack.c.h.b16 %v2934
      %v3307 = vunpack.c.l.b16 %v2935
      %v3308 = vunpack.c.h.b16 %v2935
      %v3309 = vunpack.c.l.b16 %v2936
      %v3310 = vunpack.c.h.b16 %v2936
      %v3311 = vunpack.c.l.b16 %v2937
      %v3312 = vunpack.c.h.b16 %v2937
      %v3313 = vunpack.c.l.b16 %v2938
      %v3314 = vunpack.c.h.b16 %v2938
      %v3315 = vunpack.c.l.b16 %v2939
      %v3316 = vunpack.c.h.b16 %v2939
      %v3317 = vunpack.c.l.b16 %v2940
      %v3318 = vunpack.c.h.b16 %v2940
      %v3319 = vunpack.c.l.b16 %v2941
      %v3320 = vunpack.c.h.b16 %v2941
      %v3321 = vunpack.c.l.b16 %v2942
      %v3322 = vunpack.c.h.b16 %v2942
      %v3323 = vunpack.c.l.b16 %v2943
      %v3324 = vunpack.c.h.b16 %v2943
      %v3325 = vunpack.c.l.b16 %v2944
      %v3326 = vunpack.c.h.b16 %v2944
      %v3327 = vunpack.c.l.b16 %v2945
      %v3328 = vunpack.c.h.b16 %v2945
      %v3329 = vunpack.c.l.b16 %v2946
      %v3330 = vunpack.c.h.b16 %v2946
      %v3331 = vunpack.c.l.b16 %v2947
      %v3332 = vunpack.c.h.b16 %v2947
      %v3333 = vunpack.c.l.b16 %v2948
      %v3334 = vunpack.c.h.b16 %v2948
      %v3335 = vunpack.c.l.b16 %v2949
      %v3336 = vunpack.c.h.b16 %v2949
      %v3337 = vunpack.c.l.b16 %v2950
      %v3338 = vunpack.c.h.b16 %v2950
      %v3339 = vunpack.c.l.b16 %v2951
      %v3340 = vunpack.c.h.b16 %v2951
      %v3341 = vunpack.c.l.b16 %v2952
      %v3342 = vunpack.c.h.b16 %v2952
      %v3343 = vunpack.c.l.b16 %v2953
      %v3344 = vunpack.c.h.b16 %v2953
      %v3345 = vunpack.c.l.b16 %v2954
      %v3346 = vunpack.c.h.b16 %v2954
      %v3347 = vunpack.c.l.b16 %v2955
      %v3348 = vunpack.c.h.b16 %v2955
      %v3349 = vunpack.c.l.b16 %v2956
      %v3350 = vunpack.c.h.b16 %v2956
      %v3351 = vunpack.c.l.b16 %v2957
      %v3352 = vunpack.c.h.b16 %v2957
      %v3353 = vunpack.c.l.b16 %v2958
      %v3354 = vunpack.c.h.b16 %v2958
      %v3355 = vunpack.c.l.b16 %v2959
      %v3356 = vunpack.c.h.b16 %v2959
      %v3357 = vunpack.c.l.b16 %v2960
      %v3358 = vunpack.c.h.b16 %v2960
      %v3359 = vunpack.c.l.b16 %v2961
      %v3360 = vunpack.c.h.b16 %v2961
      %v3361 = vunpack.c.l.b16 %v2962
      %v3362 = vunpack.c.h.b16 %v2962
      %v3363 = vunpack.c.l.b16 %v2963
      %v3364 = vunpack.c.h.b16 %v2963
      %v3365 = vunpack.c.l.b16 %v2964
      %v3366 = vunpack.c.h.b16 %v2964
      %v3367 = vunpack.c.l.b16 %v2965
      %v3368 = vunpack.c.h.b16 %v2965
      %v3369 = vunpack.c.l.b16 %v2966
      %v3370 = vunpack.c.h.b16 %v2966
      %v3371 = vunpack.c.l.b16 %v2967
      %v3372 = vunpack.c.h.b16 %v2967
      %v3373 = vunpack.c.l.b16 %v2968
      %v3374 = vunpack.c.h.b16 %v2968
      %v3375 = vunpack.c.l.b16 %v2969
      %v3376 = vunpack.c.h.b16 %v2969
      %v3377 = vunpack.c.l.b16 %v2970
      %v3378 = vunpack.c.h.b16 %v2970
      %v3379 = vunpack.c.l.b16 %v2971
      %v3380 = vunpack.c.h.b16 %v2971
      %v3381 = vpack.c.b16 %v3119, %v3117
      %v3382 = vpack.c.b16 %v3120, %v3118
      %v3383 = vpack.c.b16 %v3123, %v3121
      %v3384 = vpack.c.b16 %v3124, %v3122
      %v3385 = vpack.c.b16 %v3127, %v3125
      %v3386 = vpack.c.b16 %v3128, %v3126
      %v3387 = vpack.c.b16 %v3131, %v3129
      %v3388 = vpack.c.b16 %v3132, %v3130
      %v3389 = vpack.c.b16 %v3135, %v3133
      %v3390 = vpack.c.b16 %v3136, %v3134
      %v3391 = vpack.c.b16 %v3139, %v3137
      %v3392 = vpack.c.b16 %v3140, %v3138
      %v3393 = vpack.c.b16 %v3143, %v3141
      %v3394 = vpack.c.b16 %v3144, %v3142
      %v3395 = vpack.c.b16 %v3147, %v3145
      %v3396 = vpack.c.b16 %v3148, %v3146
      %v3397 = vpack.c.b16 %v3151, %v3149
      %v3398 = vpack.c.b16 %v3152, %v3150
      %v3399 = vpack.c.b16 %v3155, %v3153
      %v3400 = vpack.c.b16 %v3156, %v3154
      %v3401 = vpack.c.b16 %v3159, %v3157
      %v3402 = vpack.c.b16 %v3160, %v3158
      %v3403 = vpack.c.b16 %v3163, %v3161
      %v3404 = vpack.c.b16 %v3164, %v3162
      %v3405 = vpack.c.b16 %v3167, %v3165
      %v3406 = vpack.c.b16 %v3168, %v3166
      %v3407 = vpack.c.b16 %v3171, %v3169
      %v3408 = vpack.c.b16 %v3172, %v3170
      %v3409 = vpack.c.b16 %v3175, %v3173
      %v3410 = vpack.c.b16 %v3176, %v3174
      %v3411 = vpack.c.b16 %v3179, %v3177
      %v3412 = vpack.c.b16 %v3180, %v3178
      %v3413 = vpack.c.b16 %v3183, %v3181
      %v3414 = vpack.c.b16 %v3184, %v3182
      %v3415 = vpack.c.b16 %v3187, %v3185
      %v3416 = vpack.c.b16 %v3188, %v3186
      %v3417 = vpack.c.b16 %v3191, %v3189
      %v3418 = vpack.c.b16 %v3192, %v3190
      %v3419 = vpack.c.b16 %v3195, %v3193
      %v3420 = vpack.c.b16 %v3196, %v3194
      %v3421 = vpack.c.b16 %v3199, %v3197
      %v3422 = vpack.c.b16 %v3200, %v3198
      %v3423 = vpack.c.b16 %v3203, %v3201
      %v3424 = vpack.c.b16 %v3204, %v3202
      %v3425 = vpack.c.b16 %v3207, %v3205
      %v3426 = vpack.c.b16 %v3208, %v3206
      %v3427 = vpack.c.b16 %v3211, %v3209
      %v3428 = vpack.c.b16 %v3212, %v3210
      %v3429 = vpack.c.b16 %v3215, %v3213
      %v3430 = vpack.c.b16 %v3216, %v3214
      %v3431 = vpack.c.b16 %v3219, %v3217
      %v3432 = vpack.c.b16 %v3220, %v3218
      %v3433 = vpack.c.b16 %v3223, %v3221
      %v3434 = vpack.c.b16 %v3224, %v3222
      %v3435 = vpack.c.b16 %v3227, %v3225
      %v3436 = vpack.c.b16 %v3228, %v3226
      %v3437 = vpack.c.b16 %v3231, %v3229
      %v3438 = vpack.c.b16 %v3232, %v3230
      %v3439 = vpack.c.b16 %v3235, %v3233
      %v3440 = vpack.c.b16 %v3236, %v3234
      %v3441 = vpack.c.b16 %v3239, %v3237
      %v3442 = vpack.c.b16 %v3240, %v3238
      %v3443 = vpack.c.b16 %v3243, %v3241
      %v3444 = vpack.c.b16 %v3244, %v3242
      %v3445 = vpack.c.b16 %v3247, %v3245
      %v3446 = vpack.c.b16 %v3248, %v3246
      %v3447 = vpack.c.b16 %v3251, %v3249
      %v3448 = vpack.c.b16 %v3252, %v3250
      %v3449 = vpack.c.b16 %v3255, %v3253
      %v3450 = vpack.c.b16 %v3256, %v3254
      %v3451 = vpack.c.b16 %v3259, %v3257
      %v3452 = vpack.c.b16 %v3260, %v3258
      %v3453 = vpack.c.b16 %v3263, %v3261
      %v3454 = vpack.c.b16 %v3264, %v3262
      %v3455 = vpack.c.b16 %v3267, %v3265
      %v3456 = vpack.c.b16 %v3268, %v3266
      %v3457 = vpack.c.b16 %v3271, %v3269
      %v3458 = vpack.c.b16 %v3272, %v3270
      %v3459 = vpack.c.b16 %v3275, %v3273
      %v3460 = vpack.c.b16 %v3276, %v3274
      %v3461 = vpack.c.b16 %v3279, %v3277
      %v3462 = vpack.c.b16 %v3280, %v3278
      %v3463 = vpack.c.b16 %v3283, %v3281
      %v3464 = vpack.c.b16 %v3284, %v3282
      %v3465 = vpack.c.b16 %v3287, %v3285
      %v3466 = vpack.c.b16 %v3288, %v3286
      %v3467 = vpack.c.b16 %v3291, %v3289
      %v3468 = vpack.c.b16 %v3292, %v3290
      %v3469 = vpack.c.b16 %v3295, %v3293
      %v3470 = vpack.c.b16 %v3296, %v3294
      %v3471 = vpack.c.b16 %v3299, %v3297
      %v3472 = vpack.c.b16 %v3300, %v3298
      %v3473 = vpack.c.b16 %v3303, %v3301
      %v3474 = vpack.c.b16 %v3304, %v3302
      %v3475 = vpack.c.b16 %v3307, %v3305
      %v3476 = vpack.c.b16 %v3308, %v3306
      %v3477 = vpack.c.b16 %v3311, %v3309
      %v3478 = vpack.c.b16 %v3312, %v3310
      %v3479 = vpack.c.b16 %v3315, %v3313
      %v3480 = vpack.c.b16 %v3316, %v3314
      %v3481 = vpack.c.b16 %v3319, %v3317
      %v3482 = vpack.c.b16 %v3320, %v3318
      %v3483 = vpack.c.b16 %v3323, %v3321
      %v3484 = vpack.c.b16 %v3324, %v3322
      %v3485 = vpack.c.b16 %v3327, %v3325
      %v3486 = vpack.c.b16 %v3328, %v3326
      %v3487 = vpack.c.b16 %v3331, %v3329
      %v3488 = vpack.c.b16 %v3332, %v3330
      %v3489 = vpack.c.b16 %v3335, %v3333
      %v3490 = vpack.c.b16 %v3336, %v3334
      %v3491 = vpack.c.b16 %v3339, %v3337
      %v3492 = vpack.c.b16 %v3340, %v3338
      %v3493 = vpack.c.b16 %v3343, %v3341
      %v3494 = vpack.c.b16 %v3344, %v3342
      %v3495 = vpack.c.b16 %v3347, %v3345
      %v3496 = vpack.c.b16 %v3348, %v3346
      %v3497 = vpack.c.b16 %v3351, %v3349
      %v3498 = vpack.c.b16 %v3352, %v3350
      %v3499 = vpack.c.b16 %v3355, %v3353
      %v3500 = vpack.c.b16 %v3356, %v3354
      %v3501 = vpack.c.b16 %v3359, %v3357
      %v3502 = vpack.c.b16 %v3360, %v3358
      %v3503 = vpack.c.b16 %v3363, %v3361
      %v3504 = vpack.c.b16 %v3364, %v3362
      %v3505 = vpack.c.b16 %v3367, %v3365
      %v3506 = vpack.c.b16 %v3368, %v3366
      %v3507 = vpack.c.b16 %v3371, %v3369
      %v3508 = vpack.c.b16 %v3372, %v3370
      %v3509 = vpack.c.b16 %v3375, %v3373
      %v3510 = vpack.c.b16 %v3376, %v3374
      %v3511 = vpack.c.b16 %v3379, %v3377
      %v3512 = vpack.c.b16 %v3380, %v3378
      %3645 = vmatprep.subr.bf16.mxu0 %v3382
      %3646 = vmatpush1.bf16.msra.mxu0 %v3381
      %3647 = vmatprep.subr.bf16.mxu0 %v3384
      %3648 = vmatpush1.bf16.msra.mxu0 %v3383
      %3649 = vmatprep.subr.bf16.mxu0 %v3386
      %3650 = vmatpush1.bf16.msra.mxu0 %v3385
      %3651 = vmatprep.subr.bf16.mxu0 %v3388
      %3652 = vmatpush1.bf16.msra.mxu0 %v3387
      %3653 = vmatprep.subr.bf16.mxu0 %v3390
      %3654 = vmatpush1.bf16.msra.mxu0 %v3389
      %3655 = vmatprep.subr.bf16.mxu0 %v3392
      %3656 = vmatpush1.bf16.msra.mxu0 %v3391
      %3657 = vmatprep.subr.bf16.mxu0 %v3394
      %3658 = vmatpush1.bf16.msra.mxu0 %v3393
      %3659 = vmatprep.subr.bf16.mxu0 %v3396
      %3660 = vmatpush1.bf16.msra.mxu0 %v3395
      %3661 = vmatprep.subr.bf16.mxu0 %v3398
      %3662 = vmatpush1.bf16.msra.mxu0 %v3397
      %3663 = vmatprep.subr.bf16.mxu0 %v3400
      %3664 = vmatpush1.bf16.msra.mxu0 %v3399
      %3665 = vmatprep.subr.bf16.mxu0 %v3402
      %3666 = vmatpush1.bf16.msra.mxu0 %v3401
      %3667 = vmatprep.subr.bf16.mxu0 %v3404
      %3668 = vmatpush1.bf16.msra.mxu0 %v3403
      %3669 = vmatprep.subr.bf16.mxu0 %v3406
      %3670 = vmatpush1.bf16.msra.mxu0 %v3405
      %3671 = vmatprep.subr.bf16.mxu0 %v3408
      %3672 = vmatpush1.bf16.msra.mxu0 %v3407
      %3673 = vmatprep.subr.bf16.mxu0 %v3410
      %3674 = vmatpush1.bf16.msra.mxu0 %v3409
      %3675 = vmatprep.subr.bf16.mxu0 %v3412
      %3676 = vmatpush1.bf16.msra.mxu0 %v3411
      %3677 = vmatprep.mubr.bf16.mxu0 %v522
      %3678 = vmatmul.mubr.bf16.gmra.mrb[0].mxu0 %v521
      %v3679 = vpop.f32.mrb[0].mxu0
      %v3680 = vadd.f32 %v2978, %v3679
      %v3681 = vpop.f32.mrb[0].mxu0
      %v3682 = vadd.f32 %v2982, %v3681
      %v3683 = vpop.f32.mrb[0].mxu0
      %v3684 = vadd.f32 %v2978, %v3683
      %v3685 = vpop.f32.mrb[0].mxu0
      %v3686 = vadd.f32 %v2982, %v3685
      %3687 = vmatprep.mubr.bf16.mxu0 %v531
      %3688 = vmatmul.mubr.bf16.gmra.mrb[0].mxu0 %v530
      %v3689 = vpop.f32.mrb[0].mxu0
      %v3690 = vadd.f32 %v2978, %v3689
      %v3691 = vpop.f32.mrb[0].mxu0
      %v3692 = vadd.f32 %v2982, %v3691
      %v3693 = vpop.f32.mrb[0].mxu0
      %v3694 = vadd.f32 %v2978, %v3693
      %v3695 = vpop.f32.mrb[0].mxu0
      %v3696 = vadd.f32 %v2982, %v3695
      %3697 = vdwg.mxu0
      %3698 = vmatprep.subr.bf16.mxu0 %v3414
      %3699 = vmatpush1.bf16.msra.mxu0 %v3413
      %3700 = vmatprep.subr.bf16.mxu0 %v3416
      %3701 = vmatpush1.bf16.msra.mxu0 %v3415
      %3702 = vmatprep.subr.bf16.mxu0 %v3418
      %3703 = vmatpush1.bf16.msra.mxu0 %v3417
      %3704 = vmatprep.subr.bf16.mxu0 %v3420
      %3705 = vmatpush1.bf16.msra.mxu0 %v3419
      %3706 = vmatprep.subr.bf16.mxu0 %v3422
      %3707 = vmatpush1.bf16.msra.mxu0 %v3421
      %3708 = vmatprep.subr.bf16.mxu0 %v3424
      %3709 = vmatpush1.bf16.msra.mxu0 %v3423
      %3710 = vmatprep.subr.bf16.mxu0 %v3426
      %3711 = vmatpush1.bf16.msra.mxu0 %v3425
      %3712 = vmatprep.subr.bf16.mxu0 %v3428
      %3713 = vmatpush1.bf16.msra.mxu0 %v3427
      %3714 = vmatprep.subr.bf16.mxu0 %v3430
      %3715 = vmatpush1.bf16.msra.mxu0 %v3429
      %3716 = vmatprep.subr.bf16.mxu0 %v3432
      %3717 = vmatpush1.bf16.msra.mxu0 %v3431
      %3718 = vmatprep.subr.bf16.mxu0 %v3434
      %3719 = vmatpush1.bf16.msra.mxu0 %v3433
      %3720 = vmatprep.subr.bf16.mxu0 %v3436
      %3721 = vmatpush1.bf16.msra.mxu0 %v3435
      %3722 = vmatprep.subr.bf16.mxu0 %v3438
      %3723 = vmatpush1.bf16.msra.mxu0 %v3437
      %3724 = vmatprep.subr.bf16.mxu0 %v3440
      %3725 = vmatpush1.bf16.msra.mxu0 %v3439
      %3726 = vmatprep.subr.bf16.mxu0 %v3442
      %3727 = vmatpush1.bf16.msra.mxu0 %v3441
      %3728 = vmatprep.subr.bf16.mxu0 %v3444
      %3729 = vmatpush1.bf16.msra.mxu0 %v3443
      %3730 = vmatprep.mubr.bf16.mxu0 %v524
      %3731 = vmatmul.mubr.bf16.gmra.mrb[0].mxu0 %v523
      %v3732 = vpop.f32.mrb[0].mxu0
      %v3733 = vadd.f32 %v3680, %v3732
      %v3734 = vpop.f32.mrb[0].mxu0
      %v3735 = vadd.f32 %v3682, %v3734
      %v3736 = vpop.f32.mrb[0].mxu0
      %v3737 = vadd.f32 %v3684, %v3736
      %v3738 = vpop.f32.mrb[0].mxu0
      %v3739 = vadd.f32 %v3686, %v3738
      %3740 = vmatprep.mubr.bf16.mxu0 %v533
      %3741 = vmatmul.mubr.bf16.gmra.mrb[0].mxu0 %v532
      %v3742 = vpop.f32.mrb[0].mxu0
      %v3743 = vadd.f32 %v3690, %v3742
      %v3744 = vpop.f32.mrb[0].mxu0
      %v3745 = vadd.f32 %v3692, %v3744
      %v3746 = vpop.f32.mrb[0].mxu0
      %v3747 = vadd.f32 %v3694, %v3746
      %v3748 = vpop.f32.mrb[0].mxu0
      %v3749 = vadd.f32 %v3696, %v3748
      %3750 = vdwg.mxu0
      %3751 = vmatprep.subr.bf16.mxu0 %v3446
      %3752 = vmatpush1.bf16.msra.mxu0 %v3445
      %3753 = vmatprep.subr.bf16.mxu0 %v3448
      %3754 = vmatpush1.bf16.msra.mxu0 %v3447
      %3755 = vmatprep.subr.bf16.mxu0 %v3450
      %3756 = vmatpush1.bf16.msra.mxu0 %v3449
      %3757 = vmatprep.subr.bf16.mxu0 %v3452
      %3758 = vmatpush1.bf16.msra.mxu0 %v3451
      %3759 = vmatprep.subr.bf16.mxu0 %v3454
      %3760 = vmatpush1.bf16.msra.mxu0 %v3453
      %3761 = vmatprep.subr.bf16.mxu0 %v3456
      %3762 = vmatpush1.bf16.msra.mxu0 %v3455
      %3763 = vmatprep.subr.bf16.mxu0 %v3458
      %3764 = vmatpush1.bf16.msra.mxu0 %v3457
      %3765 = vmatprep.subr.bf16.mxu0 %v3460
      %3766 = vmatpush1.bf16.msra.mxu0 %v3459
      %3767 = vmatprep.subr.bf16.mxu0 %v3462
      %3768 = vmatpush1.bf16.msra.mxu0 %v3461
      %3769 = vmatprep.subr.bf16.mxu0 %v3464
      %3770 = vmatpush1.bf16.msra.mxu0 %v3463
      %3771 = vmatprep.subr.bf16.mxu0 %v3466
      %3772 = vmatpush1.bf16.msra.mxu0 %v3465
      %3773 = vmatprep.subr.bf16.mxu0 %v3468
      %3774 = vmatpush1.bf16.msra.mxu0 %v3467
      %3775 = vmatprep.subr.bf16.mxu0 %v3470
      %3776 = vmatpush1.bf16.msra.mxu0 %v3469
      %3777 = vmatprep.subr.bf16.mxu0 %v3472
      %3778 = vmatpush1.bf16.msra.mxu0 %v3471
      %3779 = vmatprep.subr.bf16.mxu0 %v3474
      %3780 = vmatpush1.bf16.msra.mxu0 %v3473
      %3781 = vmatprep.subr.bf16.mxu0 %v3476
      %3782 = vmatpush1.bf16.msra.mxu0 %v3475
      %3783 = vmatprep.mubr.bf16.mxu0 %v526
      %3784 = vmatmul.mubr.bf16.gmra.mrb[0].mxu0 %v525
      %v3785 = vpop.f32.mrb[0].mxu0
      %v3786 = vadd.f32 %v3733, %v3785
      %v3787 = vpop.f32.mrb[0].mxu0
      %v3788 = vadd.f32 %v3735, %v3787
      %v3789 = vpop.f32.mrb[0].mxu0
      %v3790 = vadd.f32 %v3737, %v3789
      %v3791 = vpop.f32.mrb[0].mxu0
      %v3792 = vadd.f32 %v3739, %v3791
      %3793 = vmatprep.mubr.bf16.mxu0 %v535
      %3794 = vmatmul.mubr.bf16.gmra.mrb[0].mxu0 %v534
      %v3795 = vpop.f32.mrb[0].mxu0
      %v3796 = vadd.f32 %v3743, %v3795
      %v3797 = vpop.f32.mrb[0].mxu0
      %v3798 = vadd.f32 %v3745, %v3797
      %v3799 = vpop.f32.mrb[0].mxu0
      %v3800 = vadd.f32 %v3747, %v3799
      %v3801 = vpop.f32.mrb[0].mxu0
      %v3802 = vadd.f32 %v3749, %v3801
      %3803 = vdwg.mxu0
      %3804 = vmatprep.subr.bf16.mxu0 %v3478
      %3805 = vmatpush1.bf16.msra.mxu0 %v3477
      %3806 = vmatprep.subr.bf16.mxu0 %v3480
      %3807 = vmatpush1.bf16.msra.mxu0 %v3479
      %3808 = vmatprep.subr.bf16.mxu0 %v3482
      %3809 = vmatpush1.bf16.msra.mxu0 %v3481
      %3810 = vmatprep.subr.bf16.mxu0 %v3484
      %3811 = vmatpush1.bf16.msra.mxu0 %v3483
      %3812 = vmatprep.subr.bf16.mxu0 %v3486
      %3813 = vmatpush1.bf16.msra.mxu0 %v3485
      %3814 = vmatprep.subr.bf16.mxu0 %v3488
      %3815 = vmatpush1.bf16.msra.mxu0 %v3487
      %3816 = vmatprep.subr.bf16.mxu0 %v3490
      %3817 = vmatpush1.bf16.msra.mxu0 %v3489
      %3818 = vmatprep.subr.bf16.mxu0 %v3492
      %3819 = vmatpush1.bf16.msra.mxu0 %v3491
      %3820 = vmatprep.subr.bf16.mxu0 %v3494
      %3821 = vmatpush1.bf16.msra.mxu0 %v3493
      %3822 = vmatprep.subr.bf16.mxu0 %v3496
      %3823 = vmatpush1.bf16.msra.mxu0 %v3495
      %3824 = vmatprep.subr.bf16.mxu0 %v3498
      %3825 = vmatpush1.bf16.msra.mxu0 %v3497
      %3826 = vmatprep.subr.bf16.mxu0 %v3500
      %3827 = vmatpush1.bf16.msra.mxu0 %v3499
      %3828 = vmatprep.subr.bf16.mxu0 %v3502
      %3829 = vmatpush1.bf16.msra.mxu0 %v3501
      %3830 = vmatprep.subr.bf16.mxu0 %v3504
      %3831 = vmatpush1.bf16.msra.mxu0 %v3503
      %3832 = vmatprep.subr.bf16.mxu0 %v3506
      %3833 = vmatpush1.bf16.msra.mxu0 %v3505
      %3834 = vmatprep.subr.bf16.mxu0 %v3508
      %3835 = vmatpush1.bf16.msra.mxu0 %v3507
      %3836 = vmatprep.mubr.bf16.mxu0 %v528
      %3837 = vmatmul.mubr.bf16.gmra.mrb[0].mxu0 %v527
      %v3838 = vpop.f32.mrb[0].mxu0
      %v3839 = vadd.f32 %v3786, %v3838
      %v3840 = vpop.f32.mrb[0].mxu0
      %v3841 = vadd.f32 %v3788, %v3840
      %v3842 = vpop.f32.mrb[0].mxu0
      %v3843 = vadd.f32 %v3790, %v3842
      %v3844 = vpop.f32.mrb[0].mxu0
      %v3845 = vadd.f32 %v3792, %v3844
      %3846 = vmatprep.mubr.bf16.mxu0 %v537
      %3847 = vmatmul.mubr.bf16.gmra.mrb[0].mxu0 %v536
      %v3848 = vpop.f32.mrb[0].mxu0
      %v3849 = vadd.f32 %v3796, %v3848
      %v3850 = vpop.f32.mrb[0].mxu0
      %v3851 = vadd.f32 %v3798, %v3850
      %v3852 = vpop.f32.mrb[0].mxu0
      %v3853 = vadd.f32 %v3800, %v3852
      %v3854 = vpop.f32.mrb[0].mxu0
      %v3855 = vadd.f32 %v3802, %v3854
      %3856 = vdwg.mxu0
      %3857 = vmatprep.subr.bf16.mxu0 %v3510
      %3858 = vmatpush1.bf16.msra.mxu0 %v3509
      %3859 = vmatprep.subr.bf16.mxu0 %v3512
      %3860 = vmatpush1.bf16.msra.mxu0 %v3511
      %3861 = vmatprep.subr.bf16.mxu0 0
      %3862 = vmatpush1.bf16.msra.mxu0 0
      %3863 = vmatprep.subr.bf16.mxu0 0
      %3864 = vmatpush1.bf16.msra.mxu0 0
      %3865 = vmatprep.subr.bf16.mxu0 0
      %3866 = vmatpush1.bf16.msra.mxu0 0
      %3867 = vmatprep.subr.bf16.mxu0 0
      %3868 = vmatpush1.bf16.msra.mxu0 0
      %3869 = vmatprep.subr.bf16.mxu0 0
      %3870 = vmatpush1.bf16.msra.mxu0 0
      %3871 = vmatprep.subr.bf16.mxu0 0
      %3872 = vmatpush1.bf16.msra.mxu0 0
      %3873 = vmatprep.subr.bf16.mxu0 0
      %3874 = vmatpush1.bf16.msra.mxu0 0
      %3875 = vmatprep.subr.bf16.mxu0 0
      %3876 = vmatpush1.bf16.msra.mxu0 0
      %3877 = vmatprep.subr.bf16.mxu0 0
      %3878 = vmatpush1.bf16.msra.mxu0 0
      %3879 = vmatprep.subr.bf16.mxu0 0
      %3880 = vmatpush1.bf16.msra.mxu0 0
      %3881 = vmatprep.subr.bf16.mxu0 0
      %3882 = vmatpush1.bf16.msra.mxu0 0
      %3883 = vmatprep.subr.bf16.mxu0 0
      %3884 = vmatpush1.bf16.msra.mxu0 0
      %3885 = vmatprep.subr.bf16.mxu0 0
      %3886 = vmatpush1.bf16.msra.mxu0 0
      %3887 = vmatprep.subr.bf16.mxu0 0
      %3888 = vmatpush1.bf16.msra.mxu0 0
      %3889 = vmatprep.mubr.bf16.mxu0 0
      %3890 = vmatmul.mubr.bf16.gmra.mrb[0].mxu0 %v1217
      %v3891 = vpop.f32.mrb[0].mxu0
      %v3892 = vadd.f32 %v3839, %v3891
      %v3893 = vpop.f32.mrb[0].mxu0
      %v3894 = vadd.f32 %v3841, %v3893
      %v3895 = vpop.f32.mrb[0].mxu0
      %v3896 = vadd.f32 %v3843, %v3895
      %v3897 = vpop.f32.mrb[0].mxu0
      %v3898 = vadd.f32 %v3845, %v3897
      %3899 = vmatprep.mubr.bf16.mxu0 0
      %3900 = vmatmul.mubr.bf16.gmra.mrb[0].mxu0 %v1220
      %v3901 = vpop.f32.mrb[0].mxu0
      %v3902 = vadd.f32 %v3849, %v3901
      %v3903 = vpop.f32.mrb[0].mxu0
      %v3904 = vadd.f32 %v3851, %v3903
      %v3905 = vpop.f32.mrb[0].mxu0
      %v3906 = vadd.f32 %v3853, %v3905
      %v3907 = vpop.f32.mrb[0].mxu0
      %v3908 = vadd.f32 %v3855, %v3907
      %3909 = vdwg.mxu0
      %vm3910 = vcmp.ge.f32.partialorder %v3892, 0.0
      %vm3911 = vcmp.ge.f32.partialorder %v3894, 0.0
      %vm3912 = vcmp.ge.f32.partialorder %v3896, 0.0
      %vm3913 = vcmp.ge.f32.partialorder %v3898, 0.0
      %vm3914 = vcmp.ge.f32.partialorder %v3902, 0.0
      %vm3915 = vcmp.ge.f32.partialorder %v3904, 0.0
      %vm3916 = vcmp.ge.f32.partialorder %v3906, 0.0
      %vm3917 = vcmp.ge.f32.partialorder %v3908, 0.0
      %v3918 = vmul.f32 %v1495, %v3892
      %v3919 = vmul.f32 %v1495, %v3894
      %v3920 = vmul.f32 %v1495, %v3896
      %v3921 = vmul.f32 %v1495, %v3898
      %v3922 = vmul.f32 %v1495, %v3902
      %v3923 = vmul.f32 %v1495, %v3904
      %v3924 = vmul.f32 %v1495, %v3906
      %v3925 = vmul.f32 %v1495, %v3908
      %v3926 = vsel %vm3910, %v3892, %v3918
      %v3927 = vsel %vm3911, %v3894, %v3919
      %v3928 = vsel %vm3912, %v3896, %v3920
      %v3929 = vsel %vm3913, %v3898, %v3921
      %v3930 = vsel %vm3914, %v3902, %v3922
      %v3931 = vsel %vm3915, %v3904, %v3923
      %v3932 = vsel %vm3916, %v3906, %v3924
      %v3933 = vsel %vm3917, %v3908, %v3925
      %v3934 = vsel %vm1512, %v3927, 0.0
      %v3935 = vadd.f32 %v3926, %v3934
      %3936 = vadd.xlane.f32.xlu0 %v3935
      %v3937 = vpop.xlane.xlu0 %3936
      %v3938 = vsel %vm1512, %v3929, 0.0
      %v3939 = vadd.f32 %v3928, %v3938
      %3940 = vadd.xlane.f32.xlu0 %v3939
      %v3941 = vpop.xlane.xlu0 %3940
      %v3942 = vsel %vm1512, %v3931, 0.0
      %v3943 = vadd.f32 %v3930, %v3942
      %3944 = vadd.xlane.f32.xlu0 %v3943
      %v3945 = vpop.xlane.xlu0 %3944
      %v3946 = vsel %vm1512, %v3933, 0.0
      %v3947 = vadd.f32 %v3932, %v3946
      %3948 = vadd.xlane.f32.xlu0 %v3947
      %v3949 = vpop.xlane.xlu0 %3948
      %v3950 = vmul.f32 %v3937, 0.007575758
      %v3951 = vmul.f32 %v3941, 0.007575758
      %v3952 = vmul.f32 %v3945, 0.007575758
      %v3953 = vmul.f32 %v3949, 0.007575758
      %v3954 = vmul.f32 %v3926, %v3926
      %v3955 = vmul.f32 %v3927, %v3927
      %v3956 = vmul.f32 %v3928, %v3928
      %v3957 = vmul.f32 %v3929, %v3929
      %v3958 = vmul.f32 %v3930, %v3930
      %v3959 = vmul.f32 %v3931, %v3931
      %v3960 = vmul.f32 %v3932, %v3932
      %v3961 = vmul.f32 %v3933, %v3933
      %v3962 = vsel %vm1512, %v3955, 0.0
      %v3963 = vadd.f32 %v3954, %v3962
      %3964 = vadd.xlane.f32.xlu0 %v3963
      %v3965 = vpop.xlane.xlu0 %3964
      %v3966 = vsel %vm1512, %v3957, 0.0
      %v3967 = vadd.f32 %v3956, %v3966
      %3968 = vadd.xlane.f32.xlu0 %v3967
      %v3969 = vpop.xlane.xlu0 %3968
      %v3970 = vsel %vm1512, %v3959, 0.0
      %v3971 = vadd.f32 %v3958, %v3970
      %3972 = vadd.xlane.f32.xlu0 %v3971
      %v3973 = vpop.xlane.xlu0 %3972
      %v3974 = vsel %vm1512, %v3961, 0.0
      %v3975 = vadd.f32 %v3960, %v3974
      %3976 = vadd.xlane.f32.xlu0 %v3975
      %v3977 = vpop.xlane.xlu0 %3976
      %v3978 = vmul.f32 %v3965, 0.007575758
      %v3979 = vmul.f32 %v3969, 0.007575758
      %v3980 = vmul.f32 %v3973, 0.007575758
      %v3981 = vmul.f32 %v3977, 0.007575758
      %v3982 = vmul.f32 %v3950, %v3950
      %v3983 = vmul.f32 %v3951, %v3951
      %v3984 = vmul.f32 %v3952, %v3952
      %v3985 = vmul.f32 %v3953, %v3953
      %v3986 = vsub.f32 %v3978, %v3982
      %v3987 = vsub.f32 %v3979, %v3983
      %v3988 = vsub.f32 %v3980, %v3984
      %v3989 = vsub.f32 %v3981, %v3985
      %v3990 = vadd.f32 %v3986, 1e-05
      %v3991 = vadd.f32 %v3987, 1e-05
      %v3992 = vadd.f32 %v3988, 1e-05
      %v3993 = vadd.f32 %v3989, 1e-05
      %v3994 = vrsqrt.pop %v3990
      %v3995 = vrsqrt.pop %v3991
      %v3996 = vrsqrt.pop %v3992
      %v3997 = vrsqrt.pop %v3993
      %v3998 = vsub.f32 %v3926, %v3950
      %v3999 = vsub.f32 %v3927, %v3950
      %v4000 = vsub.f32 %v3928, %v3951
      %v4001 = vsub.f32 %v3929, %v3951
      %v4002 = vsub.f32 %v3930, %v3952
      %v4003 = vsub.f32 %v3931, %v3952
      %v4004 = vsub.f32 %v3932, %v3953
      %v4005 = vsub.f32 %v3933, %v3953
      %v4006 = vmul.f32 %v3998, %v3994
      %v4007 = vmul.f32 %v3999, %v3994
      %v4008 = vmul.f32 %v4000, %v3995
      %v4009 = vmul.f32 %v4001, %v3995
      %v4010 = vmul.f32 %v4002, %v3996
      %v4011 = vmul.f32 %v4003, %v3996
      %v4012 = vmul.f32 %v4004, %v3997
      %v4013 = vmul.f32 %v4005, %v3997
      %v4014 = vmul.f32 %v4006, %v1597
      %v4015 = vmul.f32 %v4007, %v1601
      %v4016 = vmul.f32 %v4008, %v1597
      %v4017 = vmul.f32 %v4009, %v1601
      %v4018 = vmul.f32 %v4010, %v1597
      %v4019 = vmul.f32 %v4011, %v1601
      %v4020 = vmul.f32 %v4012, %v1597
      %v4021 = vmul.f32 %v4013, %v1601
      %v4022 = vadd.f32 %v4014, %v1616
      %v4023 = vadd.f32 %v4015, %v1620
      %v4024 = vadd.f32 %v4016, %v1616
      %v4025 = vadd.f32 %v4017, %v1620
      %v4026 = vadd.f32 %v4018, %v1616
      %v4027 = vadd.f32 %v4019, %v1620
      %v4028 = vadd.f32 %v4020, %v1616
      %v4029 = vadd.f32 %v4021, %v1620
      %s4030 = scalar_lea.vmem %s295, 128
      %4031 = vst [vmem:[%s4030] sm:$0xff] %v4022
      %4032 = vst.msk [vmem:[%s4030 + $0x8] sm:$0xff] %vm1512, %v4023
      %4033 = vst [vmem:[%s4030 + $0x10] sm:$0xff] %v4024
      %4034 = vst.msk [vmem:[%s4030 + $0x18] sm:$0xff] %vm1512, %v4025
      %4035 = vst [vmem:[%s4030 + $0x20] sm:$0xff] %v4026
      %4036 = vst.msk [vmem:[%s4030 + $0x28] sm:$0xff] %vm1512, %v4027
      %4037 = vst [vmem:[%s4030 + $0x30] sm:$0xff] %v4028
      %4038 = vst.msk [vmem:[%s4030 + $0x38] sm:$0xff] %vm1512, %v4029
      %s4039 = scalar_lea.vmem %s1, 3168
      %v4040 = vld [vmem:[%s4039] sm:$0xff]
      %v4041 = vld [vmem:[%s4039 + $0x8] sm:$0xff]
      %v4042 = vld [vmem:[%s4039 + $0x10] sm:$0xff]
      %v4043 = vld [vmem:[%s4039 + $0x18] sm:$0xff]
      %v4044 = vld [vmem:[%s4039 + $0x20] sm:$0xff]
      %v4045 = vld [vmem:[%s4039 + $0x28] sm:$0xff]
      %v4046 = vld [vmem:[%s4039 + $0x30] sm:$0xff]
      %v4047 = vld [vmem:[%s4039 + $0x38] sm:$0xff]
      %v4048 = vld [vmem:[%s4039 + $0x40] sm:$0xff]
      %v4049 = vld [vmem:[%s4039 + $0x48] sm:$0xff]
      %v4050 = vld [vmem:[%s4039 + $0x50] sm:$0xff]
      %v4051 = vld [vmem:[%s4039 + $0x58] sm:$0xff]
      %v4052 = vld [vmem:[%s4039 + $0x60] sm:$0xff]
      %v4053 = vld [vmem:[%s4039 + $0x68] sm:$0xff]
      %v4054 = vld [vmem:[%s4039 + $0x70] sm:$0xff]
      %v4055 = vld [vmem:[%s4039 + $0x78] sm:$0xff]
      %v4056 = vld [vmem:[%s4039 + $0x80] sm:$0xff]
      %v4057 = vld [vmem:[%s4039 + $0x88] sm:$0xff]
      %v4058 = vld [vmem:[%s4039 + $0x90] sm:$0xff]
      %v4059 = vld [vmem:[%s4039 + $0x98] sm:$0xff]
      %v4060 = vld [vmem:[%s4039 + $0xa0] sm:$0xff]
      %v4061 = vld [vmem:[%s4039 + $0xa8] sm:$0xff]
      %v4062 = vld [vmem:[%s4039 + $0xb0] sm:$0xff]
      %v4063 = vld [vmem:[%s4039 + $0xb8] sm:$0xff]
      %v4064 = vld [vmem:[%s4039 + $0xc0] sm:$0xff]
      %v4065 = vld [vmem:[%s4039 + $0xc8] sm:$0xff]
      %v4066 = vld [vmem:[%s4039 + $0xd0] sm:$0xff]
      %v4067 = vld [vmem:[%s4039 + $0xd8] sm:$0xff]
      %v4068 = vld [vmem:[%s4039 + $0xe0] sm:$0xff]
      %v4069 = vld [vmem:[%s4039 + $0xe8] sm:$0xff]
      %v4070 = vld [vmem:[%s4039 + $0xf0] sm:$0xff]
      %v4071 = vld [vmem:[%s4039 + $0xf8] sm:$0xff]
      %v4072 = vld [vmem:[%s4039 + $0x100] sm:$0xff]
      %v4073 = vld [vmem:[%s4039 + $0x108] sm:$0xff]
      %v4074 = vld [vmem:[%s4039 + $0x110] sm:$0xff]
      %v4075 = vld [vmem:[%s4039 + $0x118] sm:$0xff]
      %v4076 = vld [vmem:[%s4039 + $0x120] sm:$0xff]
      %v4077 = vld [vmem:[%s4039 + $0x128] sm:$0xff]
      %v4078 = vld [vmem:[%s4039 + $0x130] sm:$0xff]
      %v4079 = vld [vmem:[%s4039 + $0x138] sm:$0xff]
      %v4080 = vld [vmem:[%s4039 + $0x140] sm:$0xff]
      %v4081 = vld [vmem:[%s4039 + $0x148] sm:$0xff]
      %v4082 = vld [vmem:[%s4039 + $0x150] sm:$0xff]
      %v4083 = vld [vmem:[%s4039 + $0x158] sm:$0xff]
      %v4084 = vld [vmem:[%s4039 + $0x160] sm:$0xff]
      %v4085 = vld [vmem:[%s4039 + $0x168] sm:$0xff]
      %v4086 = vld [vmem:[%s4039 + $0x170] sm:$0xff]
      %v4087 = vld [vmem:[%s4039 + $0x178] sm:$0xff]
      %v4088 = vld [vmem:[%s4039 + $0x180] sm:$0xff]
      %v4089 = vld [vmem:[%s4039 + $0x188] sm:$0xff]
      %v4090 = vld [vmem:[%s4039 + $0x190] sm:$0xff]
      %v4091 = vld [vmem:[%s4039 + $0x198] sm:$0xff]
      %v4092 = vld [vmem:[%s4039 + $0x1a0] sm:$0xff]
      %v4093 = vld [vmem:[%s4039 + $0x1a8] sm:$0xff]
      %v4094 = vld [vmem:[%s4039 + $0x1b0] sm:$0xff]
      %v4095 = vld [vmem:[%s4039 + $0x1b8] sm:$0xff]
      %v4096 = vld [vmem:[%s4039 + $0x1c0] sm:$0xff]
      %v4097 = vld [vmem:[%s4039 + $0x1c8] sm:$0xff]
      %v4098 = vld [vmem:[%s4039 + $0x1d0] sm:$0xff]
      %v4099 = vld [vmem:[%s4039 + $0x1d8] sm:$0xff]
      %v4100 = vld [vmem:[%s4039 + $0x1e0] sm:$0xff]
      %v4101 = vld [vmem:[%s4039 + $0x1e8] sm:$0xff]
      %v4102 = vld [vmem:[%s4039 + $0x1f0] sm:$0xff]
      %v4103 = vld [vmem:[%s4039 + $0x1f8] sm:$0xff]
      %v4104 = vld [vmem:[%s4039 + $0x200] sm:$0xff]
      %v4105 = vld [vmem:[%s4039 + $0x208] sm:$0xff]
      %v4106 = vld [vmem:[%s4039 + $0x210] sm:$0xff]
      %v4107 = vld [vmem:[%s4039 + $0x218] sm:$0xff]
      %v4108 = vld [vmem:[%s4039 + $0x220] sm:$0xff]
      %v4109 = vld [vmem:[%s4039 + $0x228] sm:$0xff]
      %v4110 = vld [vmem:[%s4039 + $0x230] sm:$0xff]
      %v4111 = vld [vmem:[%s4039 + $0x238] sm:$0xff]
      %v4112 = vld [vmem:[%s4039 + $0x240] sm:$0xff]
      %v4113 = vld [vmem:[%s4039 + $0x248] sm:$0xff]
      %v4114 = vld [vmem:[%s4039 + $0x250] sm:$0xff]
      %v4115 = vld [vmem:[%s4039 + $0x258] sm:$0xff]
      %v4116 = vld [vmem:[%s4039 + $0x260] sm:$0xff]
      %v4117 = vld [vmem:[%s4039 + $0x268] sm:$0xff]
      %v4118 = vld [vmem:[%s4039 + $0x270] sm:$0xff]
      %v4119 = vld [vmem:[%s4039 + $0x278] sm:$0xff]
      %v4120 = vld [vmem:[%s4039 + $0x280] sm:$0xff]
      %v4121 = vld [vmem:[%s4039 + $0x288] sm:$0xff]
      %v4122 = vld [vmem:[%s4039 + $0x290] sm:$0xff]
      %v4123 = vld [vmem:[%s4039 + $0x298] sm:$0xff]
      %v4124 = vld [vmem:[%s4039 + $0x2a0] sm:$0xff]
      %v4125 = vld [vmem:[%s4039 + $0x2a8] sm:$0xff]
      %v4126 = vld [vmem:[%s4039 + $0x2b0] sm:$0xff]
      %v4127 = vld [vmem:[%s4039 + $0x2b8] sm:$0xff]
      %v4128 = vld [vmem:[%s4039 + $0x2c0] sm:$0xff]
      %v4129 = vld [vmem:[%s4039 + $0x2c8] sm:$0xff]
      %v4130 = vld [vmem:[%s4039 + $0x2d0] sm:$0xff]
      %v4131 = vld [vmem:[%s4039 + $0x2d8] sm:$0xff]
      %v4132 = vld [vmem:[%s4039 + $0x2e0] sm:$0xff]
      %v4133 = vld [vmem:[%s4039 + $0x2e8] sm:$0xff]
      %v4134 = vld [vmem:[%s4039 + $0x2f0] sm:$0xff]
      %v4135 = vld [vmem:[%s4039 + $0x2f8] sm:$0xff]
      %v4136 = vld [vmem:[%s4039 + $0x300] sm:$0xff]
      %v4137 = vld [vmem:[%s4039 + $0x308] sm:$0xff]
      %v4138 = vld [vmem:[%s4039 + $0x310] sm:$0xff]
      %v4139 = vld [vmem:[%s4039 + $0x318] sm:$0xff]
      %v4140 = vld [vmem:[%s4039 + $0x320] sm:$0xff]
      %v4141 = vld [vmem:[%s4039 + $0x328] sm:$0xff]
      %v4142 = vld [vmem:[%s4039 + $0x330] sm:$0xff]
      %v4143 = vld [vmem:[%s4039 + $0x338] sm:$0xff]
      %v4144 = vld [vmem:[%s4039 + $0x340] sm:$0xff]
      %v4145 = vld [vmem:[%s4039 + $0x348] sm:$0xff]
      %v4146 = vld [vmem:[%s4039 + $0x350] sm:$0xff]
      %v4147 = vld [vmem:[%s4039 + $0x358] sm:$0xff]
      %v4148 = vld [vmem:[%s4039 + $0x360] sm:$0xff]
      %v4149 = vld [vmem:[%s4039 + $0x368] sm:$0xff]
      %v4150 = vld [vmem:[%s4039 + $0x370] sm:$0xff]
      %v4151 = vld [vmem:[%s4039 + $0x378] sm:$0xff]
      %v4152 = vld [vmem:[%s4039 + $0x380] sm:$0xff]
      %v4153 = vld [vmem:[%s4039 + $0x388] sm:$0xff]
      %v4154 = vld [vmem:[%s4039 + $0x390] sm:$0xff]
      %v4155 = vld [vmem:[%s4039 + $0x398] sm:$0xff]
      %v4156 = vld [vmem:[%s4039 + $0x3a0] sm:$0xff]
      %v4157 = vld [vmem:[%s4039 + $0x3a8] sm:$0xff]
      %v4158 = vld [vmem:[%s4039 + $0x3b0] sm:$0xff]
      %v4159 = vld [vmem:[%s4039 + $0x3b8] sm:$0xff]
      %v4160 = vld [vmem:[%s4039 + $0x3c0] sm:$0xff]
      %v4161 = vld [vmem:[%s4039 + $0x3c8] sm:$0xff]
      %v4162 = vld [vmem:[%s4039 + $0x3d0] sm:$0xff]
      %v4163 = vld [vmem:[%s4039 + $0x3d8] sm:$0xff]
      %v4164 = vld [vmem:[%s4039 + $0x3e0] sm:$0xff]
      %v4165 = vld [vmem:[%s4039 + $0x3e8] sm:$0xff]
      %v4166 = vld [vmem:[%s4039 + $0x3f0] sm:$0xff]
      %v4167 = vld [vmem:[%s4039 + $0x3f8] sm:$0xff]
      %v4168 = vld [vmem:[%s4039 + $0x400] sm:$0xff]
      %v4169 = vld [vmem:[%s4039 + $0x408] sm:$0xff]
      %v4170 = vld [vmem:[%s4039 + $0x410] sm:$0xff]
      %v4171 = vld [vmem:[%s4039 + $0x418] sm:$0xff]
      %s4172 = scalar_lea.vmem %s2, 6
      %v4173 = vld [vmem:[%s4172] sm:$0x3]
      %v4175 = vlaneseq
      %v4176 = vshrl.u32 %v4175, 7
      %v4177 = vsub.s32 0, %v4176
      %v4178 = vrot.slane %v4173, %v4177
      %v4179 = vlaneseq
      %v4180 = vshrl.u32 %v4179, 7
      %v4181 = vsub.s32 1, %v4180
      %v4182 = vrot.slane %v4173, %v4181
      %v4317 = vunpack.c.l.b16 %v4040
      %v4318 = vunpack.c.h.b16 %v4040
      %v4319 = vunpack.c.l.b16 %v4041
      %v4320 = vunpack.c.h.b16 %v4041
      %v4321 = vunpack.c.l.b16 %v4042
      %v4322 = vunpack.c.h.b16 %v4042
      %v4323 = vunpack.c.l.b16 %v4043
      %v4324 = vunpack.c.h.b16 %v4043
      %v4325 = vunpack.c.l.b16 %v4044
      %v4326 = vunpack.c.h.b16 %v4044
      %v4327 = vunpack.c.l.b16 %v4045
      %v4328 = vunpack.c.h.b16 %v4045
      %v4329 = vunpack.c.l.b16 %v4046
      %v4330 = vunpack.c.h.b16 %v4046
      %v4331 = vunpack.c.l.b16 %v4047
      %v4332 = vunpack.c.h.b16 %v4047
      %v4333 = vunpack.c.l.b16 %v4048
      %v4334 = vunpack.c.h.b16 %v4048
      %v4335 = vunpack.c.l.b16 %v4049
      %v4336 = vunpack.c.h.b16 %v4049
      %v4337 = vunpack.c.l.b16 %v4050
      %v4338 = vunpack.c.h.b16 %v4050
      %v4339 = vunpack.c.l.b16 %v4051
      %v4340 = vunpack.c.h.b16 %v4051
      %v4341 = vunpack.c.l.b16 %v4052
      %v4342 = vunpack.c.h.b16 %v4052
      %v4343 = vunpack.c.l.b16 %v4053
      %v4344 = vunpack.c.h.b16 %v4053
      %v4345 = vunpack.c.l.b16 %v4054
      %v4346 = vunpack.c.h.b16 %v4054
      %v4347 = vunpack.c.l.b16 %v4055
      %v4348 = vunpack.c.h.b16 %v4055
      %v4349 = vunpack.c.l.b16 %v4056
      %v4350 = vunpack.c.h.b16 %v4056
      %v4351 = vunpack.c.l.b16 %v4057
      %v4352 = vunpack.c.h.b16 %v4057
      %v4353 = vunpack.c.l.b16 %v4058
      %v4354 = vunpack.c.h.b16 %v4058
      %v4355 = vunpack.c.l.b16 %v4059
      %v4356 = vunpack.c.h.b16 %v4059
      %v4357 = vunpack.c.l.b16 %v4060
      %v4358 = vunpack.c.h.b16 %v4060
      %v4359 = vunpack.c.l.b16 %v4061
      %v4360 = vunpack.c.h.b16 %v4061
      %v4361 = vunpack.c.l.b16 %v4062
      %v4362 = vunpack.c.h.b16 %v4062
      %v4363 = vunpack.c.l.b16 %v4063
      %v4364 = vunpack.c.h.b16 %v4063
      %v4365 = vunpack.c.l.b16 %v4064
      %v4366 = vunpack.c.h.b16 %v4064
      %v4367 = vunpack.c.l.b16 %v4065
      %v4368 = vunpack.c.h.b16 %v4065
      %v4369 = vunpack.c.l.b16 %v4066
      %v4370 = vunpack.c.h.b16 %v4066
      %v4371 = vunpack.c.l.b16 %v4067
      %v4372 = vunpack.c.h.b16 %v4067
      %v4373 = vunpack.c.l.b16 %v4068
      %v4374 = vunpack.c.h.b16 %v4068
      %v4375 = vunpack.c.l.b16 %v4069
      %v4376 = vunpack.c.h.b16 %v4069
      %v4377 = vunpack.c.l.b16 %v4070
      %v4378 = vunpack.c.h.b16 %v4070
      %v4379 = vunpack.c.l.b16 %v4071
      %v4380 = vunpack.c.h.b16 %v4071
      %v4381 = vunpack.c.l.b16 %v4072
      %v4382 = vunpack.c.h.b16 %v4072
      %v4383 = vunpack.c.l.b16 %v4073
      %v4384 = vunpack.c.h.b16 %v4073
      %v4385 = vunpack.c.l.b16 %v4074
      %v4386 = vunpack.c.h.b16 %v4074
      %v4387 = vunpack.c.l.b16 %v4075
      %v4388 = vunpack.c.h.b16 %v4075
      %v4389 = vunpack.c.l.b16 %v4076
      %v4390 = vunpack.c.h.b16 %v4076
      %v4391 = vunpack.c.l.b16 %v4077
      %v4392 = vunpack.c.h.b16 %v4077
      %v4393 = vunpack.c.l.b16 %v4078
      %v4394 = vunpack.c.h.b16 %v4078
      %v4395 = vunpack.c.l.b16 %v4079
      %v4396 = vunpack.c.h.b16 %v4079
      %v4397 = vunpack.c.l.b16 %v4080
      %v4398 = vunpack.c.h.b16 %v4080
      %v4399 = vunpack.c.l.b16 %v4081
      %v4400 = vunpack.c.h.b16 %v4081
      %v4401 = vunpack.c.l.b16 %v4082
      %v4402 = vunpack.c.h.b16 %v4082
      %v4403 = vunpack.c.l.b16 %v4083
      %v4404 = vunpack.c.h.b16 %v4083
      %v4405 = vunpack.c.l.b16 %v4084
      %v4406 = vunpack.c.h.b16 %v4084
      %v4407 = vunpack.c.l.b16 %v4085
      %v4408 = vunpack.c.h.b16 %v4085
      %v4409 = vunpack.c.l.b16 %v4086
      %v4410 = vunpack.c.h.b16 %v4086
      %v4411 = vunpack.c.l.b16 %v4087
      %v4412 = vunpack.c.h.b16 %v4087
      %v4413 = vunpack.c.l.b16 %v4088
      %v4414 = vunpack.c.h.b16 %v4088
      %v4415 = vunpack.c.l.b16 %v4089
      %v4416 = vunpack.c.h.b16 %v4089
      %v4417 = vunpack.c.l.b16 %v4090
      %v4418 = vunpack.c.h.b16 %v4090
      %v4419 = vunpack.c.l.b16 %v4091
      %v4420 = vunpack.c.h.b16 %v4091
      %v4421 = vunpack.c.l.b16 %v4092
      %v4422 = vunpack.c.h.b16 %v4092
      %v4423 = vunpack.c.l.b16 %v4093
      %v4424 = vunpack.c.h.b16 %v4093
      %v4425 = vunpack.c.l.b16 %v4094
      %v4426 = vunpack.c.h.b16 %v4094
      %v4427 = vunpack.c.l.b16 %v4095
      %v4428 = vunpack.c.h.b16 %v4095
      %v4429 = vunpack.c.l.b16 %v4096
      %v4430 = vunpack.c.h.b16 %v4096
      %v4431 = vunpack.c.l.b16 %v4097
      %v4432 = vunpack.c.h.b16 %v4097
      %v4433 = vunpack.c.l.b16 %v4098
      %v4434 = vunpack.c.h.b16 %v4098
      %v4435 = vunpack.c.l.b16 %v4099
      %v4436 = vunpack.c.h.b16 %v4099
      %v4437 = vunpack.c.l.b16 %v4100
      %v4438 = vunpack.c.h.b16 %v4100
      %v4439 = vunpack.c.l.b16 %v4101
      %v4440 = vunpack.c.h.b16 %v4101
      %v4441 = vunpack.c.l.b16 %v4102
      %v4442 = vunpack.c.h.b16 %v4102
      %v4443 = vunpack.c.l.b16 %v4103
      %v4444 = vunpack.c.h.b16 %v4103
      %v4445 = vunpack.c.l.b16 %v4104
      %v4446 = vunpack.c.h.b16 %v4104
      %v4447 = vunpack.c.l.b16 %v4105
      %v4448 = vunpack.c.h.b16 %v4105
      %v4449 = vunpack.c.l.b16 %v4106
      %v4450 = vunpack.c.h.b16 %v4106
      %v4451 = vunpack.c.l.b16 %v4107
      %v4452 = vunpack.c.h.b16 %v4107
      %v4453 = vunpack.c.l.b16 %v4108
      %v4454 = vunpack.c.h.b16 %v4108
      %v4455 = vunpack.c.l.b16 %v4109
      %v4456 = vunpack.c.h.b16 %v4109
      %v4457 = vunpack.c.l.b16 %v4110
      %v4458 = vunpack.c.h.b16 %v4110
      %v4459 = vunpack.c.l.b16 %v4111
      %v4460 = vunpack.c.h.b16 %v4111
      %v4461 = vunpack.c.l.b16 %v4112
      %v4462 = vunpack.c.h.b16 %v4112
      %v4463 = vunpack.c.l.b16 %v4113
      %v4464 = vunpack.c.h.b16 %v4113
      %v4465 = vunpack.c.l.b16 %v4114
      %v4466 = vunpack.c.h.b16 %v4114
      %v4467 = vunpack.c.l.b16 %v4115
      %v4468 = vunpack.c.h.b16 %v4115
      %v4469 = vunpack.c.l.b16 %v4116
      %v4470 = vunpack.c.h.b16 %v4116
      %v4471 = vunpack.c.l.b16 %v4117
      %v4472 = vunpack.c.h.b16 %v4117
      %v4473 = vunpack.c.l.b16 %v4118
      %v4474 = vunpack.c.h.b16 %v4118
      %v4475 = vunpack.c.l.b16 %v4119
      %v4476 = vunpack.c.h.b16 %v4119
      %v4477 = vunpack.c.l.b16 %v4120
      %v4478 = vunpack.c.h.b16 %v4120
      %v4479 = vunpack.c.l.b16 %v4121
      %v4480 = vunpack.c.h.b16 %v4121
      %v4481 = vunpack.c.l.b16 %v4122
      %v4482 = vunpack.c.h.b16 %v4122
      %v4483 = vunpack.c.l.b16 %v4123
      %v4484 = vunpack.c.h.b16 %v4123
      %v4485 = vunpack.c.l.b16 %v4124
      %v4486 = vunpack.c.h.b16 %v4124
      %v4487 = vunpack.c.l.b16 %v4125
      %v4488 = vunpack.c.h.b16 %v4125
      %v4489 = vunpack.c.l.b16 %v4126
      %v4490 = vunpack.c.h.b16 %v4126
      %v4491 = vunpack.c.l.b16 %v4127
      %v4492 = vunpack.c.h.b16 %v4127
      %v4493 = vunpack.c.l.b16 %v4128
      %v4494 = vunpack.c.h.b16 %v4128
      %v4495 = vunpack.c.l.b16 %v4129
      %v4496 = vunpack.c.h.b16 %v4129
      %v4497 = vunpack.c.l.b16 %v4130
      %v4498 = vunpack.c.h.b16 %v4130
      %v4499 = vunpack.c.l.b16 %v4131
      %v4500 = vunpack.c.h.b16 %v4131
      %v4501 = vunpack.c.l.b16 %v4132
      %v4502 = vunpack.c.h.b16 %v4132
      %v4503 = vunpack.c.l.b16 %v4133
      %v4504 = vunpack.c.h.b16 %v4133
      %v4505 = vunpack.c.l.b16 %v4134
      %v4506 = vunpack.c.h.b16 %v4134
      %v4507 = vunpack.c.l.b16 %v4135
      %v4508 = vunpack.c.h.b16 %v4135
      %v4509 = vunpack.c.l.b16 %v4136
      %v4510 = vunpack.c.h.b16 %v4136
      %v4511 = vunpack.c.l.b16 %v4137
      %v4512 = vunpack.c.h.b16 %v4137
      %v4513 = vunpack.c.l.b16 %v4138
      %v4514 = vunpack.c.h.b16 %v4138
      %v4515 = vunpack.c.l.b16 %v4139
      %v4516 = vunpack.c.h.b16 %v4139
      %v4517 = vunpack.c.l.b16 %v4140
      %v4518 = vunpack.c.h.b16 %v4140
      %v4519 = vunpack.c.l.b16 %v4141
      %v4520 = vunpack.c.h.b16 %v4141
      %v4521 = vunpack.c.l.b16 %v4142
      %v4522 = vunpack.c.h.b16 %v4142
      %v4523 = vunpack.c.l.b16 %v4143
      %v4524 = vunpack.c.h.b16 %v4143
      %v4525 = vunpack.c.l.b16 %v4144
      %v4526 = vunpack.c.h.b16 %v4144
      %v4527 = vunpack.c.l.b16 %v4145
      %v4528 = vunpack.c.h.b16 %v4145
      %v4529 = vunpack.c.l.b16 %v4146
      %v4530 = vunpack.c.h.b16 %v4146
      %v4531 = vunpack.c.l.b16 %v4147
      %v4532 = vunpack.c.h.b16 %v4147
      %v4533 = vunpack.c.l.b16 %v4148
      %v4534 = vunpack.c.h.b16 %v4148
      %v4535 = vunpack.c.l.b16 %v4149
      %v4536 = vunpack.c.h.b16 %v4149
      %v4537 = vunpack.c.l.b16 %v4150
      %v4538 = vunpack.c.h.b16 %v4150
      %v4539 = vunpack.c.l.b16 %v4151
      %v4540 = vunpack.c.h.b16 %v4151
      %v4541 = vunpack.c.l.b16 %v4152
      %v4542 = vunpack.c.h.b16 %v4152
      %v4543 = vunpack.c.l.b16 %v4153
      %v4544 = vunpack.c.h.b16 %v4153
      %v4545 = vunpack.c.l.b16 %v4154
      %v4546 = vunpack.c.h.b16 %v4154
      %v4547 = vunpack.c.l.b16 %v4155
      %v4548 = vunpack.c.h.b16 %v4155
      %v4549 = vunpack.c.l.b16 %v4156
      %v4550 = vunpack.c.h.b16 %v4156
      %v4551 = vunpack.c.l.b16 %v4157
      %v4552 = vunpack.c.h.b16 %v4157
      %v4553 = vunpack.c.l.b16 %v4158
      %v4554 = vunpack.c.h.b16 %v4158
      %v4555 = vunpack.c.l.b16 %v4159
      %v4556 = vunpack.c.h.b16 %v4159
      %v4557 = vunpack.c.l.b16 %v4160
      %v4558 = vunpack.c.h.b16 %v4160
      %v4559 = vunpack.c.l.b16 %v4161
      %v4560 = vunpack.c.h.b16 %v4161
      %v4561 = vunpack.c.l.b16 %v4162
      %v4562 = vunpack.c.h.b16 %v4162
      %v4563 = vunpack.c.l.b16 %v4163
      %v4564 = vunpack.c.h.b16 %v4163
      %v4565 = vunpack.c.l.b16 %v4164
      %v4566 = vunpack.c.h.b16 %v4164
      %v4567 = vunpack.c.l.b16 %v4165
      %v4568 = vunpack.c.h.b16 %v4165
      %v4569 = vunpack.c.l.b16 %v4166
      %v4570 = vunpack.c.h.b16 %v4166
      %v4571 = vunpack.c.l.b16 %v4167
      %v4572 = vunpack.c.h.b16 %v4167
      %v4573 = vunpack.c.l.b16 %v4168
      %v4574 = vunpack.c.h.b16 %v4168
      %v4575 = vunpack.c.l.b16 %v4169
      %v4576 = vunpack.c.h.b16 %v4169
      %v4577 = vunpack.c.l.b16 %v4170
      %v4578 = vunpack.c.h.b16 %v4170
      %v4579 = vunpack.c.l.b16 %v4171
      %v4580 = vunpack.c.h.b16 %v4171
      %v4581 = vpack.c.b16 %v4319, %v4317
      %v4582 = vpack.c.b16 %v4320, %v4318
      %v4583 = vpack.c.b16 %v4323, %v4321
      %v4584 = vpack.c.b16 %v4324, %v4322
      %v4585 = vpack.c.b16 %v4327, %v4325
      %v4586 = vpack.c.b16 %v4328, %v4326
      %v4587 = vpack.c.b16 %v4331, %v4329
      %v4588 = vpack.c.b16 %v4332, %v4330
      %v4589 = vpack.c.b16 %v4335, %v4333
      %v4590 = vpack.c.b16 %v4336, %v4334
      %v4591 = vpack.c.b16 %v4339, %v4337
      %v4592 = vpack.c.b16 %v4340, %v4338
      %v4593 = vpack.c.b16 %v4343, %v4341
      %v4594 = vpack.c.b16 %v4344, %v4342
      %v4595 = vpack.c.b16 %v4347, %v4345
      %v4596 = vpack.c.b16 %v4348, %v4346
      %v4597 = vpack.c.b16 %v4351, %v4349
      %v4598 = vpack.c.b16 %v4352, %v4350
      %v4599 = vpack.c.b16 %v4355, %v4353
      %v4600 = vpack.c.b16 %v4356, %v4354
      %v4601 = vpack.c.b16 %v4359, %v4357
      %v4602 = vpack.c.b16 %v4360, %v4358
      %v4603 = vpack.c.b16 %v4363, %v4361
      %v4604 = vpack.c.b16 %v4364, %v4362
      %v4605 = vpack.c.b16 %v4367, %v4365
      %v4606 = vpack.c.b16 %v4368, %v4366
      %v4607 = vpack.c.b16 %v4371, %v4369
      %v4608 = vpack.c.b16 %v4372, %v4370
      %v4609 = vpack.c.b16 %v4375, %v4373
      %v4610 = vpack.c.b16 %v4376, %v4374
      %v4611 = vpack.c.b16 %v4379, %v4377
      %v4612 = vpack.c.b16 %v4380, %v4378
      %v4613 = vpack.c.b16 %v4383, %v4381
      %v4614 = vpack.c.b16 %v4384, %v4382
      %v4615 = vpack.c.b16 %v4387, %v4385
      %v4616 = vpack.c.b16 %v4388, %v4386
      %v4617 = vpack.c.b16 %v4391, %v4389
      %v4618 = vpack.c.b16 %v4392, %v4390
      %v4619 = vpack.c.b16 %v4395, %v4393
      %v4620 = vpack.c.b16 %v4396, %v4394
      %v4621 = vpack.c.b16 %v4399, %v4397
      %v4622 = vpack.c.b16 %v4400, %v4398
      %v4623 = vpack.c.b16 %v4403, %v4401
      %v4624 = vpack.c.b16 %v4404, %v4402
      %v4625 = vpack.c.b16 %v4407, %v4405
      %v4626 = vpack.c.b16 %v4408, %v4406
      %v4627 = vpack.c.b16 %v4411, %v4409
      %v4628 = vpack.c.b16 %v4412, %v4410
      %v4629 = vpack.c.b16 %v4415, %v4413
      %v4630 = vpack.c.b16 %v4416, %v4414
      %v4631 = vpack.c.b16 %v4419, %v4417
      %v4632 = vpack.c.b16 %v4420, %v4418
      %v4633 = vpack.c.b16 %v4423, %v4421
      %v4634 = vpack.c.b16 %v4424, %v4422
      %v4635 = vpack.c.b16 %v4427, %v4425
      %v4636 = vpack.c.b16 %v4428, %v4426
      %v4637 = vpack.c.b16 %v4431, %v4429
      %v4638 = vpack.c.b16 %v4432, %v4430
      %v4639 = vpack.c.b16 %v4435, %v4433
      %v4640 = vpack.c.b16 %v4436, %v4434
      %v4641 = vpack.c.b16 %v4439, %v4437
      %v4642 = vpack.c.b16 %v4440, %v4438
      %v4643 = vpack.c.b16 %v4443, %v4441
      %v4644 = vpack.c.b16 %v4444, %v4442
      %v4645 = vpack.c.b16 %v4447, %v4445
      %v4646 = vpack.c.b16 %v4448, %v4446
      %v4647 = vpack.c.b16 %v4451, %v4449
      %v4648 = vpack.c.b16 %v4452, %v4450
      %v4649 = vpack.c.b16 %v4455, %v4453
      %v4650 = vpack.c.b16 %v4456, %v4454
      %v4651 = vpack.c.b16 %v4459, %v4457
      %v4652 = vpack.c.b16 %v4460, %v4458
      %v4653 = vpack.c.b16 %v4463, %v4461
      %v4654 = vpack.c.b16 %v4464, %v4462
      %v4655 = vpack.c.b16 %v4467, %v4465
      %v4656 = vpack.c.b16 %v4468, %v4466
      %v4657 = vpack.c.b16 %v4471, %v4469
      %v4658 = vpack.c.b16 %v4472, %v4470
      %v4659 = vpack.c.b16 %v4475, %v4473
      %v4660 = vpack.c.b16 %v4476, %v4474
      %v4661 = vpack.c.b16 %v4479, %v4477
      %v4662 = vpack.c.b16 %v4480, %v4478
      %v4663 = vpack.c.b16 %v4483, %v4481
      %v4664 = vpack.c.b16 %v4484, %v4482
      %v4665 = vpack.c.b16 %v4487, %v4485
      %v4666 = vpack.c.b16 %v4488, %v4486
      %v4667 = vpack.c.b16 %v4491, %v4489
      %v4668 = vpack.c.b16 %v4492, %v4490
      %v4669 = vpack.c.b16 %v4495, %v4493
      %v4670 = vpack.c.b16 %v4496, %v4494
      %v4671 = vpack.c.b16 %v4499, %v4497
      %v4672 = vpack.c.b16 %v4500, %v4498
      %v4673 = vpack.c.b16 %v4503, %v4501
      %v4674 = vpack.c.b16 %v4504, %v4502
      %v4675 = vpack.c.b16 %v4507, %v4505
      %v4676 = vpack.c.b16 %v4508, %v4506
      %v4677 = vpack.c.b16 %v4511, %v4509
      %v4678 = vpack.c.b16 %v4512, %v4510
      %v4679 = vpack.c.b16 %v4515, %v4513
      %v4680 = vpack.c.b16 %v4516, %v4514
      %v4681 = vpack.c.b16 %v4519, %v4517
      %v4682 = vpack.c.b16 %v4520, %v4518
      %v4683 = vpack.c.b16 %v4523, %v4521
      %v4684 = vpack.c.b16 %v4524, %v4522
      %v4685 = vpack.c.b16 %v4527, %v4525
      %v4686 = vpack.c.b16 %v4528, %v4526
      %v4687 = vpack.c.b16 %v4531, %v4529
      %v4688 = vpack.c.b16 %v4532, %v4530
      %v4689 = vpack.c.b16 %v4535, %v4533
      %v4690 = vpack.c.b16 %v4536, %v4534
      %v4691 = vpack.c.b16 %v4539, %v4537
      %v4692 = vpack.c.b16 %v4540, %v4538
      %v4693 = vpack.c.b16 %v4543, %v4541
      %v4694 = vpack.c.b16 %v4544, %v4542
      %v4695 = vpack.c.b16 %v4547, %v4545
      %v4696 = vpack.c.b16 %v4548, %v4546
      %v4697 = vpack.c.b16 %v4551, %v4549
      %v4698 = vpack.c.b16 %v4552, %v4550
      %v4699 = vpack.c.b16 %v4555, %v4553
      %v4700 = vpack.c.b16 %v4556, %v4554
      %v4701 = vpack.c.b16 %v4559, %v4557
      %v4702 = vpack.c.b16 %v4560, %v4558
      %v4703 = vpack.c.b16 %v4563, %v4561
      %v4704 = vpack.c.b16 %v4564, %v4562
      %v4705 = vpack.c.b16 %v4567, %v4565
      %v4706 = vpack.c.b16 %v4568, %v4566
      %v4707 = vpack.c.b16 %v4571, %v4569
      %v4708 = vpack.c.b16 %v4572, %v4570
      %v4709 = vpack.c.b16 %v4575, %v4573
      %v4710 = vpack.c.b16 %v4576, %v4574
      %v4711 = vpack.c.b16 %v4579, %v4577
      %v4712 = vpack.c.b16 %v4580, %v4578
      %4845 = vmatprep.subr.bf16.mxu0 %v4582
      %4846 = vmatpush1.bf16.msra.mxu0 %v4581
      %4847 = vmatprep.subr.bf16.mxu0 %v4584
      %4848 = vmatpush1.bf16.msra.mxu0 %v4583
      %4849 = vmatprep.subr.bf16.mxu0 %v4586
      %4850 = vmatpush1.bf16.msra.mxu0 %v4585
      %4851 = vmatprep.subr.bf16.mxu0 %v4588
      %4852 = vmatpush1.bf16.msra.mxu0 %v4587
      %4853 = vmatprep.subr.bf16.mxu0 %v4590
      %4854 = vmatpush1.bf16.msra.mxu0 %v4589
      %4855 = vmatprep.subr.bf16.mxu0 %v4592
      %4856 = vmatpush1.bf16.msra.mxu0 %v4591
      %4857 = vmatprep.subr.bf16.mxu0 %v4594
      %4858 = vmatpush1.bf16.msra.mxu0 %v4593
      %4859 = vmatprep.subr.bf16.mxu0 %v4596
      %4860 = vmatpush1.bf16.msra.mxu0 %v4595
      %4861 = vmatprep.subr.bf16.mxu0 %v4598
      %4862 = vmatpush1.bf16.msra.mxu0 %v4597
      %4863 = vmatprep.subr.bf16.mxu0 %v4600
      %4864 = vmatpush1.bf16.msra.mxu0 %v4599
      %4865 = vmatprep.subr.bf16.mxu0 %v4602
      %4866 = vmatpush1.bf16.msra.mxu0 %v4601
      %4867 = vmatprep.subr.bf16.mxu0 %v4604
      %4868 = vmatpush1.bf16.msra.mxu0 %v4603
      %4869 = vmatprep.subr.bf16.mxu0 %v4606
      %4870 = vmatpush1.bf16.msra.mxu0 %v4605
      %4871 = vmatprep.subr.bf16.mxu0 %v4608
      %4872 = vmatpush1.bf16.msra.mxu0 %v4607
      %4873 = vmatprep.subr.bf16.mxu0 %v4610
      %4874 = vmatpush1.bf16.msra.mxu0 %v4609
      %4875 = vmatprep.subr.bf16.mxu0 %v4612
      %4876 = vmatpush1.bf16.msra.mxu0 %v4611
      %4877 = vmatprep.mubr.bf16.mxu0 %v522
      %4878 = vmatmul.mubr.bf16.gmra.mrb[0].mxu0 %v521
      %v4879 = vpop.f32.mrb[0].mxu0
      %v4880 = vadd.f32 %v4178, %v4879
      %v4881 = vpop.f32.mrb[0].mxu0
      %v4882 = vadd.f32 %v4182, %v4881
      %v4883 = vpop.f32.mrb[0].mxu0
      %v4884 = vadd.f32 %v4178, %v4883
      %v4885 = vpop.f32.mrb[0].mxu0
      %v4886 = vadd.f32 %v4182, %v4885
      %4887 = vmatprep.mubr.bf16.mxu0 %v531
      %4888 = vmatmul.mubr.bf16.gmra.mrb[0].mxu0 %v530
      %v4889 = vpop.f32.mrb[0].mxu0
      %v4890 = vadd.f32 %v4178, %v4889
      %v4891 = vpop.f32.mrb[0].mxu0
      %v4892 = vadd.f32 %v4182, %v4891
      %v4893 = vpop.f32.mrb[0].mxu0
      %v4894 = vadd.f32 %v4178, %v4893
      %v4895 = vpop.f32.mrb[0].mxu0
      %v4896 = vadd.f32 %v4182, %v4895
      %4897 = vdwg.mxu0
      %4898 = vmatprep.subr.bf16.mxu0 %v4614
      %4899 = vmatpush1.bf16.msra.mxu0 %v4613
      %4900 = vmatprep.subr.bf16.mxu0 %v4616
      %4901 = vmatpush1.bf16.msra.mxu0 %v4615
      %4902 = vmatprep.subr.bf16.mxu0 %v4618
      %4903 = vmatpush1.bf16.msra.mxu0 %v4617
      %4904 = vmatprep.subr.bf16.mxu0 %v4620
      %4905 = vmatpush1.bf16.msra.mxu0 %v4619
      %4906 = vmatprep.subr.bf16.mxu0 %v4622
      %4907 = vmatpush1.bf16.msra.mxu0 %v4621
      %4908 = vmatprep.subr.bf16.mxu0 %v4624
      %4909 = vmatpush1.bf16.msra.mxu0 %v4623
      %4910 = vmatprep.subr.bf16.mxu0 %v4626
      %4911 = vmatpush1.bf16.msra.mxu0 %v4625
      %4912 = vmatprep.subr.bf16.mxu0 %v4628
      %4913 = vmatpush1.bf16.msra.mxu0 %v4627
      %4914 = vmatprep.subr.bf16.mxu0 %v4630
      %4915 = vmatpush1.bf16.msra.mxu0 %v4629
      %4916 = vmatprep.subr.bf16.mxu0 %v4632
      %4917 = vmatpush1.bf16.msra.mxu0 %v4631
      %4918 = vmatprep.subr.bf16.mxu0 %v4634
      %4919 = vmatpush1.bf16.msra.mxu0 %v4633
      %4920 = vmatprep.subr.bf16.mxu0 %v4636
      %4921 = vmatpush1.bf16.msra.mxu0 %v4635
      %4922 = vmatprep.subr.bf16.mxu0 %v4638
      %4923 = vmatpush1.bf16.msra.mxu0 %v4637
      %4924 = vmatprep.subr.bf16.mxu0 %v4640
      %4925 = vmatpush1.bf16.msra.mxu0 %v4639
      %4926 = vmatprep.subr.bf16.mxu0 %v4642
      %4927 = vmatpush1.bf16.msra.mxu0 %v4641
      %4928 = vmatprep.subr.bf16.mxu0 %v4644
      %4929 = vmatpush1.bf16.msra.mxu0 %v4643
      %4930 = vmatprep.mubr.bf16.mxu0 %v524
      %4931 = vmatmul.mubr.bf16.gmra.mrb[0].mxu0 %v523
      %v4932 = vpop.f32.mrb[0].mxu0
      %v4933 = vadd.f32 %v4880, %v4932
      %v4934 = vpop.f32.mrb[0].mxu0
      %v4935 = vadd.f32 %v4882, %v4934
      %v4936 = vpop.f32.mrb[0].mxu0
      %v4937 = vadd.f32 %v4884, %v4936
      %v4938 = vpop.f32.mrb[0].mxu0
      %v4939 = vadd.f32 %v4886, %v4938
      %4940 = vmatprep.mubr.bf16.mxu0 %v533
      %4941 = vmatmul.mubr.bf16.gmra.mrb[0].mxu0 %v532
      %v4942 = vpop.f32.mrb[0].mxu0
      %v4943 = vadd.f32 %v4890, %v4942
      %v4944 = vpop.f32.mrb[0].mxu0
      %v4945 = vadd.f32 %v4892, %v4944
      %v4946 = vpop.f32.mrb[0].mxu0
      %v4947 = vadd.f32 %v4894, %v4946
      %v4948 = vpop.f32.mrb[0].mxu0
      %v4949 = vadd.f32 %v4896, %v4948
      %4950 = vdwg.mxu0
      %4951 = vmatprep.subr.bf16.mxu0 %v4646
      %4952 = vmatpush1.bf16.msra.mxu0 %v4645
      %4953 = vmatprep.subr.bf16.mxu0 %v4648
      %4954 = vmatpush1.bf16.msra.mxu0 %v4647
      %4955 = vmatprep.subr.bf16.mxu0 %v4650
      %4956 = vmatpush1.bf16.msra.mxu0 %v4649
      %4957 = vmatprep.subr.bf16.mxu0 %v4652
      %4958 = vmatpush1.bf16.msra.mxu0 %v4651
      %4959 = vmatprep.subr.bf16.mxu0 %v4654
      %4960 = vmatpush1.bf16.msra.mxu0 %v4653
      %4961 = vmatprep.subr.bf16.mxu0 %v4656
      %4962 = vmatpush1.bf16.msra.mxu0 %v4655
      %4963 = vmatprep.subr.bf16.mxu0 %v4658
      %4964 = vmatpush1.bf16.msra.mxu0 %v4657
      %4965 = vmatprep.subr.bf16.mxu0 %v4660
      %4966 = vmatpush1.bf16.msra.mxu0 %v4659
      %4967 = vmatprep.subr.bf16.mxu0 %v4662
      %4968 = vmatpush1.bf16.msra.mxu0 %v4661
      %4969 = vmatprep.subr.bf16.mxu0 %v4664
      %4970 = vmatpush1.bf16.msra.mxu0 %v4663
      %4971 = vmatprep.subr.bf16.mxu0 %v4666
      %4972 = vmatpush1.bf16.msra.mxu0 %v4665
      %4973 = vmatprep.subr.bf16.mxu0 %v4668
      %4974 = vmatpush1.bf16.msra.mxu0 %v4667
      %4975 = vmatprep.subr.bf16.mxu0 %v4670
      %4976 = vmatpush1.bf16.msra.mxu0 %v4669
      %4977 = vmatprep.subr.bf16.mxu0 %v4672
      %4978 = vmatpush1.bf16.msra.mxu0 %v4671
      %4979 = vmatprep.subr.bf16.mxu0 %v4674
      %4980 = vmatpush1.bf16.msra.mxu0 %v4673
      %4981 = vmatprep.subr.bf16.mxu0 %v4676
      %4982 = vmatpush1.bf16.msra.mxu0 %v4675
      %4983 = vmatprep.mubr.bf16.mxu0 %v526
      %4984 = vmatmul.mubr.bf16.gmra.mrb[0].mxu0 %v525
      %v4985 = vpop.f32.mrb[0].mxu0
      %v4986 = vadd.f32 %v4933, %v4985
      %v4987 = vpop.f32.mrb[0].mxu0
      %v4988 = vadd.f32 %v4935, %v4987
      %v4989 = vpop.f32.mrb[0].mxu0
      %v4990 = vadd.f32 %v4937, %v4989
      %v4991 = vpop.f32.mrb[0].mxu0
      %v4992 = vadd.f32 %v4939, %v4991
      %4993 = vmatprep.mubr.bf16.mxu0 %v535
      %4994 = vmatmul.mubr.bf16.gmra.mrb[0].mxu0 %v534
      %v4995 = vpop.f32.mrb[0].mxu0
      %v4996 = vadd.f32 %v4943, %v4995
      %v4997 = vpop.f32.mrb[0].mxu0
      %v4998 = vadd.f32 %v4945, %v4997
      %v4999 = vpop.f32.mrb[0].mxu0
      %v5000 = vadd.f32 %v4947, %v4999
      %v5001 = vpop.f32.mrb[0].mxu0
      %v5002 = vadd.f32 %v4949, %v5001
      %5003 = vdwg.mxu0
      %5004 = vmatprep.subr.bf16.mxu0 %v4678
      %5005 = vmatpush1.bf16.msra.mxu0 %v4677
      %5006 = vmatprep.subr.bf16.mxu0 %v4680
      %5007 = vmatpush1.bf16.msra.mxu0 %v4679
      %5008 = vmatprep.subr.bf16.mxu0 %v4682
      %5009 = vmatpush1.bf16.msra.mxu0 %v4681
      %5010 = vmatprep.subr.bf16.mxu0 %v4684
      %5011 = vmatpush1.bf16.msra.mxu0 %v4683
      %5012 = vmatprep.subr.bf16.mxu0 %v4686
      %5013 = vmatpush1.bf16.msra.mxu0 %v4685
      %5014 = vmatprep.subr.bf16.mxu0 %v4688
      %5015 = vmatpush1.bf16.msra.mxu0 %v4687
      %5016 = vmatprep.subr.bf16.mxu0 %v4690
      %5017 = vmatpush1.bf16.msra.mxu0 %v4689
      %5018 = vmatprep.subr.bf16.mxu0 %v4692
      %5019 = vmatpush1.bf16.msra.mxu0 %v4691
      %5020 = vmatprep.subr.bf16.mxu0 %v4694
      %5021 = vmatpush1.bf16.msra.mxu0 %v4693
      %5022 = vmatprep.subr.bf16.mxu0 %v4696
      %5023 = vmatpush1.bf16.msra.mxu0 %v4695
      %5024 = vmatprep.subr.bf16.mxu0 %v4698
      %5025 = vmatpush1.bf16.msra.mxu0 %v4697
      %5026 = vmatprep.subr.bf16.mxu0 %v4700
      %5027 = vmatpush1.bf16.msra.mxu0 %v4699
      %5028 = vmatprep.subr.bf16.mxu0 %v4702
      %5029 = vmatpush1.bf16.msra.mxu0 %v4701
      %5030 = vmatprep.subr.bf16.mxu0 %v4704
      %5031 = vmatpush1.bf16.msra.mxu0 %v4703
      %5032 = vmatprep.subr.bf16.mxu0 %v4706
      %5033 = vmatpush1.bf16.msra.mxu0 %v4705
      %5034 = vmatprep.subr.bf16.mxu0 %v4708
      %5035 = vmatpush1.bf16.msra.mxu0 %v4707
      %5036 = vmatprep.mubr.bf16.mxu0 %v528
      %5037 = vmatmul.mubr.bf16.gmra.mrb[0].mxu0 %v527
      %v5038 = vpop.f32.mrb[0].mxu0
      %v5039 = vadd.f32 %v4986, %v5038
      %v5040 = vpop.f32.mrb[0].mxu0
      %v5041 = vadd.f32 %v4988, %v5040
      %v5042 = vpop.f32.mrb[0].mxu0
      %v5043 = vadd.f32 %v4990, %v5042
      %v5044 = vpop.f32.mrb[0].mxu0
      %v5045 = vadd.f32 %v4992, %v5044
      %5046 = vmatprep.mubr.bf16.mxu0 %v537
      %5047 = vmatmul.mubr.bf16.gmra.mrb[0].mxu0 %v536
      %v5048 = vpop.f32.mrb[0].mxu0
      %v5049 = vadd.f32 %v4996, %v5048
      %v5050 = vpop.f32.mrb[0].mxu0
      %v5051 = vadd.f32 %v4998, %v5050
      %v5052 = vpop.f32.mrb[0].mxu0
      %v5053 = vadd.f32 %v5000, %v5052
      %v5054 = vpop.f32.mrb[0].mxu0
      %v5055 = vadd.f32 %v5002, %v5054
      %5056 = vdwg.mxu0
      %5057 = vmatprep.subr.bf16.mxu0 %v4710
      %5058 = vmatpush1.bf16.msra.mxu0 %v4709
      %5059 = vmatprep.subr.bf16.mxu0 %v4712
      %5060 = vmatpush1.bf16.msra.mxu0 %v4711
      %5061 = vmatprep.subr.bf16.mxu0 0
      %5062 = vmatpush1.bf16.msra.mxu0 0
      %5063 = vmatprep.subr.bf16.mxu0 0
      %5064 = vmatpush1.bf16.msra.mxu0 0
      %5065 = vmatprep.subr.bf16.mxu0 0
      %5066 = vmatpush1.bf16.msra.mxu0 0
      %5067 = vmatprep.subr.bf16.mxu0 0
      %5068 = vmatpush1.bf16.msra.mxu0 0
      %5069 = vmatprep.subr.bf16.mxu0 0
      %5070 = vmatpush1.bf16.msra.mxu0 0
      %5071 = vmatprep.subr.bf16.mxu0 0
      %5072 = vmatpush1.bf16.msra.mxu0 0
      %5073 = vmatprep.subr.bf16.mxu0 0
      %5074 = vmatpush1.bf16.msra.mxu0 0
      %5075 = vmatprep.subr.bf16.mxu0 0
      %5076 = vmatpush1.bf16.msra.mxu0 0
      %5077 = vmatprep.subr.bf16.mxu0 0
      %5078 = vmatpush1.bf16.msra.mxu0 0
      %5079 = vmatprep.subr.bf16.mxu0 0
      %5080 = vmatpush1.bf16.msra.mxu0 0
      %5081 = vmatprep.subr.bf16.mxu0 0
      %5082 = vmatpush1.bf16.msra.mxu0 0
      %5083 = vmatprep.subr.bf16.mxu0 0
      %5084 = vmatpush1.bf16.msra.mxu0 0
      %5085 = vmatprep.subr.bf16.mxu0 0
      %5086 = vmatpush1.bf16.msra.mxu0 0
      %5087 = vmatprep.subr.bf16.mxu0 0
      %5088 = vmatpush1.bf16.msra.mxu0 0
      %5089 = vmatprep.mubr.bf16.mxu0 0
      %5090 = vmatmul.mubr.bf16.gmra.mrb[0].mxu0 %v1217
      %v5091 = vpop.f32.mrb[0].mxu0
      %v5092 = vadd.f32 %v5039, %v5091
      %v5093 = vpop.f32.mrb[0].mxu0
      %v5094 = vadd.f32 %v5041, %v5093
      %v5095 = vpop.f32.mrb[0].mxu0
      %v5096 = vadd.f32 %v5043, %v5095
      %v5097 = vpop.f32.mrb[0].mxu0
      %v5098 = vadd.f32 %v5045, %v5097
      %5099 = vmatprep.mubr.bf16.mxu0 0
      %5100 = vmatmul.mubr.bf16.gmra.mrb[0].mxu0 %v1220
      %v5101 = vpop.f32.mrb[0].mxu0
      %v5102 = vadd.f32 %v5049, %v5101
      %v5103 = vpop.f32.mrb[0].mxu0
      %v5104 = vadd.f32 %v5051, %v5103
      %v5105 = vpop.f32.mrb[0].mxu0
      %v5106 = vadd.f32 %v5053, %v5105
      %v5107 = vpop.f32.mrb[0].mxu0
      %v5108 = vadd.f32 %v5055, %v5107
      %5109 = vdwg.mxu0
      %vm5110 = vcmp.ge.f32.partialorder %v5092, 0.0
      %vm5111 = vcmp.ge.f32.partialorder %v5094, 0.0
      %vm5112 = vcmp.ge.f32.partialorder %v5096, 0.0
      %vm5113 = vcmp.ge.f32.partialorder %v5098, 0.0
      %vm5114 = vcmp.ge.f32.partialorder %v5102, 0.0
      %vm5115 = vcmp.ge.f32.partialorder %v5104, 0.0
      %vm5116 = vcmp.ge.f32.partialorder %v5106, 0.0
      %vm5117 = vcmp.ge.f32.partialorder %v5108, 0.0
      %v5118 = vmul.f32 %v1495, %v5092
      %v5119 = vmul.f32 %v1495, %v5094
      %v5120 = vmul.f32 %v1495, %v5096
      %v5121 = vmul.f32 %v1495, %v5098
      %v5122 = vmul.f32 %v1495, %v5102
      %v5123 = vmul.f32 %v1495, %v5104
      %v5124 = vmul.f32 %v1495, %v5106
      %v5125 = vmul.f32 %v1495, %v5108
      %v5126 = vsel %vm5110, %v5092, %v5118
      %v5127 = vsel %vm5111, %v5094, %v5119
      %v5128 = vsel %vm5112, %v5096, %v5120
      %v5129 = vsel %vm5113, %v5098, %v5121
      %v5130 = vsel %vm5114, %v5102, %v5122
      %v5131 = vsel %vm5115, %v5104, %v5123
      %v5132 = vsel %vm5116, %v5106, %v5124
      %v5133 = vsel %vm5117, %v5108, %v5125
      %v5134 = vsel %vm1512, %v5127, 0.0
      %v5135 = vadd.f32 %v5126, %v5134
      %5136 = vadd.xlane.f32.xlu0 %v5135
      %v5137 = vpop.xlane.xlu0 %5136
      %v5138 = vsel %vm1512, %v5129, 0.0
      %v5139 = vadd.f32 %v5128, %v5138
      %5140 = vadd.xlane.f32.xlu0 %v5139
      %v5141 = vpop.xlane.xlu0 %5140
      %v5142 = vsel %vm1512, %v5131, 0.0
      %v5143 = vadd.f32 %v5130, %v5142
      %5144 = vadd.xlane.f32.xlu0 %v5143
      %v5145 = vpop.xlane.xlu0 %5144
      %v5146 = vsel %vm1512, %v5133, 0.0
      %v5147 = vadd.f32 %v5132, %v5146
      %5148 = vadd.xlane.f32.xlu0 %v5147
      %v5149 = vpop.xlane.xlu0 %5148
      %v5150 = vmul.f32 %v5137, 0.007575758
      %v5151 = vmul.f32 %v5141, 0.007575758
      %v5152 = vmul.f32 %v5145, 0.007575758
      %v5153 = vmul.f32 %v5149, 0.007575758
      %v5154 = vmul.f32 %v5126, %v5126
      %v5155 = vmul.f32 %v5127, %v5127
      %v5156 = vmul.f32 %v5128, %v5128
      %v5157 = vmul.f32 %v5129, %v5129
      %v5158 = vmul.f32 %v5130, %v5130
      %v5159 = vmul.f32 %v5131, %v5131
      %v5160 = vmul.f32 %v5132, %v5132
      %v5161 = vmul.f32 %v5133, %v5133
      %v5162 = vsel %vm1512, %v5155, 0.0
      %v5163 = vadd.f32 %v5154, %v5162
      %5164 = vadd.xlane.f32.xlu0 %v5163
      %v5165 = vpop.xlane.xlu0 %5164
      %v5166 = vsel %vm1512, %v5157, 0.0
      %v5167 = vadd.f32 %v5156, %v5166
      %5168 = vadd.xlane.f32.xlu0 %v5167
      %v5169 = vpop.xlane.xlu0 %5168
      %v5170 = vsel %vm1512, %v5159, 0.0
      %v5171 = vadd.f32 %v5158, %v5170
      %5172 = vadd.xlane.f32.xlu0 %v5171
      %v5173 = vpop.xlane.xlu0 %5172
      %v5174 = vsel %vm1512, %v5161, 0.0
      %v5175 = vadd.f32 %v5160, %v5174
      %5176 = vadd.xlane.f32.xlu0 %v5175
      %v5177 = vpop.xlane.xlu0 %5176
      %v5178 = vmul.f32 %v5165, 0.007575758
      %v5179 = vmul.f32 %v5169, 0.007575758
      %v5180 = vmul.f32 %v5173, 0.007575758
      %v5181 = vmul.f32 %v5177, 0.007575758
      %v5182 = vmul.f32 %v5150, %v5150
      %v5183 = vmul.f32 %v5151, %v5151
      %v5184 = vmul.f32 %v5152, %v5152
      %v5185 = vmul.f32 %v5153, %v5153
      %v5186 = vsub.f32 %v5178, %v5182
      %v5187 = vsub.f32 %v5179, %v5183
      %v5188 = vsub.f32 %v5180, %v5184
      %v5189 = vsub.f32 %v5181, %v5185
      %v5190 = vadd.f32 %v5186, 1e-05
      %v5191 = vadd.f32 %v5187, 1e-05
      %v5192 = vadd.f32 %v5188, 1e-05
      %v5193 = vadd.f32 %v5189, 1e-05
      %v5194 = vrsqrt.pop %v5190
      %v5195 = vrsqrt.pop %v5191
      %v5196 = vrsqrt.pop %v5192
      %v5197 = vrsqrt.pop %v5193
      %v5198 = vsub.f32 %v5126, %v5150
      %v5199 = vsub.f32 %v5127, %v5150
      %v5200 = vsub.f32 %v5128, %v5151
      %v5201 = vsub.f32 %v5129, %v5151
      %v5202 = vsub.f32 %v5130, %v5152
      %v5203 = vsub.f32 %v5131, %v5152
      %v5204 = vsub.f32 %v5132, %v5153
      %v5205 = vsub.f32 %v5133, %v5153
      %v5206 = vmul.f32 %v5198, %v5194
      %v5207 = vmul.f32 %v5199, %v5194
      %v5208 = vmul.f32 %v5200, %v5195
      %v5209 = vmul.f32 %v5201, %v5195
      %v5210 = vmul.f32 %v5202, %v5196
      %v5211 = vmul.f32 %v5203, %v5196
      %v5212 = vmul.f32 %v5204, %v5197
      %v5213 = vmul.f32 %v5205, %v5197
      %v5214 = vmul.f32 %v5206, %v1597
      %v5215 = vmul.f32 %v5207, %v1601
      %v5216 = vmul.f32 %v5208, %v1597
      %v5217 = vmul.f32 %v5209, %v1601
      %v5218 = vmul.f32 %v5210, %v1597
      %v5219 = vmul.f32 %v5211, %v1601
      %v5220 = vmul.f32 %v5212, %v1597
      %v5221 = vmul.f32 %v5213, %v1601
      %v5222 = vadd.f32 %v5214, %v1616
      %v5223 = vadd.f32 %v5215, %v1620
      %v5224 = vadd.f32 %v5216, %v1616
      %v5225 = vadd.f32 %v5217, %v1620
      %v5226 = vadd.f32 %v5218, %v1616
      %v5227 = vadd.f32 %v5219, %v1620
      %v5228 = vadd.f32 %v5220, %v1616
      %v5229 = vadd.f32 %v5221, %v1620
      %s5230 = scalar_lea.vmem %s295, 192
      %5231 = vst [vmem:[%s5230] sm:$0xff] %v5222
      %5232 = vst.msk [vmem:[%s5230 + $0x8] sm:$0xff] %vm1512, %v5223
      %5233 = vst [vmem:[%s5230 + $0x10] sm:$0xff] %v5224
      %5234 = vst.msk [vmem:[%s5230 + $0x18] sm:$0xff] %vm1512, %v5225
      %5235 = vst [vmem:[%s5230 + $0x20] sm:$0xff] %v5226
      %5236 = vst.msk [vmem:[%s5230 + $0x28] sm:$0xff] %vm1512, %v5227
      %5237 = vst [vmem:[%s5230 + $0x30] sm:$0xff] %v5228
      %5238 = vst.msk [vmem:[%s5230 + $0x38] sm:$0xff] %vm1512, %v5229
      %s5239 = smul.u32 4, %s23
      %p5240 = scmp.lt.s32.totalorder %s22, 1
      %s5241 = scalar_select %p5240, %s22, 1
      %p5242 = scmp.lt.s32.totalorder %s5239, 3
      %s5243 = scalar_select %p5242, %s5239, 3
      %s5244 = smul.addr %s5243, 2
      %s5245 = smul.addr %s5241, 32
      %s5246 = sadd.s32 %s5244, %s5245
      %s5247 = smul.addr %s5246, 8
      %s5248 = scalar_lea.vmem %s6, %s5247
      // Predicated region
      $region45: #{multi_head_generator.1} parent=43 // pred_check
        %p5249 = pneg %p183
      $region46: #{multi_head_generator.1} parent=43 // pred_check_branch
        %5251 = sbr.rel (%p5249) target = $region48
      $region47: #{multi_head_generator.1} parent=43 // pred_region
        %s5252 = smul.u32 4, %s23
      $region48: #{multi_head_generator.1} parent=43 // pred_fallthru
        _
    $region44: #{multi_head_generator.1} parent=5 // pred_fallthru
      _
    %p5253 = scmp.le.s32.totalorder 2, %s13
    // Predicated region
    $region49: #{multi_head_generator.1} parent=5 // pred_check
      %p5254 = pneg %p5253
    $region50: #{multi_head_generator.1} parent=5 // pred_check_branch
      %5256 = sbr.rel (%p5254) target = $region52
    $region51: #{multi_head_generator.1} parent=5 // pred_region
      %s5257 = ssub.s32 %s13, 2
      // Predicated region
      $region53: #{multi_head_generator.1} parent=51 // pred_check
        %p5258 = pneg %p189
      $region54: #{multi_head_generator.1} parent=51 // pred_check_branch
        %5260 = sbr.rel (%p5258) target = $region56
      $region55: #{multi_head_generator.1} parent=51 // pred_region
        %s5261 = smul.u32 4, %s25
        %p5262 = scmp.lt.s32.totalorder %s24, 1
        %s5263 = scalar_select %p5262, %s24, 1
        %p5264 = scmp.lt.s32.totalorder %s5261, 3
        %s5265 = scalar_select %p5264, %s5261, 3
        %s5266 = smul.addr %s5265, 2
        %s5267 = smul.addr %s5263, 32
        %s5268 = sadd.s32 %s5266, %s5267
        %s5269 = smul.addr %s5268, 8
        %s5270 = scalar_lea.vmem %s6, %s5269
      $region56: #{multi_head_generator.1} parent=51 // pred_fallthru
        _
    $region52: #{multi_head_generator.1} parent=5 // pred_fallthru
      _
  $region6: #{multi_head_generator.1} parent=0 // loop_footer
    %s17 = sadd.s32 1, %s13
  $region7: #{multi_head_generator.1} parent=0 // loop_footer_branch
    %12 = sbr.rel target = $region3
  $region8: #{multi_head_generator.1} parent=0 // loop_exit
    _

</llo_original>
